<compile_context>
chip_gen: v7x
topology: tpu7x:2x2x1
jax: 0.10.0
libtpu: 0.0.40
codegen_flags: <defaults>
</compile_context>

<pallas_src>
import functools

import jax
import jax.numpy as jnp
import numpy as np
from jax.experimental import pallas as pl
from jax.experimental.pallas import tpu as pltpu


_MAX_TILE_ROWS = 8192          # rows kernel: cap on rows per grid step
_MAX_TILE_PIXELS = 256 * 1024  # seg kernel: cap on pixels per grid step


def _round_up(x, m):
    return ((x + m - 1) // m) * m


def _vmem_limit_bytes():
    """Generation-aware scoped-VMEM limit (v5e/v6e: 128 MiB phys, v7x: 64 MiB)."""
    phys = None
    try:
        info = pltpu.get_tpu_info()
        for name in ("vmem_capacity_bytes", "vmem_bytes", "vmem_size_bytes"):
            phys = getattr(info, name, None)
            if phys:
                break
    except Exception:
        phys = None
    if phys and phys >= 96 * 1024 * 1024:
        return 64 * 1024 * 1024            # v5e / v6e: plenty of headroom
    return 44 * 1024 * 1024                # v7x (or unknown): leave room for 2x buffering


# -----------------------------------------------------------------------------
# Kernel 1: pixel cross-entropy over seg logits with flattened spatial dims.
#   seg block  : (C, TP)  native dtype, pixels on lanes, classes on sublanes.
#   tgt block  : (1, TP)  int32.
#   output     : one (8,128) partial-sum block per (batch, pixel-tile) step;
#                lane 0 = sum(CE), lane 1 = valid-pixel count.
# -----------------------------------------------------------------------------
def _seg_ce_kernel(seg_ref, tgt_ref, out_ref, *, p_total, tile_p, ignore_label):
    pi = pl.program_id(1)

    x = seg_ref[...]                                     # (C, TP) native dtype
    tgt = tgt_ref[...]                                   # (1, TP) int32
    c, tp = x.shape

    # Validity: not ignore-label AND inside the real pixel extent (masks the
    # unspecified region of a partial tail block).
    pix = pi * tile_p + jax.lax.broadcasted_iota(jnp.int32, (1, tp), 1)
    valid = (tgt != ignore_label) & (pix < p_total)

    # Numerically stable log-softmax CE.  All reductions are over the class
    # (sublane) axis; everything stays per-pixel-column so garbage columns of a
    # partial tail block cannot contaminate valid ones.
    xf = x.astype(jnp.float32)
    m = jnp.max(xf, axis=0, keepdims=True)               # (1, TP)
    s = jnp.sum(jnp.exp(xf - m), axis=0, keepdims=True)  # (1, TP)  (EUP-bound)
    lse = m + jnp.log(s)

    # Gather x[tgt[p], p] via a masked class-sum (select, not multiply).
    cls = jax.lax.broadcasted_iota(jnp.int32, (c, tp), 0)
    g = jnp.sum(jnp.where(cls == tgt, xf, 0.0), axis=0, keepdims=True)

    ce = jnp.where(valid, lse - g, 0.0)
    cnt = jnp.where(valid, 1.0, 0.0)

    ce_sum = jnp.sum(ce, keepdims=True)                  # (1, 1)
    cnt_sum = jnp.sum(cnt, keepdims=True)                # (1, 1)

    lane = jax.lax.broadcasted_iota(jnp.int32, (1, 128), 1)
    vec = (jnp.where(lane == 0, ce_sum, 0.0)
           + jnp.where(lane == 1, cnt_sum, 0.0))         # (1, 128)
    row = jax.lax.broadcasted_iota(jnp.int32, (8, 128), 0)
    out_ref[...] = jnp.where(row == 0, vec, 0.0)         # lane-dense single write


def _choose_tile_pixels(p, c, itemsize, vmem_limit):
    # Working set per pixel: 2x-buffered native seg + int32 target blocks plus
    # the in-kernel f32 temporaries (cast + exp intermediate ~ 3 tiles).
    budget = min(vmem_limit // 2, 28 * 1024 * 1024)
    per_px = 2 * (c * itemsize + 4) + 3 * c * 4
    tp = budget // max(per_px, 1)
    tp = max(1024, (tp // 1024) * 1024)                  # multiples of 1024 (8x128)
    tp = min(tp, _MAX_TILE_PIXELS)
    if tp >= p:
        return p                                         # single full-extent block
    return tp                                            # tail block masked in-kernel


def seg_ce_sums(seg, target, ignore_label=-1):
    """seg: (B,C,H,W) float (any dtype), target: (B,H,W) int. Returns (ce_sum, count)."""
    b, c, h, w = seg.shape
    p = h * w
    seg2 = seg.reshape(b, c, p)                          # free contiguous reshape
    tgt2 = target.astype(jnp.int32).reshape(b, 1, p)

    vmem_limit = _vmem_limit_bytes()
    tp = _choose_tile_pixels(p, c, jnp.dtype(seg.dtype).itemsize, vmem_limit)
    n_ptiles = (p + tp - 1) // tp

    kernel = functools.partial(_seg_ce_kernel, p_total=p, tile_p=tp,
                               ignore_label=ignore_label)
    out = pl.pallas_call(
        kernel,
        out_shape=jax.ShapeDtypeStruct((b, n_ptiles, 8, 128), jnp.float32),
        grid_spec=pltpu.PrefetchScalarGridSpec(
            num_scalar_prefetch=0,
            grid=(b, n_ptiles),
            in_specs=[
                pl.BlockSpec((None, c, tp), lambda bi, pi: (bi, 0, pi)),
                pl.BlockSpec((None, 1, tp), lambda bi, pi: (bi, 0, pi)),
            ],
            out_specs=pl.BlockSpec((None, None, 8, 128),
                                   lambda bi, pi: (bi, pi, 0, 0)),
        ),
        compiler_params=pltpu.CompilerParams(
            dimension_semantics=("parallel", "parallel"),
            vmem_limit_bytes=vmem_limit),
    )(seg2, tgt2)

    sums = jnp.sum(out, axis=(0, 1, 2))                  # (128,) partials summed here
    return sums[0], sums[1]


# -----------------------------------------------------------------------------
# Kernel 2: row-wise CE + PPD squared term over (N, M) contrast logits.
#   One (8,128) partial-sum block per row tile; lane 0 = sum(CE),
#   lane 1 = sum((1 - gathered)^2), lane 2 = valid-row count.
# -----------------------------------------------------------------------------
def _rows_ce_ppd_kernel(logits_ref, tgt_ref, out_ref, *, n_rows, tile_rows,
                        ignore_label):
    i = pl.program_id(0)

    logits = logits_ref[...].astype(jnp.float32)         # (TM, M)
    tgt = tgt_ref[...]                                    # (TM, 1) int32
    tm, m = logits.shape

    row_idx = i * tile_rows + jax.lax.broadcasted_iota(jnp.int32, (tm, 1), 0)
    valid = (tgt != ignore_label) & (row_idx < n_rows)

    mx = jnp.max(logits, axis=-1, keepdims=True)
    lse = mx + jnp.log(jnp.sum(jnp.exp(logits - mx), axis=-1, keepdims=True))

    # Gather logits[r, tgt[r]] via where-select (no one-hot multiply).
    col = jax.lax.broadcasted_iota(jnp.int32, (tm, m), 1)
    gathered = jnp.sum(jnp.where(col == tgt, logits, 0.0), axis=-1, keepdims=True)

    ce = jnp.where(valid, lse - gathered, 0.0)
    sq = jnp.where(valid, jnp.square(1.0 - gathered), 0.0)
    cnt = jnp.where(valid, 1.0, 0.0)

    ce_sum = jnp.sum(ce, keepdims=True)                   # (1, 1)
    sq_sum = jnp.sum(sq, keepdims=True)
    cnt_sum = jnp.sum(cnt, keepdims=True)

    lane = jax.lax.broadcasted_iota(jnp.int32, (1, 128), 1)
    vec = (jnp.where(lane == 0, ce_sum, 0.0)
           + jnp.where(lane == 1, sq_sum, 0.0)
           + jnp.where(lane == 2, cnt_sum, 0.0))          # (1, 128)
    row = jax.lax.broadcasted_iota(jnp.int32, (8, 128), 0)
    out_ref[...] = jnp.where(row == 0, vec, 0.0)


def _choose_tile_rows(n, m, itemsize, vmem_limit):
    budget = min(vmem_limit // 2, 28 * 1024 * 1024)
    # (TM,1) int32 target rows are lane-padded to 128 lanes in VMEM -> 512 B/row,
    # plus ~4 f32 full-tile temporaries (cast, exp, col iota, select).
    per_row = 2 * (m * itemsize + 512) + 4 * m * 4
    t = budget // max(per_row, 1)
    t = max(8, (t // 8) * 8)
    t = min(t, _MAX_TILE_ROWS)
    if t >= n:
        return n                                          # single full-extent block
    return t                                              # tail block masked in-kernel


def rows_ce_ppd_sums(logits, targets, ignore_label=-1):
    """logits: (N, M) float (any dtype), targets: (N,) int.
    Returns (ce_sum, sq_sum, count)."""
    n, m = logits.shape
    vmem_limit = _vmem_limit_bytes()
    tm = _choose_tile_rows(n, m, jnp.dtype(logits.dtype).itemsize, vmem_limit)
    n_tiles = (n + tm - 1) // tm
    tgt2 = targets.astype(jnp.int32).reshape(n, 1)

    kernel = functools.partial(_rows_ce_ppd_kernel, n_rows=n, tile_rows=tm,
                               ignore_label=ignore_label)
    out = pl.pallas_call(
        kernel,
        out_shape=jax.ShapeDtypeStruct((n_tiles, 8, 128), jnp.float32),
        grid_spec=pltpu.PrefetchScalarGridSpec(
            num_scalar_prefetch=0,
            grid=(n_tiles,),
            in_specs=[
                pl.BlockSpec((tm, m), lambda i: (i, 0)),
                pl.BlockSpec((tm, 1), lambda i: (i, 0)),
            ],
            out_specs=pl.BlockSpec((None, 8, 128), lambda i: (i, 0, 0)),
        ),
        compiler_params=pltpu.CompilerParams(
            dimension_semantics=("parallel",),
            vmem_limit_bytes=vmem_limit),
    )(logits, tgt2)

    sums = jnp.sum(out, axis=(0, 1))                      # (128,)
    return sums[0], sums[1], sums[2]


# -----------------------------------------------------------------------------
# PixelPrototypeCELoss wrapper (configer values fixed deterministically).
# -----------------------------------------------------------------------------
class PixelPrototypeCELossPallas:
    def __init__(self, loss_ppc_weight=0.01, loss_ppd_weight=0.001, ignore_index=-1):
        self.loss_ppc_weight = float(loss_ppc_weight)
        self.loss_ppd_weight = float(loss_ppd_weight)
        self.ignore_index = int(ignore_index)
        # use_rmi=False -> FSCELoss (plain pixel-wise cross-entropy)

    def __call__(self, preds, target):
        assert 'seg' in preds and 'logits' in preds and 'target' in preds
        seg = preds['seg']                         # (B, C, H, W), native dtype
        contrast_logits = preds['logits']          # (N, M)
        contrast_target = preds['target']          # (N,)  (float in torch, .long()'ed)

        ce_s, cnt_s = seg_ce_sums(seg, target.astype(jnp.int32), self.ignore_index)
        ce_c, sq_c, cnt_c = rows_ce_ppd_sums(contrast_logits,
                                             contrast_target.astype(jnp.int32),
                                             self.ignore_index)

        # NOTE: if every element is ignore_index the counts are 0 and this yields
        # NaN, matching PyTorch's cross_entropy behaviour in the same situation.
        loss_seg = ce_s / cnt_s                    # FSCELoss: mean over valid pixels
        loss_ppc = ce_c / cnt_c                    # PPC: mean CE over valid rows
        loss_ppd = sq_c / cnt_c                    # PPD: mean (1 - gathered logit)^2

        return loss_seg + self.loss_ppc_weight * loss_ppc + self.loss_ppd_weight * loss_ppd


# -----------------------------------------------------------------------------
# Pure-JAX reference for verification.
# -----------------------------------------------------------------------------
def _reference_loss(preds, target, w_ppc, w_ppd, ignore=-1):
    def masked_ce(logits, tgt):
        valid = tgt != ignore
        lse = jax.scipy.special.logsumexp(logits, axis=-1)
        safe_t = jnp.where(valid, tgt, 0)
        g = jnp.take_along_axis(logits, safe_t[:, None], axis=-1)[:, 0]
        ce = jnp.where(valid, lse - g, 0.0)
        return jnp.sum(ce) / jnp.sum(valid), g, valid

    seg = preds['seg']
    b, c, h, w = seg.shape
    seg_rows = jnp.transpose(seg, (0, 2, 3, 1)).reshape(-1, c)
    loss_seg, _, _ = masked_ce(seg_rows, target.reshape(-1))
    loss_ppc, g, valid = masked_ce(preds['logits'], preds['target'])
    loss_ppd = jnp.sum(jnp.where(valid, (1.0 - g) ** 2, 0.0)) / jnp.sum(valid)
    return loss_seg + w_ppc * loss_ppc + w_ppd * loss_ppd


if __name__ == "__main__":
    key = jax.random.PRNGKey(0)
    k1, k2, k3, k4, k5, k6 = jax.random.split(key, 6)

    B, C, H, W = 2, 4, 16, 16          # seg logits: (B, C, H, W)
    NUM_PROTO = 8
    M = C * NUM_PROTO                  # contrast classes = classes * prototypes
    N = B * H * W                      # one contrast row per pixel

    seg = jax.random.normal(k1, (B, C, H, W), dtype=jnp.float32)
    target = jax.random.randint(k2, (B, H, W), 0, C)
    target = jnp.where(jax.random.bernoulli(k3, 0.1, (B, H, W)), -1, target)

    contrast_logits = jax.random.normal(k4, (N, M), dtype=jnp.float32)
    contrast_target = jax.random.randint(k5, (N,), 0, M)
    contrast_target = jnp.where(jax.random.bernoulli(k6, 0.1, (N,)), -1, contrast_target)

    preds = {'seg': seg, 'logits': contrast_logits,
             'target': contrast_target.astype(jnp.float32)}  # torch passes float; .long()'ed inside

    loss_fn = PixelPrototypeCELossPallas(loss_ppc_weight=0.01, loss_ppd_weight=0.001,
                                         ignore_index=-1)

    out = jax.jit(lambda p, t: loss_fn(p, t))(preds, target)
    jax.block_until_ready(out)

    ref = _reference_loss({'seg': seg, 'logits': contrast_logits,
                           'target': contrast_target},
                          target, 0.01, 0.001)
    np.testing.assert_allclose(np.asarray(out), np.asarray(ref), rtol=1e-5, atol=1e-5)

    print("KERNEL_OK")
</pallas_src>

<mosaic_0001>
module attributes {stable_mosaic.version = 11 : i64} {
  func.func @_rows_ce_ppd_kernel(%arg0: i32, %arg1: memref<512x32xf32, #tpu.memory_space<vmem>>, %arg2: memref<512x1xi32, #tpu.memory_space<vmem>>, %arg3: memref<1x8x128xf32, #tpu.memory_space<vmem>>) attributes {dimension_semantics = [#tpu.dimension_semantics<parallel>], iteration_bounds = array<i64: 1>, scalar_prefetch = 0 : i64, scratch_operands = 0 : i64, tpu.core_type = #tpu.core_type<tc>, window_params = [{transform_indices = @transform_0, window_bounds = array<i64: 512, 32>}, {transform_indices = @transform_1, window_bounds = array<i64: 512, 1>}, {transform_indices = @transform_2, window_bounds = array<i64: 1, 8, 128>}]} {
    %c0 = arith.constant 0 : index
    %c0_0 = arith.constant 0 : index
    %0 = vector.load %arg1[%c0, %c0_0] : memref<512x32xf32, #tpu.memory_space<vmem>>, vector<512x32xf32>
    %c0_1 = arith.constant 0 : index
    %c0_2 = arith.constant 0 : index
    %1 = vector.load %arg2[%c0_1, %c0_2] : memref<512x1xi32, #tpu.memory_space<vmem>>, vector<512x1xi32>
    %c512_i32 = arith.constant 512 : i32
    %2 = arith.muli %arg0, %c512_i32 : i32
    %3 = tpu.iota {dimensions = array<i32: 0>} : vector<512x1xi32>
    %4 = vector.broadcast %2 : i32 to vector<512x1xi32>
    %5 = arith.addi %4, %3 : vector<512x1xi32>
    %c-1_i32 = arith.constant -1 : i32
    %6 = vector.broadcast %c-1_i32 : i32 to vector<512x1xi32>
    %7 = arith.cmpi ne, %1, %6 : vector<512x1xi32>
    %c512_i32_3 = arith.constant 512 : i32
    %8 = vector.broadcast %c512_i32_3 : i32 to vector<512x1xi32>
    %9 = arith.cmpi slt, %5, %8 : vector<512x1xi32>
    %10 = arith.andi %7, %9 : vector<512x1xi1>
    %cst = arith.constant dense<0xFF800000> : vector<512xf32>
    %11 = vector.multi_reduction <maximumf>, %0, %cst [1] : vector<512x32xf32> to vector<512xf32>
    %12 = vector.shape_cast %11 : vector<512xf32> to vector<512x1xf32>
    %13 = vector.broadcast %12 : vector<512x1xf32> to vector<512x32xf32>
    %14 = arith.subf %0, %13 : vector<512x32xf32>
    %15 = math.exp %14 : vector<512x32xf32>
    %cst_4 = arith.constant dense<0.000000e+00> : vector<512xf32>
    %16 = vector.multi_reduction <add>, %15, %cst_4 [1] : vector<512x32xf32> to vector<512xf32>
    %17 = vector.shape_cast %16 : vector<512xf32> to vector<512x1xf32>
    %18 = math.log %17 : vector<512x1xf32>
    %19 = arith.addf %12, %18 : vector<512x1xf32>
    %20 = tpu.iota {dimensions = array<i32: 1>} : vector<512x32xi32>
    %21 = vector.broadcast %1 : vector<512x1xi32> to vector<512x32xi32>
    %22 = arith.cmpi eq, %20, %21 : vector<512x32xi32>
    %cst_5 = arith.constant 0.000000e+00 : f32
    %23 = vector.broadcast %cst_5 : f32 to vector<512x32xf32>
    %24 = arith.select %22, %0, %23 : vector<512x32xi1>, vector<512x32xf32>
    %cst_6 = arith.constant dense<0.000000e+00> : vector<512xf32>
    %25 = vector.multi_reduction <add>, %24, %cst_6 [1] : vector<512x32xf32> to vector<512xf32>
    %26 = vector.shape_cast %25 : vector<512xf32> to vector<512x1xf32>
    %27 = arith.subf %19, %26 : vector<512x1xf32>
    %cst_7 = arith.constant 0.000000e+00 : f32
    %28 = vector.broadcast %cst_7 : f32 to vector<512x1xf32>
    %29 = arith.select %10, %27, %28 : vector<512x1xi1>, vector<512x1xf32>
    %cst_8 = arith.constant 1.000000e+00 : f32
    %30 = vector.broadcast %cst_8 : f32 to vector<512x1xf32>
    %31 = arith.subf %30, %26 : vector<512x1xf32>
    %32 = arith.mulf %31, %31 : vector<512x1xf32>
    %cst_9 = arith.constant 0.000000e+00 : f32
    %33 = vector.broadcast %cst_9 : f32 to vector<512x1xf32>
    %34 = arith.select %10, %32, %33 : vector<512x1xi1>, vector<512x1xf32>
    %cst_10 = arith.constant 1.000000e+00 : f32
    %cst_11 = arith.constant 0.000000e+00 : f32
    %35 = vector.broadcast %cst_10 : f32 to vector<512x1xf32>
    %36 = vector.broadcast %cst_11 : f32 to vector<512x1xf32>
    %37 = arith.select %10, %35, %36 : vector<512x1xi1>, vector<512x1xf32>
    %38 = vector.shape_cast %29 : vector<512x1xf32> to vector<1x512x1xf32>
    %cst_12 = arith.constant dense<0.000000e+00> : vector<1xf32>
    %39 = vector.multi_reduction <add>, %38, %cst_12 [1, 2] : vector<1x512x1xf32> to vector<1xf32>
    %40 = vector.shape_cast %39 : vector<1xf32> to vector<1x1x1xf32>
    %41 = vector.extract %40[0, 0, 0] : f32 from vector<1x1x1xf32>
    %42 = vector.broadcast %41 : f32 to vector<1x1xf32>
    %43 = vector.shape_cast %34 : vector<512x1xf32> to vector<1x512x1xf32>
    %cst_13 = arith.constant dense<0.000000e+00> : vector<1xf32>
    %44 = vector.multi_reduction <add>, %43, %cst_13 [1, 2] : vector<1x512x1xf32> to vector<1xf32>
    %45 = vector.shape_cast %44 : vector<1xf32> to vector<1x1x1xf32>
    %46 = vector.extract %45[0, 0, 0] : f32 from vector<1x1x1xf32>
    %47 = vector.broadcast %46 : f32 to vector<1x1xf32>
    %48 = vector.shape_cast %37 : vector<512x1xf32> to vector<1x512x1xf32>
    %cst_14 = arith.constant dense<0.000000e+00> : vector<1xf32>
    %49 = vector.multi_reduction <add>, %48, %cst_14 [1, 2] : vector<1x512x1xf32> to vector<1xf32>
    %50 = vector.shape_cast %49 : vector<1xf32> to vector<1x1x1xf32>
    %51 = vector.extract %50[0, 0, 0] : f32 from vector<1x1x1xf32>
    %52 = vector.broadcast %51 : f32 to vector<1x1xf32>
    %53 = tpu.iota {dimensions = array<i32: 1>} : vector<1x128xi32>
    %c0_i32 = arith.constant 0 : i32
    %54 = vector.broadcast %c0_i32 : i32 to vector<1x128xi32>
    %55 = arith.cmpi eq, %53, %54 : vector<1x128xi32>
    %cst_15 = arith.constant 0.000000e+00 : f32
    %56 = vector.shape_cast %42 : vector<1x1xf32> to vector<1x1xf32>
    %57 = vector.broadcast %56 : vector<1x1xf32> to vector<1x128xf32>
    %58 = vector.broadcast %cst_15 : f32 to vector<1x128xf32>
    %59 = arith.select %55, %57, %58 : vector<1x128xi1>, vector<1x128xf32>
    %c1_i32 = arith.constant 1 : i32
    %60 = vector.broadcast %c1_i32 : i32 to vector<1x128xi32>
    %61 = arith.cmpi eq, %53, %60 : vector<1x128xi32>
    %cst_16 = arith.constant 0.000000e+00 : f32
    %62 = vector.shape_cast %47 : vector<1x1xf32> to vector<1x1xf32>
    %63 = vector.broadcast %62 : vector<1x1xf32> to vector<1x128xf32>
    %64 = vector.broadcast %cst_16 : f32 to vector<1x128xf32>
    %65 = arith.select %61, %63, %64 : vector<1x128xi1>, vector<1x128xf32>
    %66 = arith.addf %59, %65 : vector<1x128xf32>
    %c2_i32 = arith.constant 2 : i32
    %67 = vector.broadcast %c2_i32 : i32 to vector<1x128xi32>
    %68 = arith.cmpi eq, %53, %67 : vector<1x128xi32>
    %cst_17 = arith.constant 0.000000e+00 : f32
    %69 = vector.shape_cast %52 : vector<1x1xf32> to vector<1x1xf32>
    %70 = vector.broadcast %69 : vector<1x1xf32> to vector<1x128xf32>
    %71 = vector.broadcast %cst_17 : f32 to vector<1x128xf32>
    %72 = arith.select %68, %70, %71 : vector<1x128xi1>, vector<1x128xf32>
    %73 = arith.addf %66, %72 : vector<1x128xf32>
    %74 = tpu.iota {dimensions = array<i32: 0>} : vector<8x128xi32>
    %c0_i32_18 = arith.constant 0 : i32
    %75 = vector.broadcast %c0_i32_18 : i32 to vector<8x128xi32>
    %76 = arith.cmpi eq, %74, %75 : vector<8x128xi32>
    %cst_19 = arith.constant 0.000000e+00 : f32
    %77 = vector.shape_cast %73 : vector<1x128xf32> to vector<1x128xf32>
    %78 = vector.broadcast %77 : vector<1x128xf32> to vector<8x128xf32>
    %79 = vector.broadcast %cst_19 : f32 to vector<8x128xf32>
    %80 = arith.select %76, %78, %79 : vector<8x128xi1>, vector<8x128xf32>
    %c0_20 = arith.constant 0 : index
    %c0_21 = arith.constant 0 : index
    %c0_22 = arith.constant 0 : index
    %81 = vector.load %arg3[%c0_20, %c0_21, %c0_22] : memref<1x8x128xf32, #tpu.memory_space<vmem>>, vector<1x8x128xf32>
    %82 = vector.shape_cast %81 : vector<1x8x128xf32> to vector<8x128xf32>
    %83 = vector.shape_cast %80 : vector<8x128xf32> to vector<1x8x128xf32>
    tpu.vector_store %arg3[%c0_20, %c0_21, %c0_22], %83 {strides = array<i32>} : memref<1x8x128xf32, #tpu.memory_space<vmem>>, vector<1x8x128xf32>,
    return
  }
  func.func @transform_0(%arg0: i32) -> (i32, i32) {
    %c0_i32 = arith.constant 0 : i32
    %c0_i32_0 = arith.constant 0 : i32
    return %arg0, %c0_i32 : i32, i32
  }
  func.func @transform_1(%arg0: i32) -> (i32, i32) {
    %c0_i32 = arith.constant 0 : i32
    %c0_i32_0 = arith.constant 0 : i32
    return %arg0, %c0_i32 : i32, i32
  }
  func.func @transform_2(%arg0: i32) -> (i32, i32, i32) {
    %c0_i32 = arith.constant 0 : i32
    %c0_i32_0 = arith.constant 0 : i32
    %c0_i32_1 = arith.constant 0 : i32
    return %arg0, %c0_i32, %c0_i32_0 : i32, i32, i32
  }
}

module attributes {stable_mosaic.version = 11 : i64} {
  func.func @_seg_ce_kernel(%arg0: i32, %arg1: i32, %arg2: memref<1x4x256xf32, #tpu.memory_space<vmem>>, %arg3: memref<1x1x256xi32, #tpu.memory_space<vmem>>, %arg4: memref<1x1x8x128xf32, #tpu.memory_space<vmem>>) attributes {dimension_semantics = [#tpu.dimension_semantics<parallel>, #tpu.dimension_semantics<parallel>], iteration_bounds = array<i64: 2, 1>, scalar_prefetch = 0 : i64, scratch_operands = 0 : i64, tpu.core_type = #tpu.core_type<tc>, window_params = [{transform_indices = @transform_0, window_bounds = array<i64: 1, 4, 256>}, {transform_indices = @transform_1, window_bounds = array<i64: 1, 1, 256>}, {transform_indices = @transform_2, window_bounds = array<i64: 1, 1, 8, 128>}]} {
    %c0 = arith.constant 0 : index
    %c0_0 = arith.constant 0 : index
    %c0_1 = arith.constant 0 : index
    %0 = vector.load %arg2[%c0, %c0_0, %c0_1] : memref<1x4x256xf32, #tpu.memory_space<vmem>>, vector<1x4x256xf32>
    %1 = vector.shape_cast %0 : vector<1x4x256xf32> to vector<4x256xf32>
    %c0_2 = arith.constant 0 : index
    %c0_3 = arith.constant 0 : index
    %c0_4 = arith.constant 0 : index
    %2 = vector.load %arg3[%c0_2, %c0_3, %c0_4] : memref<1x1x256xi32, #tpu.memory_space<vmem>>, vector<1x1x256xi32>
    %3 = vector.shape_cast %2 : vector<1x1x256xi32> to vector<1x256xi32>
    %c256_i32 = arith.constant 256 : i32
    %4 = arith.muli %arg1, %c256_i32 : i32
    %5 = tpu.iota {dimensions = array<i32: 1>} : vector<1x256xi32>
    %6 = vector.broadcast %4 : i32 to vector<1x256xi32>
    %7 = arith.addi %6, %5 : vector<1x256xi32>
    %c-1_i32 = arith.constant -1 : i32
    %8 = vector.broadcast %c-1_i32 : i32 to vector<1x256xi32>
    %9 = arith.cmpi ne, %3, %8 : vector<1x256xi32>
    %c256_i32_5 = arith.constant 256 : i32
    %10 = vector.broadcast %c256_i32_5 : i32 to vector<1x256xi32>
    %11 = arith.cmpi slt, %7, %10 : vector<1x256xi32>
    %12 = arith.andi %9, %11 : vector<1x256xi1>
    %cst = arith.constant dense<0xFF800000> : vector<256xf32>
    %13 = vector.multi_reduction <maximumf>, %1, %cst [0] : vector<4x256xf32> to vector<256xf32>
    %14 = vector.shape_cast %13 : vector<256xf32> to vector<1x256xf32>
    %15 = vector.broadcast %14 : vector<1x256xf32> to vector<4x256xf32>
    %16 = arith.subf %1, %15 : vector<4x256xf32>
    %17 = math.exp %16 : vector<4x256xf32>
    %cst_6 = arith.constant dense<0.000000e+00> : vector<256xf32>
    %18 = vector.multi_reduction <add>, %17, %cst_6 [0] : vector<4x256xf32> to vector<256xf32>
    %19 = vector.shape_cast %18 : vector<256xf32> to vector<1x256xf32>
    %20 = math.log %19 : vector<1x256xf32>
    %21 = arith.addf %14, %20 : vector<1x256xf32>
    %22 = tpu.iota {dimensions = array<i32: 0>} : vector<4x256xi32>
    %23 = vector.broadcast %3 : vector<1x256xi32> to vector<4x256xi32>
    %24 = arith.cmpi eq, %22, %23 : vector<4x256xi32>
    %cst_7 = arith.constant 0.000000e+00 : f32
    %25 = vector.broadcast %cst_7 : f32 to vector<4x256xf32>
    %26 = arith.select %24, %1, %25 : vector<4x256xi1>, vector<4x256xf32>
    %cst_8 = arith.constant dense<0.000000e+00> : vector<256xf32>
    %27 = vector.multi_reduction <add>, %26, %cst_8 [0] : vector<4x256xf32> to vector<256xf32>
    %28 = vector.shape_cast %27 : vector<256xf32> to vector<1x256xf32>
    %29 = arith.subf %21, %28 : vector<1x256xf32>
    %cst_9 = arith.constant 0.000000e+00 : f32
    %30 = vector.broadcast %cst_9 : f32 to vector<1x256xf32>
    %31 = arith.select %12, %29, %30 : vector<1x256xi1>, vector<1x256xf32>
    %cst_10 = arith.constant 1.000000e+00 : f32
    %cst_11 = arith.constant 0.000000e+00 : f32
    %32 = vector.broadcast %cst_10 : f32 to vector<1x256xf32>
    %33 = vector.broadcast %cst_11 : f32 to vector<1x256xf32>
    %34 = arith.select %12, %32, %33 : vector<1x256xi1>, vector<1x256xf32>
    %35 = vector.shape_cast %31 : vector<1x256xf32> to vector<1x1x256xf32>
    %cst_12 = arith.constant dense<0.000000e+00> : vector<1xf32>
    %36 = vector.multi_reduction <add>, %35, %cst_12 [1, 2] : vector<1x1x256xf32> to vector<1xf32>
    %37 = vector.shape_cast %36 : vector<1xf32> to vector<1x1x1xf32>
    %38 = vector.extract %37[0, 0, 0] : f32 from vector<1x1x1xf32>
    %39 = vector.broadcast %38 : f32 to vector<1x1xf32>
    %40 = vector.shape_cast %34 : vector<1x256xf32> to vector<1x1x256xf32>
    %cst_13 = arith.constant dense<0.000000e+00> : vector<1xf32>
    %41 = vector.multi_reduction <add>, %40, %cst_13 [1, 2] : vector<1x1x256xf32> to vector<1xf32>
    %42 = vector.shape_cast %41 : vector<1xf32> to vector<1x1x1xf32>
    %43 = vector.extract %42[0, 0, 0] : f32 from vector<1x1x1xf32>
    %44 = vector.broadcast %43 : f32 to vector<1x1xf32>
    %45 = tpu.iota {dimensions = array<i32: 1>} : vector<1x128xi32>
    %c0_i32 = arith.constant 0 : i32
    %46 = vector.broadcast %c0_i32 : i32 to vector<1x128xi32>
    %47 = arith.cmpi eq, %45, %46 : vector<1x128xi32>
    %cst_14 = arith.constant 0.000000e+00 : f32
    %48 = vector.shape_cast %39 : vector<1x1xf32> to vector<1x1xf32>
    %49 = vector.broadcast %48 : vector<1x1xf32> to vector<1x128xf32>
    %50 = vector.broadcast %cst_14 : f32 to vector<1x128xf32>
    %51 = arith.select %47, %49, %50 : vector<1x128xi1>, vector<1x128xf32>
    %c1_i32 = arith.constant 1 : i32
    %52 = vector.broadcast %c1_i32 : i32 to vector<1x128xi32>
    %53 = arith.cmpi eq, %45, %52 : vector<1x128xi32>
    %cst_15 = arith.constant 0.000000e+00 : f32
    %54 = vector.shape_cast %44 : vector<1x1xf32> to vector<1x1xf32>
    %55 = vector.broadcast %54 : vector<1x1xf32> to vector<1x128xf32>
    %56 = vector.broadcast %cst_15 : f32 to vector<1x128xf32>
    %57 = arith.select %53, %55, %56 : vector<1x128xi1>, vector<1x128xf32>
    %58 = arith.addf %51, %57 : vector<1x128xf32>
    %59 = tpu.iota {dimensions = array<i32: 0>} : vector<8x128xi32>
    %c0_i32_16 = arith.constant 0 : i32
    %60 = vector.broadcast %c0_i32_16 : i32 to vector<8x128xi32>
    %61 = arith.cmpi eq, %59, %60 : vector<8x128xi32>
    %cst_17 = arith.constant 0.000000e+00 : f32
    %62 = vector.shape_cast %58 : vector<1x128xf32> to vector<1x128xf32>
    %63 = vector.broadcast %62 : vector<1x128xf32> to vector<8x128xf32>
    %64 = vector.broadcast %cst_17 : f32 to vector<8x128xf32>
    %65 = arith.select %61, %63, %64 : vector<8x128xi1>, vector<8x128xf32>
    %c0_18 = arith.constant 0 : index
    %c0_19 = arith.constant 0 : index
    %c0_20 = arith.constant 0 : index
    %c0_21 = arith.constant 0 : index
    %66 = vector.load %arg4[%c0_18, %c0_19, %c0_20, %c0_21] : memref<1x1x8x128xf32, #tpu.memory_space<vmem>>, vector<1x1x8x128xf32>
    %67 = vector.shape_cast %66 : vector<1x1x8x128xf32> to vector<8x128xf32>
    %68 = vector.shape_cast %65 : vector<8x128xf32> to vector<1x1x8x128xf32>
    tpu.vector_store %arg4[%c0_18, %c0_19, %c0_20, %c0_21], %68 {strides = array<i32>} : memref<1x1x8x128xf32, #tpu.memory_space<vmem>>, vector<1x1x8x128xf32>,
    return
  }
  func.func @transform_0(%arg0: i32, %arg1: i32) -> (i32, i32, i32) {
    %c0_i32 = arith.constant 0 : i32
    %c0_i32_0 = arith.constant 0 : i32
    return %arg0, %c0_i32, %arg1 : i32, i32, i32
  }
  func.func @transform_1(%arg0: i32, %arg1: i32) -> (i32, i32, i32) {
    %c0_i32 = arith.constant 0 : i32
    %c0_i32_0 = arith.constant 0 : i32
    return %arg0, %c0_i32, %arg1 : i32, i32, i32
  }
  func.func @transform_2(%arg0: i32, %arg1: i32) -> (i32, i32, i32, i32) {
    %c0_i32 = arith.constant 0 : i32
    %c0_i32_0 = arith.constant 0 : i32
    %c0_i32_1 = arith.constant 0 : i32
    return %arg0, %arg1, %c0_i32, %c0_i32_0 : i32, i32, i32, i32
  }
}

</mosaic_0001>

<llo_original>
// kernel: _lambda_.2
$region0: #{_lambda_.2}
  #allocation0 [shape = 'u32[]', space=smem, size = 0x4, offset = 0x4, fixed_abs, tag = 'smem constant byte address 0x4 - core index']
  #allocation1 [shape = 'u32[144,128]{1,0:T(1,128)}', space=vmem, size = 0x12000, scoped, tag = 'internal scratch']
  %s0 = inlined_call_operand.vmem [shape: f32[2,4,256], index: 0, kind: input, shape index: {}]
  %s1 = inlined_call_operand.vmem [shape: s32[2,1,256], index: 1, kind: input, shape index: {}]
  %s2 = inlined_call_operand.vmem [shape: f32[2,1,8,128], index: 2, kind: output, shape index: {}]
  %s3 = sld [smem:[#allocation0]]
  $region41: #{_lambda_.2} parent=0
    _
  %s5 = ssub.s32 1, %s3
  %s6 = scalar_select 0, %s5, %s3
  loop: start=0, step=1, limit=4
  $region2: #{_lambda_.2} parent=0 // loop_pre_header
    _
  $region3: #{_lambda_.2} parent=0 // loop_header
    %s8 = sphi 0, %s12
    %p9 = scmp.ge.s32.totalorder %s8, 4
    %s15 = sphi 0, %s27
    %s16 = sphi 0, %s23
    %s17 = sphi 0, %s15
    %s18 = sphi 0, %s16
    %s19 = sphi 0, %s17
    %s20 = sphi 0, %s18
    %s32 = sphi 0, %s34
    %s35 = sphi 0, %s32
    %s36 = sphi 0, %s35
    %s52 = sphi 0, %s36
    %s60 = sphi 0, %s62
    %s63 = sphi 0, %s60
    %s64 = sphi 0, %s63
    %s80 = sphi 0, %s64
    %s88 = sphi 0, %s90
    %s91 = sphi 0, %s88
    %s92 = sphi 0, %s91
    %s108 = sphi 0, %s92
  $region4: #{_lambda_.2} parent=0 // loop_header_branch
    %11 = sbr.rel (%p9) target = $region8
  $region5: #{_lambda_.2} parent=0 // loop_body
    %s13 = ssub.s32 %s8, 1
    %s14 = ssub.s32 %s8, 2
    %s21 = sadd.s32 1, %s16
    %p22 = scmp.ge.s32.totalorder %s21, 1
    %s23 = scalar_select %p22, 0, %s21
    %s24 = sadd.s32 1, %s15
    %s25 = scalar_select %p22, %s24, %s15
    %p26 = scmp.ge.s32.totalorder %s25, 2
    %s27 = scalar_select %p26, 0, %s25
    %s28 = ssub.s32 %s15, %s27
    %s29 = ssub.s32 %s16, %s23
    %s30 = sor.u32 %s28, %s29
    %p31 = scmp.eq.s32.totalorder %s30, 0
    %s33 = sadd.s32 %s32, 1
    %s34 = scalar_select %p31, %s32, %s33
    %p37 = pneg %p31
    %p38 = scmp.eq.s32.totalorder %s8, 1
    %p39 = por %p37, %p38
    %p40 = scmp.ne.s32.totalorder %s32, %s35
    %p41 = scmp.eq.s32.totalorder %s8, 0
    %p42 = por %p40, %p41
    %p43 = scmp.ne.s32.totalorder %s32, %s35
    %p44 = scmp.eq.s32.totalorder %s13, 1
    %p45 = por %p43, %p44
    %p46 = scmp.ne.s32.totalorder %s35, %s36
    %p47 = scmp.eq.s32.totalorder %s13, 0
    %p48 = por %p46, %p47
    %p49 = scmp.ne.s32.totalorder %s35, %s36
    %p50 = scmp.eq.s32.totalorder %s14, 1
    %p51 = por %p49, %p50
    %p53 = scmp.ne.s32.totalorder %s36, %s52
    %p54 = scmp.eq.s32.totalorder %s14, 0
    %p55 = por %p53, %p54
    %s56 = ssub.s32 %s15, %s27
    %s57 = ssub.s32 %s16, %s23
    %s58 = sor.u32 %s56, %s57
    %p59 = scmp.eq.s32.totalorder %s58, 0
    %s61 = sadd.s32 %s60, 1
    %s62 = scalar_select %p59, %s60, %s61
    %p65 = pneg %p59
    %p66 = scmp.eq.s32.totalorder %s8, 1
    %p67 = por %p65, %p66
    %p68 = scmp.ne.s32.totalorder %s60, %s63
    %p69 = scmp.eq.s32.totalorder %s8, 0
    %p70 = por %p68, %p69
    %p71 = scmp.ne.s32.totalorder %s60, %s63
    %p72 = scmp.eq.s32.totalorder %s13, 1
    %p73 = por %p71, %p72
    %p74 = scmp.ne.s32.totalorder %s63, %s64
    %p75 = scmp.eq.s32.totalorder %s13, 0
    %p76 = por %p74, %p75
    %p77 = scmp.ne.s32.totalorder %s63, %s64
    %p78 = scmp.eq.s32.totalorder %s14, 1
    %p79 = por %p77, %p78
    %p81 = scmp.ne.s32.totalorder %s64, %s80
    %p82 = scmp.eq.s32.totalorder %s14, 0
    %p83 = por %p81, %p82
    %s84 = ssub.s32 %s15, %s27
    %s85 = ssub.s32 %s16, %s23
    %s86 = sor.u32 %s84, %s85
    %p87 = scmp.eq.s32.totalorder %s86, 0
    %s89 = sadd.s32 %s88, 1
    %s90 = scalar_select %p87, %s88, %s89
    %p93 = pneg %p87
    %p94 = scmp.eq.s32.totalorder %s8, 1
    %p95 = por %p93, %p94
    %p96 = scmp.ne.s32.totalorder %s88, %s91
    %p97 = scmp.eq.s32.totalorder %s8, 0
    %p98 = por %p96, %p97
    %p99 = scmp.ne.s32.totalorder %s88, %s91
    %p100 = scmp.eq.s32.totalorder %s13, 1
    %p101 = por %p99, %p100
    %p102 = scmp.ne.s32.totalorder %s91, %s92
    %p103 = scmp.eq.s32.totalorder %s13, 0
    %p104 = por %p102, %p103
    %p105 = scmp.ne.s32.totalorder %s91, %s92
    %p106 = scmp.eq.s32.totalorder %s14, 1
    %p107 = por %p105, %p106
    %p109 = scmp.ne.s32.totalorder %s92, %s108
    %p110 = scmp.eq.s32.totalorder %s14, 0
    %p111 = por %p109, %p110
    %p112 = scmp.le.s32.totalorder 1, %s8
    %p113 = scmp.lt.s32.totalorder %s8, 3
    %p114 = pnand %p112, %p113
    %p115 = pneg %p114
    // Predicated region
    $region9: #{_lambda_.2} parent=5 // pred_check
      _
    $region10: #{_lambda_.2} parent=5 // pred_check_branch
      %117 = sbr.rel (%p114) target = $region12
    $region11: #{_lambda_.2} parent=5 // pred_region
      %s118 = ssub.s32 %s8, 1
    $region12: #{_lambda_.2} parent=5 // pred_fallthru
      _
    %p119 = scmp.lt.s32.totalorder %s8, 2
    // Predicated region
    $region13: #{_lambda_.2} parent=5 // pred_check
      %p120 = pneg %p119
    $region14: #{_lambda_.2} parent=5 // pred_check_branch
      %122 = sbr.rel (%p120) target = $region16
    $region15: #{_lambda_.2} parent=5 // pred_region
      // Predicated region
      $region17: #{_lambda_.2} parent=15 // pred_check
        %p123 = pneg %p42
      $region18: #{_lambda_.2} parent=15 // pred_check_branch
        %125 = sbr.rel (%p123) target = $region20
      $region19: #{_lambda_.2} parent=15 // pred_region
        %s126 = smul.u32 2, %s16
        %p127 = scmp.lt.s32.totalorder %s15, 1
        %s128 = scalar_select %p127, %s15, 1
        %p129 = scmp.lt.s32.totalorder %s126, 1
        %s130 = scalar_select %p129, %s126, 1
        %s131 = smul.addr %s128, 2
        %s132 = sadd.s32 %s130, %s131
        %s133 = smul.addr %s132, 4
        %s134 = scalar_lea.vmem %s0, %s133
        %s135 = smul.u32 2, %s16
      $region20: #{_lambda_.2} parent=15 // pred_fallthru
        _
      // Predicated region
      $region21: #{_lambda_.2} parent=15 // pred_check
        %p136 = pneg %p70
      $region22: #{_lambda_.2} parent=15 // pred_check_branch
        %138 = sbr.rel (%p136) target = $region24
      $region23: #{_lambda_.2} parent=15 // pred_region
        %s139 = smul.u32 2, %s16
        %p140 = scmp.lt.s32.totalorder %s15, 1
        %s141 = scalar_select %p140, %s15, 1
        %p142 = scmp.lt.s32.totalorder %s139, 1
        %s143 = scalar_select %p142, %s139, 1
        %s144 = smul.addr %s141, 2
        %s145 = sadd.s32 %s143, %s144
        %s146 = scalar_lea.vmem %s1, %s145
        %s147 = smul.u32 2, %s16
      $region24: #{_lambda_.2} parent=15 // pred_fallthru
        _
    $region16: #{_lambda_.2} parent=5 // pred_fallthru
      _
    %p148 = scmp.le.s32.totalorder 1, %s8
    %p149 = scmp.lt.s32.totalorder %s8, 3
    %p150 = pnand %p148, %p149
    %p151 = pneg %p150
    // Predicated region
    $region25: #{_lambda_.2} parent=5 // pred_check
      _
    $region26: #{_lambda_.2} parent=5 // pred_check_branch
      %153 = sbr.rel (%p150) target = $region28
    $region27: #{_lambda_.2} parent=5 // pred_region
      %s154 = ssub.s32 %s8, 1
      %s155 = smul.u32 2, %s18
      %p156 = scmp.lt.s32.totalorder %s17, 1
      %s157 = scalar_select %p156, %s17, 1
      %p158 = scmp.lt.s32.totalorder %s155, 1
      %s159 = scalar_select %p158, %s155, 1
      %s160 = smul.addr %s157, 2
      %s161 = sadd.s32 %s159, %s160
      %s162 = smul.addr %s161, 4
      %s163 = scalar_lea.vmem %s0, %s162
      %p164 = pneg %p48
      %p165 = pneg %p45
      %s166 = smul.u32 2, %s18
      %p167 = scmp.lt.s32.totalorder %s17, 1
      %s168 = scalar_select %p167, %s17, 1
      %p169 = scmp.lt.s32.totalorder %s166, 1
      %s170 = scalar_select %p169, %s166, 1
      %s171 = smul.addr %s168, 2
      %s172 = sadd.s32 %s170, %s171
      %s173 = scalar_lea.vmem %s1, %s172
      %p174 = pneg %p76
      %p175 = pneg %p73
      %p176 = pneg %p104
      %p177 = pneg %p101
      %p178 = scmp.lt.s32.totalorder %s17, 1
      %s179 = scalar_select %p178, %s17, 1
      %p180 = scmp.lt.s32.totalorder %s18, 0
      %s181 = scalar_select %p180, %s18, 0
      %s182 = sadd.s32 %s181, %s179
      %s183 = smul.addr %s182, 8
      %s184 = scalar_lea.vmem %s2, %s183
      %s185 = smul.u32 2, %s18
      %p186 = scmp.lt.s32.totalorder %s17, 1
      %s187 = scalar_select %p186, %s17, 1
      %p188 = scmp.lt.s32.totalorder %s185, 1
      %s189 = scalar_select %p188, %s185, 1
      %s190 = smul.addr %s187, 2
      %s191 = sadd.s32 %s189, %s190
      %s192 = smul.addr %s191, 4
      %s193 = scalar_lea.vmem %s0, %s192
      %s194 = smul.u32 2, %s18
      %s195 = smul.u32 2, %s18
      %p196 = scmp.lt.s32.totalorder %s17, 1
      %s197 = scalar_select %p196, %s17, 1
      %p198 = scmp.lt.s32.totalorder %s195, 1
      %s199 = scalar_select %p198, %s195, 1
      %s200 = smul.addr %s197, 2
      %s201 = sadd.s32 %s199, %s200
      %s202 = scalar_lea.vmem %s1, %s201
      %s203 = smul.u32 2, %s18
      %p204 = scmp.lt.s32.totalorder %s17, 1
      %s205 = scalar_select %p204, %s17, 1
      %p206 = scmp.lt.s32.totalorder %s18, 0
      %s207 = scalar_select %p206, %s18, 0
      %s208 = sadd.s32 %s207, %s205
      %s209 = smul.addr %s208, 8
      %s210 = scalar_lea.vmem %s2, %s209
      %v211 = vld [vmem:[%s193] sm:$0xff]
      %v212 = vld [vmem:[%s202] sm:$0x3]
      %s213 = smul.u32 %s18, 256
      %v214 = vlaneseq
      %v215 = vand.u32 %v214, 127
      %v216 = vadd.s32 %v215, 128
      %v217 = vstv %s213
      %v218 = vadd.s32 %v217, %v215
      %v219 = vadd.s32 %v217, %v216
      %vm220 = vcmp.ne.s32.totalorder %v212, 4294967295
      %vm221 = vcmp.lt.s32.totalorder %v218, 256
      %vm222 = vcmp.lt.s32.totalorder %v219, 256
      %v223 = vsel %vm221, 1, 0
      %v224 = vsel %vm222, 1, 0
      %v225 = vcombine.low %v223, %v224
      %v227 = vunpack.c.l.s4 1966171168
      %v228 = vunpack.c.0.s8 %v227
      %v229 = vlaneseq
      %v230 = vshrl.u32 %v229, 7
      %v231 = vsub.s32 %v228, %v230
      %v232 = vrot.slane %v225, %v231
      %v234 = vunpack.c.l.s4 1966171168
      %v235 = vunpack.c.0.s8 %v234
      %v236 = vlaneseq
      %v237 = vshrl.u32 %v236, 7
      %v238 = vsub.s32 %v235, %v237
      %v239 = vrot.slane %v232, %v238
      %vm240 = vcmp.ne.s32.totalorder %v239, 0
      %vm241 = vmand %vm220, %vm240
      %v243 = vcombine.high %v211, %v211
      %vm245 = vcmask 1043456
      %v246 = vsel %vm245, %v211, -inf
      %v247 = vrot.slane %v246, 4
      %v248 = vmax.f32 %v246, %v247
      %v249 = vrot.slane %v248, 2
      %v250 = vmax.f32 %v248, %v249
      %v251 = vrot.slane %v250, 1
      %v252 = vmax.f32 %v250, %v251
      %v253 = vsel %vm245, %v243, -inf
      %v254 = vrot.slane %v253, 4
      %v255 = vmax.f32 %v253, %v254
      %v256 = vrot.slane %v255, 2
      %v257 = vmax.f32 %v255, %v256
      %v258 = vrot.slane %v257, 1
      %v259 = vmax.f32 %v257, %v258
      %v262 = vcombine.low %v252, %v259
      %v264 = vsub.f32 %v211, %v262
      %v265 = vmul.f32 %v264, 1.442695
      %v266 = vpow.pop %v265
      %v268 = vcombine.high %v266, %v266
      %v270 = vsel %vm245, %v266, 0.0
      %v271 = vrot.slane %v270, 4
      %v272 = vadd.f32 %v270, %v271
      %v273 = vrot.slane %v272, 2
      %v274 = vadd.f32 %v272, %v273
      %v275 = vrot.slane %v274, 1
      %v276 = vadd.f32 %v274, %v275
      %v277 = vsel %vm245, %v268, 0.0
      %v278 = vrot.slane %v277, 4
      %v279 = vadd.f32 %v277, %v278
      %v280 = vrot.slane %v279, 2
      %v281 = vadd.f32 %v279, %v280
      %v282 = vrot.slane %v281, 1
      %v283 = vadd.f32 %v281, %v282
      %v284 = vlog2.pop %v276
      %v285 = vmul.f32 %v284, 0.6931472
      %v286 = vlog2.pop %v283
      %v287 = vmul.f32 %v286, 0.6931472
      %v288 = vadd.f32 %v252, %v285
      %v289 = vadd.f32 %v259, %v287
      %v290 = vlaneseq
      %v291 = vshrl.u32 %v290, 7
      %v292 = vlaneseq
      %v293 = vshrl.u32 %v292, 7
      %v294 = vsub.s32 0, %v293
      %v295 = vrot.slane %v212, %v294
      %v296 = vlaneseq
      %v297 = vshrl.u32 %v296, 7
      %v298 = vsub.s32 1, %v297
      %v299 = vrot.slane %v212, %v298
      %vm300 = vcmp.eq.s32.totalorder %v291, %v295
      %vm301 = vcmp.eq.s32.totalorder %v291, %v299
      %v302 = vsel %vm300, %v211, 0.0
      %v303 = vsel %vm301, %v243, 0.0
      %v304 = vsel %vm245, %v302, 0.0
      %v305 = vrot.slane %v304, 4
      %v306 = vadd.f32 %v304, %v305
      %v307 = vrot.slane %v306, 2
      %v308 = vadd.f32 %v306, %v307
      %v309 = vrot.slane %v308, 1
      %v310 = vadd.f32 %v308, %v309
      %v311 = vsel %vm245, %v303, 0.0
      %v312 = vrot.slane %v311, 4
      %v313 = vadd.f32 %v311, %v312
      %v314 = vrot.slane %v313, 2
      %v315 = vadd.f32 %v313, %v314
      %v316 = vrot.slane %v315, 1
      %v317 = vadd.f32 %v315, %v316
      %v318 = vsub.f32 %v288, %v310
      %v319 = vsub.f32 %v289, %v317
      %v322 = vcombine.low %v318, %v319
      %v324 = vunpack.c.l.s4 1966171168
      %v325 = vunpack.c.0.s8 %v324
      %v326 = vlaneseq
      %v327 = vshrl.u32 %v326, 7
      %v328 = vsub.s32 %v325, %v327
      %v329 = vrot.slane %v322, %v328
      %v331 = vunpack.c.l.s4 1966171168
      %v332 = vunpack.c.0.s8 %v331
      %v333 = vlaneseq
      %v334 = vshrl.u32 %v333, 7
      %v335 = vsub.s32 %v332, %v334
      %v336 = vrot.slane %v329, %v335
      %v338 = vsel %vm241, %v336, 0.0
      %v339 = vsel %vm241, 1.0, 0.0
      %v341 = vlaneseq
      %v342 = vshrl.u32 %v341, 7
      %v343 = vsub.s32 0, %v342
      %v344 = vrot.slane %v338, %v343
      %v345 = vlaneseq
      %v346 = vshrl.u32 %v345, 7
      %v347 = vsub.s32 1, %v346
      %v348 = vrot.slane %v338, %v347
      %vm351 = vcmask 1040384
      %v352 = vsel %vm351, %v344, 0.0
      %v353 = vsel %vm351, %v348, 0.0
      %v354 = vadd.f32 %v352, %v353
      %355 = vadd.xlane.f32.xlu0 %v354
      %v356 = vpop.xlane.xlu0 %355
      %v357 = vrot.slane %v356, 4
      %v358 = vadd.f32 %v356, %v357
      %v359 = vrot.slane %v358, 2
      %v360 = vadd.f32 %v358, %v359
      %v361 = vrot.slane %v360, 1
      %v362 = vadd.f32 %v360, %v361
      %s363 = vtos %v362
      %v365 = vlaneseq
      %v366 = vshrl.u32 %v365, 7
      %v367 = vsub.s32 0, %v366
      %v368 = vrot.slane %v339, %v367
      %v369 = vlaneseq
      %v370 = vshrl.u32 %v369, 7
      %v371 = vsub.s32 1, %v370
      %v372 = vrot.slane %v339, %v371
      %v375 = vsel %vm351, %v368, 0.0
      %v376 = vsel %vm351, %v372, 0.0
      %v377 = vadd.f32 %v375, %v376
      %378 = vadd.xlane.f32.xlu0 %v377
      %v379 = vpop.xlane.xlu0 %378
      %v380 = vrot.slane %v379, 4
      %v381 = vadd.f32 %v379, %v380
      %v382 = vrot.slane %v381, 2
      %v383 = vadd.f32 %v381, %v382
      %v384 = vrot.slane %v383, 1
      %v385 = vadd.f32 %v383, %v384
      %s386 = vtos %v385
      %vm387 = vcmp.eq.s32.totalorder %v215, 0
      %v388 = vstv %s363
      %v389 = vsel %vm387, %v388, 0.0
      %vm390 = vcmp.eq.s32.totalorder %v215, 1
      %v391 = vstv %s386
      %v392 = vsel %vm390, %v391, 0.0
      %v393 = vadd.f32 %v389, %v392
      %vm394 = vcmp.eq.s32.totalorder %v291, 0
      %v395 = vsel %vm394, %v393, 0.0
      %396 = vst [vmem:[%s210] sm:$0xff] %v395
      %p397 = scmp.lt.s32.totalorder %s17, 1
      %s398 = scalar_select %p397, %s17, 1
      %p399 = scmp.lt.s32.totalorder %s18, 0
      %s400 = scalar_select %p399, %s18, 0
      %s401 = sadd.s32 %s400, %s398
      %s402 = smul.addr %s401, 8
      %s403 = scalar_lea.vmem %s2, %s402
      // Predicated region
      $region29: #{_lambda_.2} parent=27 // pred_check
        %p404 = pneg %p101
      $region30: #{_lambda_.2} parent=27 // pred_check_branch
        %406 = sbr.rel (%p404) target = $region32
      $region31: #{_lambda_.2} parent=27 // pred_region
        _
      $region32: #{_lambda_.2} parent=27 // pred_fallthru
        _
    $region28: #{_lambda_.2} parent=5 // pred_fallthru
      _
    %p407 = scmp.le.s32.totalorder 2, %s8
    // Predicated region
    $region33: #{_lambda_.2} parent=5 // pred_check
      %p408 = pneg %p407
    $region34: #{_lambda_.2} parent=5 // pred_check_branch
      %410 = sbr.rel (%p408) target = $region36
    $region35: #{_lambda_.2} parent=5 // pred_region
      %s411 = ssub.s32 %s8, 2
      // Predicated region
      $region37: #{_lambda_.2} parent=35 // pred_check
        %p412 = pneg %p107
      $region38: #{_lambda_.2} parent=35 // pred_check_branch
        %414 = sbr.rel (%p412) target = $region40
      $region39: #{_lambda_.2} parent=35 // pred_region
        %p415 = scmp.lt.s32.totalorder %s19, 1
        %s416 = scalar_select %p415, %s19, 1
        %p417 = scmp.lt.s32.totalorder %s20, 0
        %s418 = scalar_select %p417, %s20, 0
        %s419 = sadd.s32 %s418, %s416
        %s420 = smul.addr %s419, 8
        %s421 = scalar_lea.vmem %s2, %s420
      $region40: #{_lambda_.2} parent=35 // pred_fallthru
        _
    $region36: #{_lambda_.2} parent=5 // pred_fallthru
      _
  $region6: #{_lambda_.2} parent=0 // loop_footer
    %s12 = sadd.s32 1, %s8
  $region7: #{_lambda_.2} parent=0 // loop_footer_branch
    %7 = sbr.rel target = $region3
  $region8: #{_lambda_.2} parent=0 // loop_exit
    _

// kernel: _lambda_.3
$region0: #{_lambda_.3}
  #allocation0 [shape = 'u32[]', space=smem, size = 0x4, offset = 0x4, fixed_abs, tag = 'smem constant byte address 0x4 - core index']
  #allocation1 [shape = 'u32[144,128]{1,0:T(1,128)}', space=vmem, size = 0x12000, scoped, tag = 'internal scratch']
  %s0 = inlined_call_operand.vmem [shape: f32[512,32], index: 0, kind: input, shape index: {}]
  %s1 = inlined_call_operand.vmem [shape: s32[512,1], index: 1, kind: input, shape index: {}]
  %s2 = inlined_call_operand.vmem [shape: f32[1,8,128], index: 2, kind: output, shape index: {}]
  %s3 = sld [smem:[#allocation0]]
  $region18: #{_lambda_.3} parent=0
    _
  %s5 = ssub.s32 1, %s3
  %s6 = scalar_select 0, %s5, %s3
  // Predicated region
  $region2: #{_lambda_.3} parent=0 // pred_check
    _
  $region3: #{_lambda_.3} parent=0 // pred_check_branch
    %8 = sbr.rel (0) target = $region5
  $region4: #{_lambda_.3} parent=0 // pred_region
    _
  $region5: #{_lambda_.3} parent=0 // pred_fallthru
    _
  // Predicated region
  $region6: #{_lambda_.3} parent=0 // pred_check
    _
  $region7: #{_lambda_.3} parent=0 // pred_check_branch
    %10 = sbr.rel (0) target = $region9
  $region8: #{_lambda_.3} parent=0 // pred_region
    _
  $region9: #{_lambda_.3} parent=0 // pred_fallthru
    _
  %v11 = vld [vmem:[%s0] sm:$0xff]
  %v12 = vld [vmem:[%s0 + $0x8] sm:$0xff]
  %v13 = vld [vmem:[%s0 + $0x10] sm:$0xff]
  %v14 = vld [vmem:[%s0 + $0x18] sm:$0xff]
  %v15 = vld [vmem:[%s0 + $0x20] sm:$0xff]
  %v16 = vld [vmem:[%s0 + $0x28] sm:$0xff]
  %v17 = vld [vmem:[%s0 + $0x30] sm:$0xff]
  %v18 = vld [vmem:[%s0 + $0x38] sm:$0xff]
  %v19 = vld [vmem:[%s0 + $0x40] sm:$0xff]
  %v20 = vld [vmem:[%s0 + $0x48] sm:$0xff]
  %v21 = vld [vmem:[%s0 + $0x50] sm:$0xff]
  %v22 = vld [vmem:[%s0 + $0x58] sm:$0xff]
  %v23 = vld [vmem:[%s0 + $0x60] sm:$0xff]
  %v24 = vld [vmem:[%s0 + $0x68] sm:$0xff]
  %v25 = vld [vmem:[%s0 + $0x70] sm:$0xff]
  %v26 = vld [vmem:[%s0 + $0x78] sm:$0xff]
  %v27 = vld [vmem:[%s0 + $0x80] sm:$0xff]
  %v28 = vld [vmem:[%s0 + $0x88] sm:$0xff]
  %v29 = vld [vmem:[%s0 + $0x90] sm:$0xff]
  %v30 = vld [vmem:[%s0 + $0x98] sm:$0xff]
  %v31 = vld [vmem:[%s0 + $0xa0] sm:$0xff]
  %v32 = vld [vmem:[%s0 + $0xa8] sm:$0xff]
  %v33 = vld [vmem:[%s0 + $0xb0] sm:$0xff]
  %v34 = vld [vmem:[%s0 + $0xb8] sm:$0xff]
  %v35 = vld [vmem:[%s0 + $0xc0] sm:$0xff]
  %v36 = vld [vmem:[%s0 + $0xc8] sm:$0xff]
  %v37 = vld [vmem:[%s0 + $0xd0] sm:$0xff]
  %v38 = vld [vmem:[%s0 + $0xd8] sm:$0xff]
  %v39 = vld [vmem:[%s0 + $0xe0] sm:$0xff]
  %v40 = vld [vmem:[%s0 + $0xe8] sm:$0xff]
  %v41 = vld [vmem:[%s0 + $0xf0] sm:$0xff]
  %v42 = vld [vmem:[%s0 + $0xf8] sm:$0xff]
  %v43 = vld [vmem:[%s0 + $0x100] sm:$0xff]
  %v44 = vld [vmem:[%s0 + $0x108] sm:$0xff]
  %v45 = vld [vmem:[%s0 + $0x110] sm:$0xff]
  %v46 = vld [vmem:[%s0 + $0x118] sm:$0xff]
  %v47 = vld [vmem:[%s0 + $0x120] sm:$0xff]
  %v48 = vld [vmem:[%s0 + $0x128] sm:$0xff]
  %v49 = vld [vmem:[%s0 + $0x130] sm:$0xff]
  %v50 = vld [vmem:[%s0 + $0x138] sm:$0xff]
  %v51 = vld [vmem:[%s0 + $0x140] sm:$0xff]
  %v52 = vld [vmem:[%s0 + $0x148] sm:$0xff]
  %v53 = vld [vmem:[%s0 + $0x150] sm:$0xff]
  %v54 = vld [vmem:[%s0 + $0x158] sm:$0xff]
  %v55 = vld [vmem:[%s0 + $0x160] sm:$0xff]
  %v56 = vld [vmem:[%s0 + $0x168] sm:$0xff]
  %v57 = vld [vmem:[%s0 + $0x170] sm:$0xff]
  %v58 = vld [vmem:[%s0 + $0x178] sm:$0xff]
  %v59 = vld [vmem:[%s0 + $0x180] sm:$0xff]
  %v60 = vld [vmem:[%s0 + $0x188] sm:$0xff]
  %v61 = vld [vmem:[%s0 + $0x190] sm:$0xff]
  %v62 = vld [vmem:[%s0 + $0x198] sm:$0xff]
  %v63 = vld [vmem:[%s0 + $0x1a0] sm:$0xff]
  %v64 = vld [vmem:[%s0 + $0x1a8] sm:$0xff]
  %v65 = vld [vmem:[%s0 + $0x1b0] sm:$0xff]
  %v66 = vld [vmem:[%s0 + $0x1b8] sm:$0xff]
  %v67 = vld [vmem:[%s0 + $0x1c0] sm:$0xff]
  %v68 = vld [vmem:[%s0 + $0x1c8] sm:$0xff]
  %v69 = vld [vmem:[%s0 + $0x1d0] sm:$0xff]
  %v70 = vld [vmem:[%s0 + $0x1d8] sm:$0xff]
  %v71 = vld [vmem:[%s0 + $0x1e0] sm:$0xff]
  %v72 = vld [vmem:[%s0 + $0x1e8] sm:$0xff]
  %v73 = vld [vmem:[%s0 + $0x1f0] sm:$0xff]
  %v74 = vld [vmem:[%s0 + $0x1f8] sm:$0xff]
  %v75 = vld [vmem:[%s1] sm:$0xff]
  %v76 = vld [vmem:[%s1 + $0x8] sm:$0xff]
  %v77 = vld [vmem:[%s1 + $0x10] sm:$0xff]
  %v78 = vld [vmem:[%s1 + $0x18] sm:$0xff]
  %v79 = vld [vmem:[%s1 + $0x20] sm:$0xff]
  %v80 = vld [vmem:[%s1 + $0x28] sm:$0xff]
  %v81 = vld [vmem:[%s1 + $0x30] sm:$0xff]
  %v82 = vld [vmem:[%s1 + $0x38] sm:$0xff]
  %v83 = vld [vmem:[%s1 + $0x40] sm:$0xff]
  %v84 = vld [vmem:[%s1 + $0x48] sm:$0xff]
  %v85 = vld [vmem:[%s1 + $0x50] sm:$0xff]
  %v86 = vld [vmem:[%s1 + $0x58] sm:$0xff]
  %v87 = vld [vmem:[%s1 + $0x60] sm:$0xff]
  %v88 = vld [vmem:[%s1 + $0x68] sm:$0xff]
  %v89 = vld [vmem:[%s1 + $0x70] sm:$0xff]
  %v90 = vld [vmem:[%s1 + $0x78] sm:$0xff]
  %v91 = vld [vmem:[%s1 + $0x80] sm:$0xff]
  %v92 = vld [vmem:[%s1 + $0x88] sm:$0xff]
  %v93 = vld [vmem:[%s1 + $0x90] sm:$0xff]
  %v94 = vld [vmem:[%s1 + $0x98] sm:$0xff]
  %v95 = vld [vmem:[%s1 + $0xa0] sm:$0xff]
  %v96 = vld [vmem:[%s1 + $0xa8] sm:$0xff]
  %v97 = vld [vmem:[%s1 + $0xb0] sm:$0xff]
  %v98 = vld [vmem:[%s1 + $0xb8] sm:$0xff]
  %v99 = vld [vmem:[%s1 + $0xc0] sm:$0xff]
  %v100 = vld [vmem:[%s1 + $0xc8] sm:$0xff]
  %v101 = vld [vmem:[%s1 + $0xd0] sm:$0xff]
  %v102 = vld [vmem:[%s1 + $0xd8] sm:$0xff]
  %v103 = vld [vmem:[%s1 + $0xe0] sm:$0xff]
  %v104 = vld [vmem:[%s1 + $0xe8] sm:$0xff]
  %v105 = vld [vmem:[%s1 + $0xf0] sm:$0xff]
  %v106 = vld [vmem:[%s1 + $0xf8] sm:$0xff]
  %v107 = vld [vmem:[%s1 + $0x100] sm:$0xff]
  %v108 = vld [vmem:[%s1 + $0x108] sm:$0xff]
  %v109 = vld [vmem:[%s1 + $0x110] sm:$0xff]
  %v110 = vld [vmem:[%s1 + $0x118] sm:$0xff]
  %v111 = vld [vmem:[%s1 + $0x120] sm:$0xff]
  %v112 = vld [vmem:[%s1 + $0x128] sm:$0xff]
  %v113 = vld [vmem:[%s1 + $0x130] sm:$0xff]
  %v114 = vld [vmem:[%s1 + $0x138] sm:$0xff]
  %v115 = vld [vmem:[%s1 + $0x140] sm:$0xff]
  %v116 = vld [vmem:[%s1 + $0x148] sm:$0xff]
  %v117 = vld [vmem:[%s1 + $0x150] sm:$0xff]
  %v118 = vld [vmem:[%s1 + $0x158] sm:$0xff]
  %v119 = vld [vmem:[%s1 + $0x160] sm:$0xff]
  %v120 = vld [vmem:[%s1 + $0x168] sm:$0xff]
  %v121 = vld [vmem:[%s1 + $0x170] sm:$0xff]
  %v122 = vld [vmem:[%s1 + $0x178] sm:$0xff]
  %v123 = vld [vmem:[%s1 + $0x180] sm:$0xff]
  %v124 = vld [vmem:[%s1 + $0x188] sm:$0xff]
  %v125 = vld [vmem:[%s1 + $0x190] sm:$0xff]
  %v126 = vld [vmem:[%s1 + $0x198] sm:$0xff]
  %v127 = vld [vmem:[%s1 + $0x1a0] sm:$0xff]
  %v128 = vld [vmem:[%s1 + $0x1a8] sm:$0xff]
  %v129 = vld [vmem:[%s1 + $0x1b0] sm:$0xff]
  %v130 = vld [vmem:[%s1 + $0x1b8] sm:$0xff]
  %v131 = vld [vmem:[%s1 + $0x1c0] sm:$0xff]
  %v132 = vld [vmem:[%s1 + $0x1c8] sm:$0xff]
  %v133 = vld [vmem:[%s1 + $0x1d0] sm:$0xff]
  %v134 = vld [vmem:[%s1 + $0x1d8] sm:$0xff]
  %v135 = vld [vmem:[%s1 + $0x1e0] sm:$0xff]
  %v136 = vld [vmem:[%s1 + $0x1e8] sm:$0xff]
  %v137 = vld [vmem:[%s1 + $0x1f0] sm:$0xff]
  %v138 = vld [vmem:[%s1 + $0x1f8] sm:$0xff]
  %s139 = smul.u32 0, 512
  %v140 = vlaneseq
  %v141 = vshrl.u32 %v140, 7
  %v142 = vadd.s32 %v141, 8
  %v143 = vadd.s32 %v141, 16
  %v144 = vadd.s32 %v141, 24
  %v145 = vadd.s32 %v141, 32
  %v146 = vadd.s32 %v141, 40
  %v147 = vadd.s32 %v141, 48
  %v148 = vadd.s32 %v141, 56
  %v149 = vadd.s32 %v141, 64
  %v150 = vadd.s32 %v141, 72
  %v151 = vadd.s32 %v141, 80
  %v152 = vadd.s32 %v141, 88
  %v153 = vadd.s32 %v141, 96
  %v154 = vadd.s32 %v141, 104
  %v155 = vadd.s32 %v141, 112
  %v156 = vadd.s32 %v141, 120
  %v157 = vadd.s32 %v141, 128
  %v158 = vadd.s32 %v141, 136
  %v159 = vadd.s32 %v141, 144
  %v160 = vadd.s32 %v141, 152
  %v161 = vadd.s32 %v141, 160
  %v162 = vadd.s32 %v141, 168
  %v163 = vadd.s32 %v141, 176
  %v164 = vadd.s32 %v141, 184
  %v165 = vadd.s32 %v141, 192
  %v166 = vadd.s32 %v141, 200
  %v167 = vadd.s32 %v141, 208
  %v168 = vadd.s32 %v141, 216
  %v169 = vadd.s32 %v141, 224
  %v170 = vadd.s32 %v141, 232
  %v171 = vadd.s32 %v141, 240
  %v172 = vadd.s32 %v141, 248
  %v173 = vadd.s32 %v141, 256
  %v174 = vadd.s32 %v141, 264
  %v175 = vadd.s32 %v141, 272
  %v176 = vadd.s32 %v141, 280
  %v177 = vadd.s32 %v141, 288
  %v178 = vadd.s32 %v141, 296
  %v179 = vadd.s32 %v141, 304
  %v180 = vadd.s32 %v141, 312
  %v181 = vadd.s32 %v141, 320
  %v182 = vadd.s32 %v141, 328
  %v183 = vadd.s32 %v141, 336
  %v184 = vadd.s32 %v141, 344
  %v185 = vadd.s32 %v141, 352
  %v186 = vadd.s32 %v141, 360
  %v187 = vadd.s32 %v141, 368
  %v188 = vadd.s32 %v141, 376
  %v189 = vadd.s32 %v141, 384
  %v190 = vadd.s32 %v141, 392
  %v191 = vadd.s32 %v141, 400
  %v192 = vadd.s32 %v141, 408
  %v193 = vadd.s32 %v141, 416
  %v194 = vadd.s32 %v141, 424
  %v195 = vadd.s32 %v141, 432
  %v196 = vadd.s32 %v141, 440
  %v197 = vadd.s32 %v141, 448
  %v198 = vadd.s32 %v141, 456
  %v199 = vadd.s32 %v141, 464
  %v200 = vadd.s32 %v141, 472
  %v201 = vadd.s32 %v141, 480
  %v202 = vadd.s32 %v141, 488
  %v203 = vadd.s32 %v141, 496
  %v204 = vadd.s32 %v141, 504
  %v205 = vstv %s139
  %v206 = vadd.s32 %v205, %v141
  %v207 = vadd.s32 %v205, %v142
  %v208 = vadd.s32 %v205, %v143
  %v209 = vadd.s32 %v205, %v144
  %v210 = vadd.s32 %v205, %v145
  %v211 = vadd.s32 %v205, %v146
  %v212 = vadd.s32 %v205, %v147
  %v213 = vadd.s32 %v205, %v148
  %v214 = vadd.s32 %v205, %v149
  %v215 = vadd.s32 %v205, %v150
  %v216 = vadd.s32 %v205, %v151
  %v217 = vadd.s32 %v205, %v152
  %v218 = vadd.s32 %v205, %v153
  %v219 = vadd.s32 %v205, %v154
  %v220 = vadd.s32 %v205, %v155
  %v221 = vadd.s32 %v205, %v156
  %v222 = vadd.s32 %v205, %v157
  %v223 = vadd.s32 %v205, %v158
  %v224 = vadd.s32 %v205, %v159
  %v225 = vadd.s32 %v205, %v160
  %v226 = vadd.s32 %v205, %v161
  %v227 = vadd.s32 %v205, %v162
  %v228 = vadd.s32 %v205, %v163
  %v229 = vadd.s32 %v205, %v164
  %v230 = vadd.s32 %v205, %v165
  %v231 = vadd.s32 %v205, %v166
  %v232 = vadd.s32 %v205, %v167
  %v233 = vadd.s32 %v205, %v168
  %v234 = vadd.s32 %v205, %v169
  %v235 = vadd.s32 %v205, %v170
  %v236 = vadd.s32 %v205, %v171
  %v237 = vadd.s32 %v205, %v172
  %v238 = vadd.s32 %v205, %v173
  %v239 = vadd.s32 %v205, %v174
  %v240 = vadd.s32 %v205, %v175
  %v241 = vadd.s32 %v205, %v176
  %v242 = vadd.s32 %v205, %v177
  %v243 = vadd.s32 %v205, %v178
  %v244 = vadd.s32 %v205, %v179
  %v245 = vadd.s32 %v205, %v180
  %v246 = vadd.s32 %v205, %v181
  %v247 = vadd.s32 %v205, %v182
  %v248 = vadd.s32 %v205, %v183
  %v249 = vadd.s32 %v205, %v184
  %v250 = vadd.s32 %v205, %v185
  %v251 = vadd.s32 %v205, %v186
  %v252 = vadd.s32 %v205, %v187
  %v253 = vadd.s32 %v205, %v188
  %v254 = vadd.s32 %v205, %v189
  %v255 = vadd.s32 %v205, %v190
  %v256 = vadd.s32 %v205, %v191
  %v257 = vadd.s32 %v205, %v192
  %v258 = vadd.s32 %v205, %v193
  %v259 = vadd.s32 %v205, %v194
  %v260 = vadd.s32 %v205, %v195
  %v261 = vadd.s32 %v205, %v196
  %v262 = vadd.s32 %v205, %v197
  %v263 = vadd.s32 %v205, %v198
  %v264 = vadd.s32 %v205, %v199
  %v265 = vadd.s32 %v205, %v200
  %v266 = vadd.s32 %v205, %v201
  %v267 = vadd.s32 %v205, %v202
  %v268 = vadd.s32 %v205, %v203
  %v269 = vadd.s32 %v205, %v204
  %vm270 = vcmp.ne.s32.totalorder %v75, 4294967295
  %vm271 = vcmp.ne.s32.totalorder %v76, 4294967295
  %vm272 = vcmp.ne.s32.totalorder %v77, 4294967295
  %vm273 = vcmp.ne.s32.totalorder %v78, 4294967295
  %vm274 = vcmp.ne.s32.totalorder %v79, 4294967295
  %vm275 = vcmp.ne.s32.totalorder %v80, 4294967295
  %vm276 = vcmp.ne.s32.totalorder %v81, 4294967295
  %vm277 = vcmp.ne.s32.totalorder %v82, 4294967295
  %vm278 = vcmp.ne.s32.totalorder %v83, 4294967295
  %vm279 = vcmp.ne.s32.totalorder %v84, 4294967295
  %vm280 = vcmp.ne.s32.totalorder %v85, 4294967295
  %vm281 = vcmp.ne.s32.totalorder %v86, 4294967295
  %vm282 = vcmp.ne.s32.totalorder %v87, 4294967295
  %vm283 = vcmp.ne.s32.totalorder %v88, 4294967295
  %vm284 = vcmp.ne.s32.totalorder %v89, 4294967295
  %vm285 = vcmp.ne.s32.totalorder %v90, 4294967295
  %vm286 = vcmp.ne.s32.totalorder %v91, 4294967295
  %vm287 = vcmp.ne.s32.totalorder %v92, 4294967295
  %vm288 = vcmp.ne.s32.totalorder %v93, 4294967295
  %vm289 = vcmp.ne.s32.totalorder %v94, 4294967295
  %vm290 = vcmp.ne.s32.totalorder %v95, 4294967295
  %vm291 = vcmp.ne.s32.totalorder %v96, 4294967295
  %vm292 = vcmp.ne.s32.totalorder %v97, 4294967295
  %vm293 = vcmp.ne.s32.totalorder %v98, 4294967295
  %vm294 = vcmp.ne.s32.totalorder %v99, 4294967295
  %vm295 = vcmp.ne.s32.totalorder %v100, 4294967295
  %vm296 = vcmp.ne.s32.totalorder %v101, 4294967295
  %vm297 = vcmp.ne.s32.totalorder %v102, 4294967295
  %vm298 = vcmp.ne.s32.totalorder %v103, 4294967295
  %vm299 = vcmp.ne.s32.totalorder %v104, 4294967295
  %vm300 = vcmp.ne.s32.totalorder %v105, 4294967295
  %vm301 = vcmp.ne.s32.totalorder %v106, 4294967295
  %vm302 = vcmp.ne.s32.totalorder %v107, 4294967295
  %vm303 = vcmp.ne.s32.totalorder %v108, 4294967295
  %vm304 = vcmp.ne.s32.totalorder %v109, 4294967295
  %vm305 = vcmp.ne.s32.totalorder %v110, 4294967295
  %vm306 = vcmp.ne.s32.totalorder %v111, 4294967295
  %vm307 = vcmp.ne.s32.totalorder %v112, 4294967295
  %vm308 = vcmp.ne.s32.totalorder %v113, 4294967295
  %vm309 = vcmp.ne.s32.totalorder %v114, 4294967295
  %vm310 = vcmp.ne.s32.totalorder %v115, 4294967295
  %vm311 = vcmp.ne.s32.totalorder %v116, 4294967295
  %vm312 = vcmp.ne.s32.totalorder %v117, 4294967295
  %vm313 = vcmp.ne.s32.totalorder %v118, 4294967295
  %vm314 = vcmp.ne.s32.totalorder %v119, 4294967295
  %vm315 = vcmp.ne.s32.totalorder %v120, 4294967295
  %vm316 = vcmp.ne.s32.totalorder %v121, 4294967295
  %vm317 = vcmp.ne.s32.totalorder %v122, 4294967295
  %vm318 = vcmp.ne.s32.totalorder %v123, 4294967295
  %vm319 = vcmp.ne.s32.totalorder %v124, 4294967295
  %vm320 = vcmp.ne.s32.totalorder %v125, 4294967295
  %vm321 = vcmp.ne.s32.totalorder %v126, 4294967295
  %vm322 = vcmp.ne.s32.totalorder %v127, 4294967295
  %vm323 = vcmp.ne.s32.totalorder %v128, 4294967295
  %vm324 = vcmp.ne.s32.totalorder %v129, 4294967295
  %vm325 = vcmp.ne.s32.totalorder %v130, 4294967295
  %vm326 = vcmp.ne.s32.totalorder %v131, 4294967295
  %vm327 = vcmp.ne.s32.totalorder %v132, 4294967295
  %vm328 = vcmp.ne.s32.totalorder %v133, 4294967295
  %vm329 = vcmp.ne.s32.totalorder %v134, 4294967295
  %vm330 = vcmp.ne.s32.totalorder %v135, 4294967295
  %vm331 = vcmp.ne.s32.totalorder %v136, 4294967295
  %vm332 = vcmp.ne.s32.totalorder %v137, 4294967295
  %vm333 = vcmp.ne.s32.totalorder %v138, 4294967295
  %vm334 = vcmp.lt.s32.totalorder %v206, 512
  %vm335 = vcmp.lt.s32.totalorder %v207, 512
  %vm336 = vcmp.lt.s32.totalorder %v208, 512
  %vm337 = vcmp.lt.s32.totalorder %v209, 512
  %vm338 = vcmp.lt.s32.totalorder %v210, 512
  %vm339 = vcmp.lt.s32.totalorder %v211, 512
  %vm340 = vcmp.lt.s32.totalorder %v212, 512
  %vm341 = vcmp.lt.s32.totalorder %v213, 512
  %vm342 = vcmp.lt.s32.totalorder %v214, 512
  %vm343 = vcmp.lt.s32.totalorder %v215, 512
  %vm344 = vcmp.lt.s32.totalorder %v216, 512
  %vm345 = vcmp.lt.s32.totalorder %v217, 512
  %vm346 = vcmp.lt.s32.totalorder %v218, 512
  %vm347 = vcmp.lt.s32.totalorder %v219, 512
  %vm348 = vcmp.lt.s32.totalorder %v220, 512
  %vm349 = vcmp.lt.s32.totalorder %v221, 512
  %vm350 = vcmp.lt.s32.totalorder %v222, 512
  %vm351 = vcmp.lt.s32.totalorder %v223, 512
  %vm352 = vcmp.lt.s32.totalorder %v224, 512
  %vm353 = vcmp.lt.s32.totalorder %v225, 512
  %vm354 = vcmp.lt.s32.totalorder %v226, 512
  %vm355 = vcmp.lt.s32.totalorder %v227, 512
  %vm356 = vcmp.lt.s32.totalorder %v228, 512
  %vm357 = vcmp.lt.s32.totalorder %v229, 512
  %vm358 = vcmp.lt.s32.totalorder %v230, 512
  %vm359 = vcmp.lt.s32.totalorder %v231, 512
  %vm360 = vcmp.lt.s32.totalorder %v232, 512
  %vm361 = vcmp.lt.s32.totalorder %v233, 512
  %vm362 = vcmp.lt.s32.totalorder %v234, 512
  %vm363 = vcmp.lt.s32.totalorder %v235, 512
  %vm364 = vcmp.lt.s32.totalorder %v236, 512
  %vm365 = vcmp.lt.s32.totalorder %v237, 512
  %vm366 = vcmp.lt.s32.totalorder %v238, 512
  %vm367 = vcmp.lt.s32.totalorder %v239, 512
  %vm368 = vcmp.lt.s32.totalorder %v240, 512
  %vm369 = vcmp.lt.s32.totalorder %v241, 512
  %vm370 = vcmp.lt.s32.totalorder %v242, 512
  %vm371 = vcmp.lt.s32.totalorder %v243, 512
  %vm372 = vcmp.lt.s32.totalorder %v244, 512
  %vm373 = vcmp.lt.s32.totalorder %v245, 512
  %vm374 = vcmp.lt.s32.totalorder %v246, 512
  %vm375 = vcmp.lt.s32.totalorder %v247, 512
  %vm376 = vcmp.lt.s32.totalorder %v248, 512
  %vm377 = vcmp.lt.s32.totalorder %v249, 512
  %vm378 = vcmp.lt.s32.totalorder %v250, 512
  %vm379 = vcmp.lt.s32.totalorder %v251, 512
  %vm380 = vcmp.lt.s32.totalorder %v252, 512
  %vm381 = vcmp.lt.s32.totalorder %v253, 512
  %vm382 = vcmp.lt.s32.totalorder %v254, 512
  %vm383 = vcmp.lt.s32.totalorder %v255, 512
  %vm384 = vcmp.lt.s32.totalorder %v256, 512
  %vm385 = vcmp.lt.s32.totalorder %v257, 512
  %vm386 = vcmp.lt.s32.totalorder %v258, 512
  %vm387 = vcmp.lt.s32.totalorder %v259, 512
  %vm388 = vcmp.lt.s32.totalorder %v260, 512
  %vm389 = vcmp.lt.s32.totalorder %v261, 512
  %vm390 = vcmp.lt.s32.totalorder %v262, 512
  %vm391 = vcmp.lt.s32.totalorder %v263, 512
  %vm392 = vcmp.lt.s32.totalorder %v264, 512
  %vm393 = vcmp.lt.s32.totalorder %v265, 512
  %vm394 = vcmp.lt.s32.totalorder %v266, 512
  %vm395 = vcmp.lt.s32.totalorder %v267, 512
  %vm396 = vcmp.lt.s32.totalorder %v268, 512
  %vm397 = vcmp.lt.s32.totalorder %v269, 512
  %vm398 = vmand %vm270, %vm334
  %vm399 = vmand %vm271, %vm335
  %vm400 = vmand %vm272, %vm336
  %vm401 = vmand %vm273, %vm337
  %vm402 = vmand %vm274, %vm338
  %vm403 = vmand %vm275, %vm339
  %vm404 = vmand %vm276, %vm340
  %vm405 = vmand %vm277, %vm341
  %vm406 = vmand %vm278, %vm342
  %vm407 = vmand %vm279, %vm343
  %vm408 = vmand %vm280, %vm344
  %vm409 = vmand %vm281, %vm345
  %vm410 = vmand %vm282, %vm346
  %vm411 = vmand %vm283, %vm347
  %vm412 = vmand %vm284, %vm348
  %vm413 = vmand %vm285, %vm349
  %vm414 = vmand %vm286, %vm350
  %vm415 = vmand %vm287, %vm351
  %vm416 = vmand %vm288, %vm352
  %vm417 = vmand %vm289, %vm353
  %vm418 = vmand %vm290, %vm354
  %vm419 = vmand %vm291, %vm355
  %vm420 = vmand %vm292, %vm356
  %vm421 = vmand %vm293, %vm357
  %vm422 = vmand %vm294, %vm358
  %vm423 = vmand %vm295, %vm359
  %vm424 = vmand %vm296, %vm360
  %vm425 = vmand %vm297, %vm361
  %vm426 = vmand %vm298, %vm362
  %vm427 = vmand %vm299, %vm363
  %vm428 = vmand %vm300, %vm364
  %vm429 = vmand %vm301, %vm365
  %vm430 = vmand %vm302, %vm366
  %vm431 = vmand %vm303, %vm367
  %vm432 = vmand %vm304, %vm368
  %vm433 = vmand %vm305, %vm369
  %vm434 = vmand %vm306, %vm370
  %vm435 = vmand %vm307, %vm371
  %vm436 = vmand %vm308, %vm372
  %vm437 = vmand %vm309, %vm373
  %vm438 = vmand %vm310, %vm374
  %vm439 = vmand %vm311, %vm375
  %vm440 = vmand %vm312, %vm376
  %vm441 = vmand %vm313, %vm377
  %vm442 = vmand %vm314, %vm378
  %vm443 = vmand %vm315, %vm379
  %vm444 = vmand %vm316, %vm380
  %vm445 = vmand %vm317, %vm381
  %vm446 = vmand %vm318, %vm382
  %vm447 = vmand %vm319, %vm383
  %vm448 = vmand %vm320, %vm384
  %vm449 = vmand %vm321, %vm385
  %vm450 = vmand %vm322, %vm386
  %vm451 = vmand %vm323, %vm387
  %vm452 = vmand %vm324, %vm388
  %vm453 = vmand %vm325, %vm389
  %vm454 = vmand %vm326, %vm390
  %vm455 = vmand %vm327, %vm391
  %vm456 = vmand %vm328, %vm392
  %vm457 = vmand %vm329, %vm393
  %vm458 = vmand %vm330, %vm394
  %vm459 = vmand %vm331, %vm395
  %vm460 = vmand %vm332, %vm396
  %vm461 = vmand %vm333, %vm397
  %vm462 = vcmask 261120
  %v463 = vsel %vm462, %v11, -inf
  %464 = vmax.xlane.f32.xlu0 %v463
  %v465 = vpop.xlane.xlu0 %464
  %v466 = vsel %vm462, %v12, -inf
  %467 = vmax.xlane.f32.xlu0 %v466
  %v468 = vpop.xlane.xlu0 %467
  %v469 = vsel %vm462, %v13, -inf
  %470 = vmax.xlane.f32.xlu0 %v469
  %v471 = vpop.xlane.xlu0 %470
  %v472 = vsel %vm462, %v14, -inf
  %473 = vmax.xlane.f32.xlu0 %v472
  %v474 = vpop.xlane.xlu0 %473
  %v475 = vsel %vm462, %v15, -inf
  %476 = vmax.xlane.f32.xlu0 %v475
  %v477 = vpop.xlane.xlu0 %476
  %v478 = vsel %vm462, %v16, -inf
  %479 = vmax.xlane.f32.xlu0 %v478
  %v480 = vpop.xlane.xlu0 %479
  %v481 = vsel %vm462, %v17, -inf
  %482 = vmax.xlane.f32.xlu0 %v481
  %v483 = vpop.xlane.xlu0 %482
  %v484 = vsel %vm462, %v18, -inf
  %485 = vmax.xlane.f32.xlu0 %v484
  %v486 = vpop.xlane.xlu0 %485
  %v487 = vsel %vm462, %v19, -inf
  %488 = vmax.xlane.f32.xlu0 %v487
  %v489 = vpop.xlane.xlu0 %488
  %v490 = vsel %vm462, %v20, -inf
  %491 = vmax.xlane.f32.xlu0 %v490
  %v492 = vpop.xlane.xlu0 %491
  %v493 = vsel %vm462, %v21, -inf
  %494 = vmax.xlane.f32.xlu0 %v493
  %v495 = vpop.xlane.xlu0 %494
  %v496 = vsel %vm462, %v22, -inf
  %497 = vmax.xlane.f32.xlu0 %v496
  %v498 = vpop.xlane.xlu0 %497
  %v499 = vsel %vm462, %v23, -inf
  %500 = vmax.xlane.f32.xlu0 %v499
  %v501 = vpop.xlane.xlu0 %500
  %v502 = vsel %vm462, %v24, -inf
  %503 = vmax.xlane.f32.xlu0 %v502
  %v504 = vpop.xlane.xlu0 %503
  %v505 = vsel %vm462, %v25, -inf
  %506 = vmax.xlane.f32.xlu0 %v505
  %v507 = vpop.xlane.xlu0 %506
  %v508 = vsel %vm462, %v26, -inf
  %509 = vmax.xlane.f32.xlu0 %v508
  %v510 = vpop.xlane.xlu0 %509
  %v511 = vsel %vm462, %v27, -inf
  %512 = vmax.xlane.f32.xlu0 %v511
  %v513 = vpop.xlane.xlu0 %512
  %v514 = vsel %vm462, %v28, -inf
  %515 = vmax.xlane.f32.xlu0 %v514
  %v516 = vpop.xlane.xlu0 %515
  %v517 = vsel %vm462, %v29, -inf
  %518 = vmax.xlane.f32.xlu0 %v517
  %v519 = vpop.xlane.xlu0 %518
  %v520 = vsel %vm462, %v30, -inf
  %521 = vmax.xlane.f32.xlu0 %v520
  %v522 = vpop.xlane.xlu0 %521
  %v523 = vsel %vm462, %v31, -inf
  %524 = vmax.xlane.f32.xlu0 %v523
  %v525 = vpop.xlane.xlu0 %524
  %v526 = vsel %vm462, %v32, -inf
  %527 = vmax.xlane.f32.xlu0 %v526
  %v528 = vpop.xlane.xlu0 %527
  %v529 = vsel %vm462, %v33, -inf
  %530 = vmax.xlane.f32.xlu0 %v529
  %v531 = vpop.xlane.xlu0 %530
  %v532 = vsel %vm462, %v34, -inf
  %533 = vmax.xlane.f32.xlu0 %v532
  %v534 = vpop.xlane.xlu0 %533
  %v535 = vsel %vm462, %v35, -inf
  %536 = vmax.xlane.f32.xlu0 %v535
  %v537 = vpop.xlane.xlu0 %536
  %v538 = vsel %vm462, %v36, -inf
  %539 = vmax.xlane.f32.xlu0 %v538
  %v540 = vpop.xlane.xlu0 %539
  %v541 = vsel %vm462, %v37, -inf
  %542 = vmax.xlane.f32.xlu0 %v541
  %v543 = vpop.xlane.xlu0 %542
  %v544 = vsel %vm462, %v38, -inf
  %545 = vmax.xlane.f32.xlu0 %v544
  %v546 = vpop.xlane.xlu0 %545
  %v547 = vsel %vm462, %v39, -inf
  %548 = vmax.xlane.f32.xlu0 %v547
  %v549 = vpop.xlane.xlu0 %548
  %v550 = vsel %vm462, %v40, -inf
  %551 = vmax.xlane.f32.xlu0 %v550
  %v552 = vpop.xlane.xlu0 %551
  %v553 = vsel %vm462, %v41, -inf
  %554 = vmax.xlane.f32.xlu0 %v553
  %v555 = vpop.xlane.xlu0 %554
  %v556 = vsel %vm462, %v42, -inf
  %557 = vmax.xlane.f32.xlu0 %v556
  %v558 = vpop.xlane.xlu0 %557
  %v559 = vsel %vm462, %v43, -inf
  %560 = vmax.xlane.f32.xlu0 %v559
  %v561 = vpop.xlane.xlu0 %560
  %v562 = vsel %vm462, %v44, -inf
  %563 = vmax.xlane.f32.xlu0 %v562
  %v564 = vpop.xlane.xlu0 %563
  %v565 = vsel %vm462, %v45, -inf
  %566 = vmax.xlane.f32.xlu0 %v565
  %v567 = vpop.xlane.xlu0 %566
  %v568 = vsel %vm462, %v46, -inf
  %569 = vmax.xlane.f32.xlu0 %v568
  %v570 = vpop.xlane.xlu0 %569
  %v571 = vsel %vm462, %v47, -inf
  %572 = vmax.xlane.f32.xlu0 %v571
  %v573 = vpop.xlane.xlu0 %572
  %v574 = vsel %vm462, %v48, -inf
  %575 = vmax.xlane.f32.xlu0 %v574
  %v576 = vpop.xlane.xlu0 %575
  %v577 = vsel %vm462, %v49, -inf
  %578 = vmax.xlane.f32.xlu0 %v577
  %v579 = vpop.xlane.xlu0 %578
  %v580 = vsel %vm462, %v50, -inf
  %581 = vmax.xlane.f32.xlu0 %v580
  %v582 = vpop.xlane.xlu0 %581
  %v583 = vsel %vm462, %v51, -inf
  %584 = vmax.xlane.f32.xlu0 %v583
  %v585 = vpop.xlane.xlu0 %584
  %v586 = vsel %vm462, %v52, -inf
  %587 = vmax.xlane.f32.xlu0 %v586
  %v588 = vpop.xlane.xlu0 %587
  %v589 = vsel %vm462, %v53, -inf
  %590 = vmax.xlane.f32.xlu0 %v589
  %v591 = vpop.xlane.xlu0 %590
  %v592 = vsel %vm462, %v54, -inf
  %593 = vmax.xlane.f32.xlu0 %v592
  %v594 = vpop.xlane.xlu0 %593
  %v595 = vsel %vm462, %v55, -inf
  %596 = vmax.xlane.f32.xlu0 %v595
  %v597 = vpop.xlane.xlu0 %596
  %v598 = vsel %vm462, %v56, -inf
  %599 = vmax.xlane.f32.xlu0 %v598
  %v600 = vpop.xlane.xlu0 %599
  %v601 = vsel %vm462, %v57, -inf
  %602 = vmax.xlane.f32.xlu0 %v601
  %v603 = vpop.xlane.xlu0 %602
  %v604 = vsel %vm462, %v58, -inf
  %605 = vmax.xlane.f32.xlu0 %v604
  %v606 = vpop.xlane.xlu0 %605
  %v607 = vsel %vm462, %v59, -inf
  %608 = vmax.xlane.f32.xlu0 %v607
  %v609 = vpop.xlane.xlu0 %608
  %v610 = vsel %vm462, %v60, -inf
  %611 = vmax.xlane.f32.xlu0 %v610
  %v612 = vpop.xlane.xlu0 %611
  %v613 = vsel %vm462, %v61, -inf
  %614 = vmax.xlane.f32.xlu0 %v613
  %v615 = vpop.xlane.xlu0 %614
  %v616 = vsel %vm462, %v62, -inf
  %617 = vmax.xlane.f32.xlu0 %v616
  %v618 = vpop.xlane.xlu0 %617
  %v619 = vsel %vm462, %v63, -inf
  %620 = vmax.xlane.f32.xlu0 %v619
  %v621 = vpop.xlane.xlu0 %620
  %v622 = vsel %vm462, %v64, -inf
  %623 = vmax.xlane.f32.xlu0 %v622
  %v624 = vpop.xlane.xlu0 %623
  %v625 = vsel %vm462, %v65, -inf
  %626 = vmax.xlane.f32.xlu0 %v625
  %v627 = vpop.xlane.xlu0 %626
  %v628 = vsel %vm462, %v66, -inf
  %629 = vmax.xlane.f32.xlu0 %v628
  %v630 = vpop.xlane.xlu0 %629
  %v631 = vsel %vm462, %v67, -inf
  %632 = vmax.xlane.f32.xlu0 %v631
  %v633 = vpop.xlane.xlu0 %632
  %v634 = vsel %vm462, %v68, -inf
  %635 = vmax.xlane.f32.xlu0 %v634
  %v636 = vpop.xlane.xlu0 %635
  %v637 = vsel %vm462, %v69, -inf
  %638 = vmax.xlane.f32.xlu0 %v637
  %v639 = vpop.xlane.xlu0 %638
  %v640 = vsel %vm462, %v70, -inf
  %641 = vmax.xlane.f32.xlu0 %v640
  %v642 = vpop.xlane.xlu0 %641
  %v643 = vsel %vm462, %v71, -inf
  %644 = vmax.xlane.f32.xlu0 %v643
  %v645 = vpop.xlane.xlu0 %644
  %v646 = vsel %vm462, %v72, -inf
  %647 = vmax.xlane.f32.xlu0 %v646
  %v648 = vpop.xlane.xlu0 %647
  %v649 = vsel %vm462, %v73, -inf
  %650 = vmax.xlane.f32.xlu0 %v649
  %v651 = vpop.xlane.xlu0 %650
  %v652 = vsel %vm462, %v74, -inf
  %653 = vmax.xlane.f32.xlu0 %v652
  %v654 = vpop.xlane.xlu0 %653
  %v655 = vsub.f32 %v11, %v465
  %v656 = vsub.f32 %v12, %v468
  %v657 = vsub.f32 %v13, %v471
  %v658 = vsub.f32 %v14, %v474
  %v659 = vsub.f32 %v15, %v477
  %v660 = vsub.f32 %v16, %v480
  %v661 = vsub.f32 %v17, %v483
  %v662 = vsub.f32 %v18, %v486
  %v663 = vsub.f32 %v19, %v489
  %v664 = vsub.f32 %v20, %v492
  %v665 = vsub.f32 %v21, %v495
  %v666 = vsub.f32 %v22, %v498
  %v667 = vsub.f32 %v23, %v501
  %v668 = vsub.f32 %v24, %v504
  %v669 = vsub.f32 %v25, %v507
  %v670 = vsub.f32 %v26, %v510
  %v671 = vsub.f32 %v27, %v513
  %v672 = vsub.f32 %v28, %v516
  %v673 = vsub.f32 %v29, %v519
  %v674 = vsub.f32 %v30, %v522
  %v675 = vsub.f32 %v31, %v525
  %v676 = vsub.f32 %v32, %v528
  %v677 = vsub.f32 %v33, %v531
  %v678 = vsub.f32 %v34, %v534
  %v679 = vsub.f32 %v35, %v537
  %v680 = vsub.f32 %v36, %v540
  %v681 = vsub.f32 %v37, %v543
  %v682 = vsub.f32 %v38, %v546
  %v683 = vsub.f32 %v39, %v549
  %v684 = vsub.f32 %v40, %v552
  %v685 = vsub.f32 %v41, %v555
  %v686 = vsub.f32 %v42, %v558
  %v687 = vsub.f32 %v43, %v561
  %v688 = vsub.f32 %v44, %v564
  %v689 = vsub.f32 %v45, %v567
  %v690 = vsub.f32 %v46, %v570
  %v691 = vsub.f32 %v47, %v573
  %v692 = vsub.f32 %v48, %v576
  %v693 = vsub.f32 %v49, %v579
  %v694 = vsub.f32 %v50, %v582
  %v695 = vsub.f32 %v51, %v585
  %v696 = vsub.f32 %v52, %v588
  %v697 = vsub.f32 %v53, %v591
  %v698 = vsub.f32 %v54, %v594
  %v699 = vsub.f32 %v55, %v597
  %v700 = vsub.f32 %v56, %v600
  %v701 = vsub.f32 %v57, %v603
  %v702 = vsub.f32 %v58, %v606
  %v703 = vsub.f32 %v59, %v609
  %v704 = vsub.f32 %v60, %v612
  %v705 = vsub.f32 %v61, %v615
  %v706 = vsub.f32 %v62, %v618
  %v707 = vsub.f32 %v63, %v621
  %v708 = vsub.f32 %v64, %v624
  %v709 = vsub.f32 %v65, %v627
  %v710 = vsub.f32 %v66, %v630
  %v711 = vsub.f32 %v67, %v633
  %v712 = vsub.f32 %v68, %v636
  %v713 = vsub.f32 %v69, %v639
  %v714 = vsub.f32 %v70, %v642
  %v715 = vsub.f32 %v71, %v645
  %v716 = vsub.f32 %v72, %v648
  %v717 = vsub.f32 %v73, %v651
  %v718 = vsub.f32 %v74, %v654
  %v719 = vmul.f32 %v655, 1.442695
  %v720 = vpow.pop %v719
  %v721 = vmul.f32 %v656, 1.442695
  %v722 = vpow.pop %v721
  %v723 = vmul.f32 %v657, 1.442695
  %v724 = vpow.pop %v723
  %v725 = vmul.f32 %v658, 1.442695
  %v726 = vpow.pop %v725
  %v727 = vmul.f32 %v659, 1.442695
  %v728 = vpow.pop %v727
  %v729 = vmul.f32 %v660, 1.442695
  %v730 = vpow.pop %v729
  %v731 = vmul.f32 %v661, 1.442695
  %v732 = vpow.pop %v731
  %v733 = vmul.f32 %v662, 1.442695
  %v734 = vpow.pop %v733
  %v735 = vmul.f32 %v663, 1.442695
  %v736 = vpow.pop %v735
  %v737 = vmul.f32 %v664, 1.442695
  %v738 = vpow.pop %v737
  %v739 = vmul.f32 %v665, 1.442695
  %v740 = vpow.pop %v739
  %v741 = vmul.f32 %v666, 1.442695
  %v742 = vpow.pop %v741
  %v743 = vmul.f32 %v667, 1.442695
  %v744 = vpow.pop %v743
  %v745 = vmul.f32 %v668, 1.442695
  %v746 = vpow.pop %v745
  %v747 = vmul.f32 %v669, 1.442695
  %v748 = vpow.pop %v747
  %v749 = vmul.f32 %v670, 1.442695
  %v750 = vpow.pop %v749
  %v751 = vmul.f32 %v671, 1.442695
  %v752 = vpow.pop %v751
  %v753 = vmul.f32 %v672, 1.442695
  %v754 = vpow.pop %v753
  %v755 = vmul.f32 %v673, 1.442695
  %v756 = vpow.pop %v755
  %v757 = vmul.f32 %v674, 1.442695
  %v758 = vpow.pop %v757
  %v759 = vmul.f32 %v675, 1.442695
  %v760 = vpow.pop %v759
  %v761 = vmul.f32 %v676, 1.442695
  %v762 = vpow.pop %v761
  %v763 = vmul.f32 %v677, 1.442695
  %v764 = vpow.pop %v763
  %v765 = vmul.f32 %v678, 1.442695
  %v766 = vpow.pop %v765
  %v767 = vmul.f32 %v679, 1.442695
  %v768 = vpow.pop %v767
  %v769 = vmul.f32 %v680, 1.442695
  %v770 = vpow.pop %v769
  %v771 = vmul.f32 %v681, 1.442695
  %v772 = vpow.pop %v771
  %v773 = vmul.f32 %v682, 1.442695
  %v774 = vpow.pop %v773
  %v775 = vmul.f32 %v683, 1.442695
  %v776 = vpow.pop %v775
  %v777 = vmul.f32 %v684, 1.442695
  %v778 = vpow.pop %v777
  %v779 = vmul.f32 %v685, 1.442695
  %v780 = vpow.pop %v779
  %v781 = vmul.f32 %v686, 1.442695
  %v782 = vpow.pop %v781
  %v783 = vmul.f32 %v687, 1.442695
  %v784 = vpow.pop %v783
  %v785 = vmul.f32 %v688, 1.442695
  %v786 = vpow.pop %v785
  %v787 = vmul.f32 %v689, 1.442695
  %v788 = vpow.pop %v787
  %v789 = vmul.f32 %v690, 1.442695
  %v790 = vpow.pop %v789
  %v791 = vmul.f32 %v691, 1.442695
  %v792 = vpow.pop %v791
  %v793 = vmul.f32 %v692, 1.442695
  %v794 = vpow.pop %v793
  %v795 = vmul.f32 %v693, 1.442695
  %v796 = vpow.pop %v795
  %v797 = vmul.f32 %v694, 1.442695
  %v798 = vpow.pop %v797
  %v799 = vmul.f32 %v695, 1.442695
  %v800 = vpow.pop %v799
  %v801 = vmul.f32 %v696, 1.442695
  %v802 = vpow.pop %v801
  %v803 = vmul.f32 %v697, 1.442695
  %v804 = vpow.pop %v803
  %v805 = vmul.f32 %v698, 1.442695
  %v806 = vpow.pop %v805
  %v807 = vmul.f32 %v699, 1.442695
  %v808 = vpow.pop %v807
  %v809 = vmul.f32 %v700, 1.442695
  %v810 = vpow.pop %v809
  %v811 = vmul.f32 %v701, 1.442695
  %v812 = vpow.pop %v811
  %v813 = vmul.f32 %v702, 1.442695
  %v814 = vpow.pop %v813
  %v815 = vmul.f32 %v703, 1.442695
  %v816 = vpow.pop %v815
  %v817 = vmul.f32 %v704, 1.442695
  %v818 = vpow.pop %v817
  %v819 = vmul.f32 %v705, 1.442695
  %v820 = vpow.pop %v819
  %v821 = vmul.f32 %v706, 1.442695
  %v822 = vpow.pop %v821
  %v823 = vmul.f32 %v707, 1.442695
  %v824 = vpow.pop %v823
  %v825 = vmul.f32 %v708, 1.442695
  %v826 = vpow.pop %v825
  %v827 = vmul.f32 %v709, 1.442695
  %v828 = vpow.pop %v827
  %v829 = vmul.f32 %v710, 1.442695
  %v830 = vpow.pop %v829
  %v831 = vmul.f32 %v711, 1.442695
  %v832 = vpow.pop %v831
  %v833 = vmul.f32 %v712, 1.442695
  %v834 = vpow.pop %v833
  %v835 = vmul.f32 %v713, 1.442695
  %v836 = vpow.pop %v835
  %v837 = vmul.f32 %v714, 1.442695
  %v838 = vpow.pop %v837
  %v839 = vmul.f32 %v715, 1.442695
  %v840 = vpow.pop %v839
  %v841 = vmul.f32 %v716, 1.442695
  %v842 = vpow.pop %v841
  %v843 = vmul.f32 %v717, 1.442695
  %v844 = vpow.pop %v843
  %v845 = vmul.f32 %v718, 1.442695
  %v846 = vpow.pop %v845
  %v847 = vsel %vm462, %v720, 0.0
  %848 = vadd.xlane.f32.xlu0 %v847
  %v849 = vpop.xlane.xlu0 %848
  %v850 = vsel %vm462, %v722, 0.0
  %851 = vadd.xlane.f32.xlu0 %v850
  %v852 = vpop.xlane.xlu0 %851
  %v853 = vsel %vm462, %v724, 0.0
  %854 = vadd.xlane.f32.xlu0 %v853
  %v855 = vpop.xlane.xlu0 %854
  %v856 = vsel %vm462, %v726, 0.0
  %857 = vadd.xlane.f32.xlu0 %v856
  %v858 = vpop.xlane.xlu0 %857
  %v859 = vsel %vm462, %v728, 0.0
  %860 = vadd.xlane.f32.xlu0 %v859
  %v861 = vpop.xlane.xlu0 %860
  %v862 = vsel %vm462, %v730, 0.0
  %863 = vadd.xlane.f32.xlu0 %v862
  %v864 = vpop.xlane.xlu0 %863
  %v865 = vsel %vm462, %v732, 0.0
  %866 = vadd.xlane.f32.xlu0 %v865
  %v867 = vpop.xlane.xlu0 %866
  %v868 = vsel %vm462, %v734, 0.0
  %869 = vadd.xlane.f32.xlu0 %v868
  %v870 = vpop.xlane.xlu0 %869
  %v871 = vsel %vm462, %v736, 0.0
  %872 = vadd.xlane.f32.xlu0 %v871
  %v873 = vpop.xlane.xlu0 %872
  %v874 = vsel %vm462, %v738, 0.0
  %875 = vadd.xlane.f32.xlu0 %v874
  %v876 = vpop.xlane.xlu0 %875
  %v877 = vsel %vm462, %v740, 0.0
  %878 = vadd.xlane.f32.xlu0 %v877
  %v879 = vpop.xlane.xlu0 %878
  %v880 = vsel %vm462, %v742, 0.0
  %881 = vadd.xlane.f32.xlu0 %v880
  %v882 = vpop.xlane.xlu0 %881
  %v883 = vsel %vm462, %v744, 0.0
  %884 = vadd.xlane.f32.xlu0 %v883
  %v885 = vpop.xlane.xlu0 %884
  %v886 = vsel %vm462, %v746, 0.0
  %887 = vadd.xlane.f32.xlu0 %v886
  %v888 = vpop.xlane.xlu0 %887
  %v889 = vsel %vm462, %v748, 0.0
  %890 = vadd.xlane.f32.xlu0 %v889
  %v891 = vpop.xlane.xlu0 %890
  %v892 = vsel %vm462, %v750, 0.0
  %893 = vadd.xlane.f32.xlu0 %v892
  %v894 = vpop.xlane.xlu0 %893
  %v895 = vsel %vm462, %v752, 0.0
  %896 = vadd.xlane.f32.xlu0 %v895
  %v897 = vpop.xlane.xlu0 %896
  %v898 = vsel %vm462, %v754, 0.0
  %899 = vadd.xlane.f32.xlu0 %v898
  %v900 = vpop.xlane.xlu0 %899
  %v901 = vsel %vm462, %v756, 0.0
  %902 = vadd.xlane.f32.xlu0 %v901
  %v903 = vpop.xlane.xlu0 %902
  %v904 = vsel %vm462, %v758, 0.0
  %905 = vadd.xlane.f32.xlu0 %v904
  %v906 = vpop.xlane.xlu0 %905
  %v907 = vsel %vm462, %v760, 0.0
  %908 = vadd.xlane.f32.xlu0 %v907
  %v909 = vpop.xlane.xlu0 %908
  %v910 = vsel %vm462, %v762, 0.0
  %911 = vadd.xlane.f32.xlu0 %v910
  %v912 = vpop.xlane.xlu0 %911
  %v913 = vsel %vm462, %v764, 0.0
  %914 = vadd.xlane.f32.xlu0 %v913
  %v915 = vpop.xlane.xlu0 %914
  %v916 = vsel %vm462, %v766, 0.0
  %917 = vadd.xlane.f32.xlu0 %v916
  %v918 = vpop.xlane.xlu0 %917
  %v919 = vsel %vm462, %v768, 0.0
  %920 = vadd.xlane.f32.xlu0 %v919
  %v921 = vpop.xlane.xlu0 %920
  %v922 = vsel %vm462, %v770, 0.0
  %923 = vadd.xlane.f32.xlu0 %v922
  %v924 = vpop.xlane.xlu0 %923
  %v925 = vsel %vm462, %v772, 0.0
  %926 = vadd.xlane.f32.xlu0 %v925
  %v927 = vpop.xlane.xlu0 %926
  %v928 = vsel %vm462, %v774, 0.0
  %929 = vadd.xlane.f32.xlu0 %v928
  %v930 = vpop.xlane.xlu0 %929
  %v931 = vsel %vm462, %v776, 0.0
  %932 = vadd.xlane.f32.xlu0 %v931
  %v933 = vpop.xlane.xlu0 %932
  %v934 = vsel %vm462, %v778, 0.0
  %935 = vadd.xlane.f32.xlu0 %v934
  %v936 = vpop.xlane.xlu0 %935
  %v937 = vsel %vm462, %v780, 0.0
  %938 = vadd.xlane.f32.xlu0 %v937
  %v939 = vpop.xlane.xlu0 %938
  %v940 = vsel %vm462, %v782, 0.0
  %941 = vadd.xlane.f32.xlu0 %v940
  %v942 = vpop.xlane.xlu0 %941
  %v943 = vsel %vm462, %v784, 0.0
  %944 = vadd.xlane.f32.xlu0 %v943
  %v945 = vpop.xlane.xlu0 %944
  %v946 = vsel %vm462, %v786, 0.0
  %947 = vadd.xlane.f32.xlu0 %v946
  %v948 = vpop.xlane.xlu0 %947
  %v949 = vsel %vm462, %v788, 0.0
  %950 = vadd.xlane.f32.xlu0 %v949
  %v951 = vpop.xlane.xlu0 %950
  %v952 = vsel %vm462, %v790, 0.0
  %953 = vadd.xlane.f32.xlu0 %v952
  %v954 = vpop.xlane.xlu0 %953
  %v955 = vsel %vm462, %v792, 0.0
  %956 = vadd.xlane.f32.xlu0 %v955
  %v957 = vpop.xlane.xlu0 %956
  %v958 = vsel %vm462, %v794, 0.0
  %959 = vadd.xlane.f32.xlu0 %v958
  %v960 = vpop.xlane.xlu0 %959
  %v961 = vsel %vm462, %v796, 0.0
  %962 = vadd.xlane.f32.xlu0 %v961
  %v963 = vpop.xlane.xlu0 %962
  %v964 = vsel %vm462, %v798, 0.0
  %965 = vadd.xlane.f32.xlu0 %v964
  %v966 = vpop.xlane.xlu0 %965
  %v967 = vsel %vm462, %v800, 0.0
  %968 = vadd.xlane.f32.xlu0 %v967
  %v969 = vpop.xlane.xlu0 %968
  %v970 = vsel %vm462, %v802, 0.0
  %971 = vadd.xlane.f32.xlu0 %v970
  %v972 = vpop.xlane.xlu0 %971
  %v973 = vsel %vm462, %v804, 0.0
  %974 = vadd.xlane.f32.xlu0 %v973
  %v975 = vpop.xlane.xlu0 %974
  %v976 = vsel %vm462, %v806, 0.0
  %977 = vadd.xlane.f32.xlu0 %v976
  %v978 = vpop.xlane.xlu0 %977
  %v979 = vsel %vm462, %v808, 0.0
  %980 = vadd.xlane.f32.xlu0 %v979
  %v981 = vpop.xlane.xlu0 %980
  %v982 = vsel %vm462, %v810, 0.0
  %983 = vadd.xlane.f32.xlu0 %v982
  %v984 = vpop.xlane.xlu0 %983
  %v985 = vsel %vm462, %v812, 0.0
  %986 = vadd.xlane.f32.xlu0 %v985
  %v987 = vpop.xlane.xlu0 %986
  %v988 = vsel %vm462, %v814, 0.0
  %989 = vadd.xlane.f32.xlu0 %v988
  %v990 = vpop.xlane.xlu0 %989
  %v991 = vsel %vm462, %v816, 0.0
  %992 = vadd.xlane.f32.xlu0 %v991
  %v993 = vpop.xlane.xlu0 %992
  %v994 = vsel %vm462, %v818, 0.0
  %995 = vadd.xlane.f32.xlu0 %v994
  %v996 = vpop.xlane.xlu0 %995
  %v997 = vsel %vm462, %v820, 0.0
  %998 = vadd.xlane.f32.xlu0 %v997
  %v999 = vpop.xlane.xlu0 %998
  %v1000 = vsel %vm462, %v822, 0.0
  %1001 = vadd.xlane.f32.xlu0 %v1000
  %v1002 = vpop.xlane.xlu0 %1001
  %v1003 = vsel %vm462, %v824, 0.0
  %1004 = vadd.xlane.f32.xlu0 %v1003
  %v1005 = vpop.xlane.xlu0 %1004
  %v1006 = vsel %vm462, %v826, 0.0
  %1007 = vadd.xlane.f32.xlu0 %v1006
  %v1008 = vpop.xlane.xlu0 %1007
  %v1009 = vsel %vm462, %v828, 0.0
  %1010 = vadd.xlane.f32.xlu0 %v1009
  %v1011 = vpop.xlane.xlu0 %1010
  %v1012 = vsel %vm462, %v830, 0.0
  %1013 = vadd.xlane.f32.xlu0 %v1012
  %v1014 = vpop.xlane.xlu0 %1013
  %v1015 = vsel %vm462, %v832, 0.0
  %1016 = vadd.xlane.f32.xlu0 %v1015
  %v1017 = vpop.xlane.xlu0 %1016
  %v1018 = vsel %vm462, %v834, 0.0
  %1019 = vadd.xlane.f32.xlu0 %v1018
  %v1020 = vpop.xlane.xlu0 %1019
  %v1021 = vsel %vm462, %v836, 0.0
  %1022 = vadd.xlane.f32.xlu0 %v1021
  %v1023 = vpop.xlane.xlu0 %1022
  %v1024 = vsel %vm462, %v838, 0.0
  %1025 = vadd.xlane.f32.xlu0 %v1024
  %v1026 = vpop.xlane.xlu0 %1025
  %v1027 = vsel %vm462, %v840, 0.0
  %1028 = vadd.xlane.f32.xlu0 %v1027
  %v1029 = vpop.xlane.xlu0 %1028
  %v1030 = vsel %vm462, %v842, 0.0
  %1031 = vadd.xlane.f32.xlu0 %v1030
  %v1032 = vpop.xlane.xlu0 %1031
  %v1033 = vsel %vm462, %v844, 0.0
  %1034 = vadd.xlane.f32.xlu0 %v1033
  %v1035 = vpop.xlane.xlu0 %1034
  %v1036 = vsel %vm462, %v846, 0.0
  %1037 = vadd.xlane.f32.xlu0 %v1036
  %v1038 = vpop.xlane.xlu0 %1037
  %v1039 = vlog2.pop %v849
  %v1040 = vmul.f32 %v1039, 0.6931472
  %v1041 = vlog2.pop %v852
  %v1042 = vmul.f32 %v1041, 0.6931472
  %v1043 = vlog2.pop %v855
  %v1044 = vmul.f32 %v1043, 0.6931472
  %v1045 = vlog2.pop %v858
  %v1046 = vmul.f32 %v1045, 0.6931472
  %v1047 = vlog2.pop %v861
  %v1048 = vmul.f32 %v1047, 0.6931472
  %v1049 = vlog2.pop %v864
  %v1050 = vmul.f32 %v1049, 0.6931472
  %v1051 = vlog2.pop %v867
  %v1052 = vmul.f32 %v1051, 0.6931472
  %v1053 = vlog2.pop %v870
  %v1054 = vmul.f32 %v1053, 0.6931472
  %v1055 = vlog2.pop %v873
  %v1056 = vmul.f32 %v1055, 0.6931472
  %v1057 = vlog2.pop %v876
  %v1058 = vmul.f32 %v1057, 0.6931472
  %v1059 = vlog2.pop %v879
  %v1060 = vmul.f32 %v1059, 0.6931472
  %v1061 = vlog2.pop %v882
  %v1062 = vmul.f32 %v1061, 0.6931472
  %v1063 = vlog2.pop %v885
  %v1064 = vmul.f32 %v1063, 0.6931472
  %v1065 = vlog2.pop %v888
  %v1066 = vmul.f32 %v1065, 0.6931472
  %v1067 = vlog2.pop %v891
  %v1068 = vmul.f32 %v1067, 0.6931472
  %v1069 = vlog2.pop %v894
  %v1070 = vmul.f32 %v1069, 0.6931472
  %v1071 = vlog2.pop %v897
  %v1072 = vmul.f32 %v1071, 0.6931472
  %v1073 = vlog2.pop %v900
  %v1074 = vmul.f32 %v1073, 0.6931472
  %v1075 = vlog2.pop %v903
  %v1076 = vmul.f32 %v1075, 0.6931472
  %v1077 = vlog2.pop %v906
  %v1078 = vmul.f32 %v1077, 0.6931472
  %v1079 = vlog2.pop %v909
  %v1080 = vmul.f32 %v1079, 0.6931472
  %v1081 = vlog2.pop %v912
  %v1082 = vmul.f32 %v1081, 0.6931472
  %v1083 = vlog2.pop %v915
  %v1084 = vmul.f32 %v1083, 0.6931472
  %v1085 = vlog2.pop %v918
  %v1086 = vmul.f32 %v1085, 0.6931472
  %v1087 = vlog2.pop %v921
  %v1088 = vmul.f32 %v1087, 0.6931472
  %v1089 = vlog2.pop %v924
  %v1090 = vmul.f32 %v1089, 0.6931472
  %v1091 = vlog2.pop %v927
  %v1092 = vmul.f32 %v1091, 0.6931472
  %v1093 = vlog2.pop %v930
  %v1094 = vmul.f32 %v1093, 0.6931472
  %v1095 = vlog2.pop %v933
  %v1096 = vmul.f32 %v1095, 0.6931472
  %v1097 = vlog2.pop %v936
  %v1098 = vmul.f32 %v1097, 0.6931472
  %v1099 = vlog2.pop %v939
  %v1100 = vmul.f32 %v1099, 0.6931472
  %v1101 = vlog2.pop %v942
  %v1102 = vmul.f32 %v1101, 0.6931472
  %v1103 = vlog2.pop %v945
  %v1104 = vmul.f32 %v1103, 0.6931472
  %v1105 = vlog2.pop %v948
  %v1106 = vmul.f32 %v1105, 0.6931472
  %v1107 = vlog2.pop %v951
  %v1108 = vmul.f32 %v1107, 0.6931472
  %v1109 = vlog2.pop %v954
  %v1110 = vmul.f32 %v1109, 0.6931472
  %v1111 = vlog2.pop %v957
  %v1112 = vmul.f32 %v1111, 0.6931472
  %v1113 = vlog2.pop %v960
  %v1114 = vmul.f32 %v1113, 0.6931472
  %v1115 = vlog2.pop %v963
  %v1116 = vmul.f32 %v1115, 0.6931472
  %v1117 = vlog2.pop %v966
  %v1118 = vmul.f32 %v1117, 0.6931472
  %v1119 = vlog2.pop %v969
  %v1120 = vmul.f32 %v1119, 0.6931472
  %v1121 = vlog2.pop %v972
  %v1122 = vmul.f32 %v1121, 0.6931472
  %v1123 = vlog2.pop %v975
  %v1124 = vmul.f32 %v1123, 0.6931472
  %v1125 = vlog2.pop %v978
  %v1126 = vmul.f32 %v1125, 0.6931472
  %v1127 = vlog2.pop %v981
  %v1128 = vmul.f32 %v1127, 0.6931472
  %v1129 = vlog2.pop %v984
  %v1130 = vmul.f32 %v1129, 0.6931472
  %v1131 = vlog2.pop %v987
  %v1132 = vmul.f32 %v1131, 0.6931472
  %v1133 = vlog2.pop %v990
  %v1134 = vmul.f32 %v1133, 0.6931472
  %v1135 = vlog2.pop %v993
  %v1136 = vmul.f32 %v1135, 0.6931472
  %v1137 = vlog2.pop %v996
  %v1138 = vmul.f32 %v1137, 0.6931472
  %v1139 = vlog2.pop %v999
  %v1140 = vmul.f32 %v1139, 0.6931472
  %v1141 = vlog2.pop %v1002
  %v1142 = vmul.f32 %v1141, 0.6931472
  %v1143 = vlog2.pop %v1005
  %v1144 = vmul.f32 %v1143, 0.6931472
  %v1145 = vlog2.pop %v1008
  %v1146 = vmul.f32 %v1145, 0.6931472
  %v1147 = vlog2.pop %v1011
  %v1148 = vmul.f32 %v1147, 0.6931472
  %v1149 = vlog2.pop %v1014
  %v1150 = vmul.f32 %v1149, 0.6931472
  %v1151 = vlog2.pop %v1017
  %v1152 = vmul.f32 %v1151, 0.6931472
  %v1153 = vlog2.pop %v1020
  %v1154 = vmul.f32 %v1153, 0.6931472
  %v1155 = vlog2.pop %v1023
  %v1156 = vmul.f32 %v1155, 0.6931472
  %v1157 = vlog2.pop %v1026
  %v1158 = vmul.f32 %v1157, 0.6931472
  %v1159 = vlog2.pop %v1029
  %v1160 = vmul.f32 %v1159, 0.6931472
  %v1161 = vlog2.pop %v1032
  %v1162 = vmul.f32 %v1161, 0.6931472
  %v1163 = vlog2.pop %v1035
  %v1164 = vmul.f32 %v1163, 0.6931472
  %v1165 = vlog2.pop %v1038
  %v1166 = vmul.f32 %v1165, 0.6931472
  %v1167 = vadd.f32 %v465, %v1040
  %v1168 = vadd.f32 %v468, %v1042
  %v1169 = vadd.f32 %v471, %v1044
  %v1170 = vadd.f32 %v474, %v1046
  %v1171 = vadd.f32 %v477, %v1048
  %v1172 = vadd.f32 %v480, %v1050
  %v1173 = vadd.f32 %v483, %v1052
  %v1174 = vadd.f32 %v486, %v1054
  %v1175 = vadd.f32 %v489, %v1056
  %v1176 = vadd.f32 %v492, %v1058
  %v1177 = vadd.f32 %v495, %v1060
  %v1178 = vadd.f32 %v498, %v1062
  %v1179 = vadd.f32 %v501, %v1064
  %v1180 = vadd.f32 %v504, %v1066
  %v1181 = vadd.f32 %v507, %v1068
  %v1182 = vadd.f32 %v510, %v1070
  %v1183 = vadd.f32 %v513, %v1072
  %v1184 = vadd.f32 %v516, %v1074
  %v1185 = vadd.f32 %v519, %v1076
  %v1186 = vadd.f32 %v522, %v1078
  %v1187 = vadd.f32 %v525, %v1080
  %v1188 = vadd.f32 %v528, %v1082
  %v1189 = vadd.f32 %v531, %v1084
  %v1190 = vadd.f32 %v534, %v1086
  %v1191 = vadd.f32 %v537, %v1088
  %v1192 = vadd.f32 %v540, %v1090
  %v1193 = vadd.f32 %v543, %v1092
  %v1194 = vadd.f32 %v546, %v1094
  %v1195 = vadd.f32 %v549, %v1096
  %v1196 = vadd.f32 %v552, %v1098
  %v1197 = vadd.f32 %v555, %v1100
  %v1198 = vadd.f32 %v558, %v1102
  %v1199 = vadd.f32 %v561, %v1104
  %v1200 = vadd.f32 %v564, %v1106
  %v1201 = vadd.f32 %v567, %v1108
  %v1202 = vadd.f32 %v570, %v1110
  %v1203 = vadd.f32 %v573, %v1112
  %v1204 = vadd.f32 %v576, %v1114
  %v1205 = vadd.f32 %v579, %v1116
  %v1206 = vadd.f32 %v582, %v1118
  %v1207 = vadd.f32 %v585, %v1120
  %v1208 = vadd.f32 %v588, %v1122
  %v1209 = vadd.f32 %v591, %v1124
  %v1210 = vadd.f32 %v594, %v1126
  %v1211 = vadd.f32 %v597, %v1128
  %v1212 = vadd.f32 %v600, %v1130
  %v1213 = vadd.f32 %v603, %v1132
  %v1214 = vadd.f32 %v606, %v1134
  %v1215 = vadd.f32 %v609, %v1136
  %v1216 = vadd.f32 %v612, %v1138
  %v1217 = vadd.f32 %v615, %v1140
  %v1218 = vadd.f32 %v618, %v1142
  %v1219 = vadd.f32 %v621, %v1144
  %v1220 = vadd.f32 %v624, %v1146
  %v1221 = vadd.f32 %v627, %v1148
  %v1222 = vadd.f32 %v630, %v1150
  %v1223 = vadd.f32 %v633, %v1152
  %v1224 = vadd.f32 %v636, %v1154
  %v1225 = vadd.f32 %v639, %v1156
  %v1226 = vadd.f32 %v642, %v1158
  %v1227 = vadd.f32 %v645, %v1160
  %v1228 = vadd.f32 %v648, %v1162
  %v1229 = vadd.f32 %v651, %v1164
  %v1230 = vadd.f32 %v654, %v1166
  %v1231 = vlaneseq
  %v1232 = vand.u32 %v1231, 127
  %1233 = vset.pattern.permute.xlu0 0
  %1234 = vperm.xlu0 %1233, %v75
  %v1235 = vpop.permute.xlu0 %1234
  %1236 = vset.pattern.permute.xlu0 0
  %1237 = vperm.xlu0 %1236, %v76
  %v1238 = vpop.permute.xlu0 %1237
  %1239 = vset.pattern.permute.xlu0 0
  %1240 = vperm.xlu0 %1239, %v77
  %v1241 = vpop.permute.xlu0 %1240
  %1242 = vset.pattern.permute.xlu0 0
  %1243 = vperm.xlu0 %1242, %v78
  %v1244 = vpop.permute.xlu0 %1243
  %1245 = vset.pattern.permute.xlu0 0
  %1246 = vperm.xlu0 %1245, %v79
  %v1247 = vpop.permute.xlu0 %1246
  %1248 = vset.pattern.permute.xlu0 0
  %1249 = vperm.xlu0 %1248, %v80
  %v1250 = vpop.permute.xlu0 %1249
  %1251 = vset.pattern.permute.xlu0 0
  %1252 = vperm.xlu0 %1251, %v81
  %v1253 = vpop.permute.xlu0 %1252
  %1254 = vset.pattern.permute.xlu0 0
  %1255 = vperm.xlu0 %1254, %v82
  %v1256 = vpop.permute.xlu0 %1255
  %1257 = vset.pattern.permute.xlu0 0
  %1258 = vperm.xlu0 %1257, %v83
  %v1259 = vpop.permute.xlu0 %1258
  %1260 = vset.pattern.permute.xlu0 0
  %1261 = vperm.xlu0 %1260, %v84
  %v1262 = vpop.permute.xlu0 %1261
  %1263 = vset.pattern.permute.xlu0 0
  %1264 = vperm.xlu0 %1263, %v85
  %v1265 = vpop.permute.xlu0 %1264
  %1266 = vset.pattern.permute.xlu0 0
  %1267 = vperm.xlu0 %1266, %v86
  %v1268 = vpop.permute.xlu0 %1267
  %1269 = vset.pattern.permute.xlu0 0
  %1270 = vperm.xlu0 %1269, %v87
  %v1271 = vpop.permute.xlu0 %1270
  %1272 = vset.pattern.permute.xlu0 0
  %1273 = vperm.xlu0 %1272, %v88
  %v1274 = vpop.permute.xlu0 %1273
  %1275 = vset.pattern.permute.xlu0 0
  %1276 = vperm.xlu0 %1275, %v89
  %v1277 = vpop.permute.xlu0 %1276
  %1278 = vset.pattern.permute.xlu0 0
  %1279 = vperm.xlu0 %1278, %v90
  %v1280 = vpop.permute.xlu0 %1279
  %1281 = vset.pattern.permute.xlu0 0
  %1282 = vperm.xlu0 %1281, %v91
  %v1283 = vpop.permute.xlu0 %1282
  %1284 = vset.pattern.permute.xlu0 0
  %1285 = vperm.xlu0 %1284, %v92
  %v1286 = vpop.permute.xlu0 %1285
  %1287 = vset.pattern.permute.xlu0 0
  %1288 = vperm.xlu0 %1287, %v93
  %v1289 = vpop.permute.xlu0 %1288
  %1290 = vset.pattern.permute.xlu0 0
  %1291 = vperm.xlu0 %1290, %v94
  %v1292 = vpop.permute.xlu0 %1291
  %1293 = vset.pattern.permute.xlu0 0
  %1294 = vperm.xlu0 %1293, %v95
  %v1295 = vpop.permute.xlu0 %1294
  %1296 = vset.pattern.permute.xlu0 0
  %1297 = vperm.xlu0 %1296, %v96
  %v1298 = vpop.permute.xlu0 %1297
  %1299 = vset.pattern.permute.xlu0 0
  %1300 = vperm.xlu0 %1299, %v97
  %v1301 = vpop.permute.xlu0 %1300
  %1302 = vset.pattern.permute.xlu0 0
  %1303 = vperm.xlu0 %1302, %v98
  %v1304 = vpop.permute.xlu0 %1303
  %1305 = vset.pattern.permute.xlu0 0
  %1306 = vperm.xlu0 %1305, %v99
  %v1307 = vpop.permute.xlu0 %1306
  %1308 = vset.pattern.permute.xlu0 0
  %1309 = vperm.xlu0 %1308, %v100
  %v1310 = vpop.permute.xlu0 %1309
  %1311 = vset.pattern.permute.xlu0 0
  %1312 = vperm.xlu0 %1311, %v101
  %v1313 = vpop.permute.xlu0 %1312
  %1314 = vset.pattern.permute.xlu0 0
  %1315 = vperm.xlu0 %1314, %v102
  %v1316 = vpop.permute.xlu0 %1315
  %1317 = vset.pattern.permute.xlu0 0
  %1318 = vperm.xlu0 %1317, %v103
  %v1319 = vpop.permute.xlu0 %1318
  %1320 = vset.pattern.permute.xlu0 0
  %1321 = vperm.xlu0 %1320, %v104
  %v1322 = vpop.permute.xlu0 %1321
  %1323 = vset.pattern.permute.xlu0 0
  %1324 = vperm.xlu0 %1323, %v105
  %v1325 = vpop.permute.xlu0 %1324
  %1326 = vset.pattern.permute.xlu0 0
  %1327 = vperm.xlu0 %1326, %v106
  %v1328 = vpop.permute.xlu0 %1327
  %1329 = vset.pattern.permute.xlu0 0
  %1330 = vperm.xlu0 %1329, %v107
  %v1331 = vpop.permute.xlu0 %1330
  %1332 = vset.pattern.permute.xlu0 0
  %1333 = vperm.xlu0 %1332, %v108
  %v1334 = vpop.permute.xlu0 %1333
  %1335 = vset.pattern.permute.xlu0 0
  %1336 = vperm.xlu0 %1335, %v109
  %v1337 = vpop.permute.xlu0 %1336
  %1338 = vset.pattern.permute.xlu0 0
  %1339 = vperm.xlu0 %1338, %v110
  %v1340 = vpop.permute.xlu0 %1339
  %1341 = vset.pattern.permute.xlu0 0
  %1342 = vperm.xlu0 %1341, %v111
  %v1343 = vpop.permute.xlu0 %1342
  %1344 = vset.pattern.permute.xlu0 0
  %1345 = vperm.xlu0 %1344, %v112
  %v1346 = vpop.permute.xlu0 %1345
  %1347 = vset.pattern.permute.xlu0 0
  %1348 = vperm.xlu0 %1347, %v113
  %v1349 = vpop.permute.xlu0 %1348
  %1350 = vset.pattern.permute.xlu0 0
  %1351 = vperm.xlu0 %1350, %v114
  %v1352 = vpop.permute.xlu0 %1351
  %1353 = vset.pattern.permute.xlu0 0
  %1354 = vperm.xlu0 %1353, %v115
  %v1355 = vpop.permute.xlu0 %1354
  %1356 = vset.pattern.permute.xlu0 0
  %1357 = vperm.xlu0 %1356, %v116
  %v1358 = vpop.permute.xlu0 %1357
  %1359 = vset.pattern.permute.xlu0 0
  %1360 = vperm.xlu0 %1359, %v117
  %v1361 = vpop.permute.xlu0 %1360
  %1362 = vset.pattern.permute.xlu0 0
  %1363 = vperm.xlu0 %1362, %v118
  %v1364 = vpop.permute.xlu0 %1363
  %1365 = vset.pattern.permute.xlu0 0
  %1366 = vperm.xlu0 %1365, %v119
  %v1367 = vpop.permute.xlu0 %1366
  %1368 = vset.pattern.permute.xlu0 0
  %1369 = vperm.xlu0 %1368, %v120
  %v1370 = vpop.permute.xlu0 %1369
  %1371 = vset.pattern.permute.xlu0 0
  %1372 = vperm.xlu0 %1371, %v121
  %v1373 = vpop.permute.xlu0 %1372
  %1374 = vset.pattern.permute.xlu0 0
  %1375 = vperm.xlu0 %1374, %v122
  %v1376 = vpop.permute.xlu0 %1375
  %1377 = vset.pattern.permute.xlu0 0
  %1378 = vperm.xlu0 %1377, %v123
  %v1379 = vpop.permute.xlu0 %1378
  %1380 = vset.pattern.permute.xlu0 0
  %1381 = vperm.xlu0 %1380, %v124
  %v1382 = vpop.permute.xlu0 %1381
  %1383 = vset.pattern.permute.xlu0 0
  %1384 = vperm.xlu0 %1383, %v125
  %v1385 = vpop.permute.xlu0 %1384
  %1386 = vset.pattern.permute.xlu0 0
  %1387 = vperm.xlu0 %1386, %v126
  %v1388 = vpop.permute.xlu0 %1387
  %1389 = vset.pattern.permute.xlu0 0
  %1390 = vperm.xlu0 %1389, %v127
  %v1391 = vpop.permute.xlu0 %1390
  %1392 = vset.pattern.permute.xlu0 0
  %1393 = vperm.xlu0 %1392, %v128
  %v1394 = vpop.permute.xlu0 %1393
  %1395 = vset.pattern.permute.xlu0 0
  %1396 = vperm.xlu0 %1395, %v129
  %v1397 = vpop.permute.xlu0 %1396
  %1398 = vset.pattern.permute.xlu0 0
  %1399 = vperm.xlu0 %1398, %v130
  %v1400 = vpop.permute.xlu0 %1399
  %1401 = vset.pattern.permute.xlu0 0
  %1402 = vperm.xlu0 %1401, %v131
  %v1403 = vpop.permute.xlu0 %1402
  %1404 = vset.pattern.permute.xlu0 0
  %1405 = vperm.xlu0 %1404, %v132
  %v1406 = vpop.permute.xlu0 %1405
  %1407 = vset.pattern.permute.xlu0 0
  %1408 = vperm.xlu0 %1407, %v133
  %v1409 = vpop.permute.xlu0 %1408
  %1410 = vset.pattern.permute.xlu0 0
  %1411 = vperm.xlu0 %1410, %v134
  %v1412 = vpop.permute.xlu0 %1411
  %1413 = vset.pattern.permute.xlu0 0
  %1414 = vperm.xlu0 %1413, %v135
  %v1415 = vpop.permute.xlu0 %1414
  %1416 = vset.pattern.permute.xlu0 0
  %1417 = vperm.xlu0 %1416, %v136
  %v1418 = vpop.permute.xlu0 %1417
  %1419 = vset.pattern.permute.xlu0 0
  %1420 = vperm.xlu0 %1419, %v137
  %v1421 = vpop.permute.xlu0 %1420
  %1422 = vset.pattern.permute.xlu0 0
  %1423 = vperm.xlu0 %1422, %v138
  %v1424 = vpop.permute.xlu0 %1423
  %vm1425 = vcmp.eq.s32.totalorder %v1232, %v1235
  %vm1426 = vcmp.eq.s32.totalorder %v1232, %v1238
  %vm1427 = vcmp.eq.s32.totalorder %v1232, %v1241
  %vm1428 = vcmp.eq.s32.totalorder %v1232, %v1244
  %vm1429 = vcmp.eq.s32.totalorder %v1232, %v1247
  %vm1430 = vcmp.eq.s32.totalorder %v1232, %v1250
  %vm1431 = vcmp.eq.s32.totalorder %v1232, %v1253
  %vm1432 = vcmp.eq.s32.totalorder %v1232, %v1256
  %vm1433 = vcmp.eq.s32.totalorder %v1232, %v1259
  %vm1434 = vcmp.eq.s32.totalorder %v1232, %v1262
  %vm1435 = vcmp.eq.s32.totalorder %v1232, %v1265
  %vm1436 = vcmp.eq.s32.totalorder %v1232, %v1268
  %vm1437 = vcmp.eq.s32.totalorder %v1232, %v1271
  %vm1438 = vcmp.eq.s32.totalorder %v1232, %v1274
  %vm1439 = vcmp.eq.s32.totalorder %v1232, %v1277
  %vm1440 = vcmp.eq.s32.totalorder %v1232, %v1280
  %vm1441 = vcmp.eq.s32.totalorder %v1232, %v1283
  %vm1442 = vcmp.eq.s32.totalorder %v1232, %v1286
  %vm1443 = vcmp.eq.s32.totalorder %v1232, %v1289
  %vm1444 = vcmp.eq.s32.totalorder %v1232, %v1292
  %vm1445 = vcmp.eq.s32.totalorder %v1232, %v1295
  %vm1446 = vcmp.eq.s32.totalorder %v1232, %v1298
  %vm1447 = vcmp.eq.s32.totalorder %v1232, %v1301
  %vm1448 = vcmp.eq.s32.totalorder %v1232, %v1304
  %vm1449 = vcmp.eq.s32.totalorder %v1232, %v1307
  %vm1450 = vcmp.eq.s32.totalorder %v1232, %v1310
  %vm1451 = vcmp.eq.s32.totalorder %v1232, %v1313
  %vm1452 = vcmp.eq.s32.totalorder %v1232, %v1316
  %vm1453 = vcmp.eq.s32.totalorder %v1232, %v1319
  %vm1454 = vcmp.eq.s32.totalorder %v1232, %v1322
  %vm1455 = vcmp.eq.s32.totalorder %v1232, %v1325
  %vm1456 = vcmp.eq.s32.totalorder %v1232, %v1328
  %vm1457 = vcmp.eq.s32.totalorder %v1232, %v1331
  %vm1458 = vcmp.eq.s32.totalorder %v1232, %v1334
  %vm1459 = vcmp.eq.s32.totalorder %v1232, %v1337
  %vm1460 = vcmp.eq.s32.totalorder %v1232, %v1340
  %vm1461 = vcmp.eq.s32.totalorder %v1232, %v1343
  %vm1462 = vcmp.eq.s32.totalorder %v1232, %v1346
  %vm1463 = vcmp.eq.s32.totalorder %v1232, %v1349
  %vm1464 = vcmp.eq.s32.totalorder %v1232, %v1352
  %vm1465 = vcmp.eq.s32.totalorder %v1232, %v1355
  %vm1466 = vcmp.eq.s32.totalorder %v1232, %v1358
  %vm1467 = vcmp.eq.s32.totalorder %v1232, %v1361
  %vm1468 = vcmp.eq.s32.totalorder %v1232, %v1364
  %vm1469 = vcmp.eq.s32.totalorder %v1232, %v1367
  %vm1470 = vcmp.eq.s32.totalorder %v1232, %v1370
  %vm1471 = vcmp.eq.s32.totalorder %v1232, %v1373
  %vm1472 = vcmp.eq.s32.totalorder %v1232, %v1376
  %vm1473 = vcmp.eq.s32.totalorder %v1232, %v1379
  %vm1474 = vcmp.eq.s32.totalorder %v1232, %v1382
  %vm1475 = vcmp.eq.s32.totalorder %v1232, %v1385
  %vm1476 = vcmp.eq.s32.totalorder %v1232, %v1388
  %vm1477 = vcmp.eq.s32.totalorder %v1232, %v1391
  %vm1478 = vcmp.eq.s32.totalorder %v1232, %v1394
  %vm1479 = vcmp.eq.s32.totalorder %v1232, %v1397
  %vm1480 = vcmp.eq.s32.totalorder %v1232, %v1400
  %vm1481 = vcmp.eq.s32.totalorder %v1232, %v1403
  %vm1482 = vcmp.eq.s32.totalorder %v1232, %v1406
  %vm1483 = vcmp.eq.s32.totalorder %v1232, %v1409
  %vm1484 = vcmp.eq.s32.totalorder %v1232, %v1412
  %vm1485 = vcmp.eq.s32.totalorder %v1232, %v1415
  %vm1486 = vcmp.eq.s32.totalorder %v1232, %v1418
  %vm1487 = vcmp.eq.s32.totalorder %v1232, %v1421
  %vm1488 = vcmp.eq.s32.totalorder %v1232, %v1424
  %v1489 = vsel %vm1425, %v11, 0.0
  %v1490 = vsel %vm1426, %v12, 0.0
  %v1491 = vsel %vm1427, %v13, 0.0
  %v1492 = vsel %vm1428, %v14, 0.0
  %v1493 = vsel %vm1429, %v15, 0.0
  %v1494 = vsel %vm1430, %v16, 0.0
  %v1495 = vsel %vm1431, %v17, 0.0
  %v1496 = vsel %vm1432, %v18, 0.0
  %v1497 = vsel %vm1433, %v19, 0.0
  %v1498 = vsel %vm1434, %v20, 0.0
  %v1499 = vsel %vm1435, %v21, 0.0
  %v1500 = vsel %vm1436, %v22, 0.0
  %v1501 = vsel %vm1437, %v23, 0.0
  %v1502 = vsel %vm1438, %v24, 0.0
  %v1503 = vsel %vm1439, %v25, 0.0
  %v1504 = vsel %vm1440, %v26, 0.0
  %v1505 = vsel %vm1441, %v27, 0.0
  %v1506 = vsel %vm1442, %v28, 0.0
  %v1507 = vsel %vm1443, %v29, 0.0
  %v1508 = vsel %vm1444, %v30, 0.0
  %v1509 = vsel %vm1445, %v31, 0.0
  %v1510 = vsel %vm1446, %v32, 0.0
  %v1511 = vsel %vm1447, %v33, 0.0
  %v1512 = vsel %vm1448, %v34, 0.0
  %v1513 = vsel %vm1449, %v35, 0.0
  %v1514 = vsel %vm1450, %v36, 0.0
  %v1515 = vsel %vm1451, %v37, 0.0
  %v1516 = vsel %vm1452, %v38, 0.0
  %v1517 = vsel %vm1453, %v39, 0.0
  %v1518 = vsel %vm1454, %v40, 0.0
  %v1519 = vsel %vm1455, %v41, 0.0
  %v1520 = vsel %vm1456, %v42, 0.0
  %v1521 = vsel %vm1457, %v43, 0.0
  %v1522 = vsel %vm1458, %v44, 0.0
  %v1523 = vsel %vm1459, %v45, 0.0
  %v1524 = vsel %vm1460, %v46, 0.0
  %v1525 = vsel %vm1461, %v47, 0.0
  %v1526 = vsel %vm1462, %v48, 0.0
  %v1527 = vsel %vm1463, %v49, 0.0
  %v1528 = vsel %vm1464, %v50, 0.0
  %v1529 = vsel %vm1465, %v51, 0.0
  %v1530 = vsel %vm1466, %v52, 0.0
  %v1531 = vsel %vm1467, %v53, 0.0
  %v1532 = vsel %vm1468, %v54, 0.0
  %v1533 = vsel %vm1469, %v55, 0.0
  %v1534 = vsel %vm1470, %v56, 0.0
  %v1535 = vsel %vm1471, %v57, 0.0
  %v1536 = vsel %vm1472, %v58, 0.0
  %v1537 = vsel %vm1473, %v59, 0.0
  %v1538 = vsel %vm1474, %v60, 0.0
  %v1539 = vsel %vm1475, %v61, 0.0
  %v1540 = vsel %vm1476, %v62, 0.0
  %v1541 = vsel %vm1477, %v63, 0.0
  %v1542 = vsel %vm1478, %v64, 0.0
  %v1543 = vsel %vm1479, %v65, 0.0
  %v1544 = vsel %vm1480, %v66, 0.0
  %v1545 = vsel %vm1481, %v67, 0.0
  %v1546 = vsel %vm1482, %v68, 0.0
  %v1547 = vsel %vm1483, %v69, 0.0
  %v1548 = vsel %vm1484, %v70, 0.0
  %v1549 = vsel %vm1485, %v71, 0.0
  %v1550 = vsel %vm1486, %v72, 0.0
  %v1551 = vsel %vm1487, %v73, 0.0
  %v1552 = vsel %vm1488, %v74, 0.0
  %v1553 = vsel %vm462, %v1489, 0.0
  %1554 = vadd.xlane.f32.xlu0 %v1553
  %v1555 = vpop.xlane.xlu0 %1554
  %v1556 = vsel %vm462, %v1490, 0.0
  %1557 = vadd.xlane.f32.xlu0 %v1556
  %v1558 = vpop.xlane.xlu0 %1557
  %v1559 = vsel %vm462, %v1491, 0.0
  %1560 = vadd.xlane.f32.xlu0 %v1559
  %v1561 = vpop.xlane.xlu0 %1560
  %v1562 = vsel %vm462, %v1492, 0.0
  %1563 = vadd.xlane.f32.xlu0 %v1562
  %v1564 = vpop.xlane.xlu0 %1563
  %v1565 = vsel %vm462, %v1493, 0.0
  %1566 = vadd.xlane.f32.xlu0 %v1565
  %v1567 = vpop.xlane.xlu0 %1566
  %v1568 = vsel %vm462, %v1494, 0.0
  %1569 = vadd.xlane.f32.xlu0 %v1568
  %v1570 = vpop.xlane.xlu0 %1569
  %v1571 = vsel %vm462, %v1495, 0.0
  %1572 = vadd.xlane.f32.xlu0 %v1571
  %v1573 = vpop.xlane.xlu0 %1572
  %v1574 = vsel %vm462, %v1496, 0.0
  %1575 = vadd.xlane.f32.xlu0 %v1574
  %v1576 = vpop.xlane.xlu0 %1575
  %v1577 = vsel %vm462, %v1497, 0.0
  %1578 = vadd.xlane.f32.xlu0 %v1577
  %v1579 = vpop.xlane.xlu0 %1578
  %v1580 = vsel %vm462, %v1498, 0.0
  %1581 = vadd.xlane.f32.xlu0 %v1580
  %v1582 = vpop.xlane.xlu0 %1581
  %v1583 = vsel %vm462, %v1499, 0.0
  %1584 = vadd.xlane.f32.xlu0 %v1583
  %v1585 = vpop.xlane.xlu0 %1584
  %v1586 = vsel %vm462, %v1500, 0.0
  %1587 = vadd.xlane.f32.xlu0 %v1586
  %v1588 = vpop.xlane.xlu0 %1587
  %v1589 = vsel %vm462, %v1501, 0.0
  %1590 = vadd.xlane.f32.xlu0 %v1589
  %v1591 = vpop.xlane.xlu0 %1590
  %v1592 = vsel %vm462, %v1502, 0.0
  %1593 = vadd.xlane.f32.xlu0 %v1592
  %v1594 = vpop.xlane.xlu0 %1593
  %v1595 = vsel %vm462, %v1503, 0.0
  %1596 = vadd.xlane.f32.xlu0 %v1595
  %v1597 = vpop.xlane.xlu0 %1596
  %v1598 = vsel %vm462, %v1504, 0.0
  %1599 = vadd.xlane.f32.xlu0 %v1598
  %v1600 = vpop.xlane.xlu0 %1599
  %v1601 = vsel %vm462, %v1505, 0.0
  %1602 = vadd.xlane.f32.xlu0 %v1601
  %v1603 = vpop.xlane.xlu0 %1602
  %v1604 = vsel %vm462, %v1506, 0.0
  %1605 = vadd.xlane.f32.xlu0 %v1604
  %v1606 = vpop.xlane.xlu0 %1605
  %v1607 = vsel %vm462, %v1507, 0.0
  %1608 = vadd.xlane.f32.xlu0 %v1607
  %v1609 = vpop.xlane.xlu0 %1608
  %v1610 = vsel %vm462, %v1508, 0.0
  %1611 = vadd.xlane.f32.xlu0 %v1610
  %v1612 = vpop.xlane.xlu0 %1611
  %v1613 = vsel %vm462, %v1509, 0.0
  %1614 = vadd.xlane.f32.xlu0 %v1613
  %v1615 = vpop.xlane.xlu0 %1614
  %v1616 = vsel %vm462, %v1510, 0.0
  %1617 = vadd.xlane.f32.xlu0 %v1616
  %v1618 = vpop.xlane.xlu0 %1617
  %v1619 = vsel %vm462, %v1511, 0.0
  %1620 = vadd.xlane.f32.xlu0 %v1619
  %v1621 = vpop.xlane.xlu0 %1620
  %v1622 = vsel %vm462, %v1512, 0.0
  %1623 = vadd.xlane.f32.xlu0 %v1622
  %v1624 = vpop.xlane.xlu0 %1623
  %v1625 = vsel %vm462, %v1513, 0.0
  %1626 = vadd.xlane.f32.xlu0 %v1625
  %v1627 = vpop.xlane.xlu0 %1626
  %v1628 = vsel %vm462, %v1514, 0.0
  %1629 = vadd.xlane.f32.xlu0 %v1628
  %v1630 = vpop.xlane.xlu0 %1629
  %v1631 = vsel %vm462, %v1515, 0.0
  %1632 = vadd.xlane.f32.xlu0 %v1631
  %v1633 = vpop.xlane.xlu0 %1632
  %v1634 = vsel %vm462, %v1516, 0.0
  %1635 = vadd.xlane.f32.xlu0 %v1634
  %v1636 = vpop.xlane.xlu0 %1635
  %v1637 = vsel %vm462, %v1517, 0.0
  %1638 = vadd.xlane.f32.xlu0 %v1637
  %v1639 = vpop.xlane.xlu0 %1638
  %v1640 = vsel %vm462, %v1518, 0.0
  %1641 = vadd.xlane.f32.xlu0 %v1640
  %v1642 = vpop.xlane.xlu0 %1641
  %v1643 = vsel %vm462, %v1519, 0.0
  %1644 = vadd.xlane.f32.xlu0 %v1643
  %v1645 = vpop.xlane.xlu0 %1644
  %v1646 = vsel %vm462, %v1520, 0.0
  %1647 = vadd.xlane.f32.xlu0 %v1646
  %v1648 = vpop.xlane.xlu0 %1647
  %v1649 = vsel %vm462, %v1521, 0.0
  %1650 = vadd.xlane.f32.xlu0 %v1649
  %v1651 = vpop.xlane.xlu0 %1650
  %v1652 = vsel %vm462, %v1522, 0.0
  %1653 = vadd.xlane.f32.xlu0 %v1652
  %v1654 = vpop.xlane.xlu0 %1653
  %v1655 = vsel %vm462, %v1523, 0.0
  %1656 = vadd.xlane.f32.xlu0 %v1655
  %v1657 = vpop.xlane.xlu0 %1656
  %v1658 = vsel %vm462, %v1524, 0.0
  %1659 = vadd.xlane.f32.xlu0 %v1658
  %v1660 = vpop.xlane.xlu0 %1659
  %v1661 = vsel %vm462, %v1525, 0.0
  %1662 = vadd.xlane.f32.xlu0 %v1661
  %v1663 = vpop.xlane.xlu0 %1662
  %v1664 = vsel %vm462, %v1526, 0.0
  %1665 = vadd.xlane.f32.xlu0 %v1664
  %v1666 = vpop.xlane.xlu0 %1665
  %v1667 = vsel %vm462, %v1527, 0.0
  %1668 = vadd.xlane.f32.xlu0 %v1667
  %v1669 = vpop.xlane.xlu0 %1668
  %v1670 = vsel %vm462, %v1528, 0.0
  %1671 = vadd.xlane.f32.xlu0 %v1670
  %v1672 = vpop.xlane.xlu0 %1671
  %v1673 = vsel %vm462, %v1529, 0.0
  %1674 = vadd.xlane.f32.xlu0 %v1673
  %v1675 = vpop.xlane.xlu0 %1674
  %v1676 = vsel %vm462, %v1530, 0.0
  %1677 = vadd.xlane.f32.xlu0 %v1676
  %v1678 = vpop.xlane.xlu0 %1677
  %v1679 = vsel %vm462, %v1531, 0.0
  %1680 = vadd.xlane.f32.xlu0 %v1679
  %v1681 = vpop.xlane.xlu0 %1680
  %v1682 = vsel %vm462, %v1532, 0.0
  %1683 = vadd.xlane.f32.xlu0 %v1682
  %v1684 = vpop.xlane.xlu0 %1683
  %v1685 = vsel %vm462, %v1533, 0.0
  %1686 = vadd.xlane.f32.xlu0 %v1685
  %v1687 = vpop.xlane.xlu0 %1686
  %v1688 = vsel %vm462, %v1534, 0.0
  %1689 = vadd.xlane.f32.xlu0 %v1688
  %v1690 = vpop.xlane.xlu0 %1689
  %v1691 = vsel %vm462, %v1535, 0.0
  %1692 = vadd.xlane.f32.xlu0 %v1691
  %v1693 = vpop.xlane.xlu0 %1692
  %v1694 = vsel %vm462, %v1536, 0.0
  %1695 = vadd.xlane.f32.xlu0 %v1694
  %v1696 = vpop.xlane.xlu0 %1695
  %v1697 = vsel %vm462, %v1537, 0.0
  %1698 = vadd.xlane.f32.xlu0 %v1697
  %v1699 = vpop.xlane.xlu0 %1698
  %v1700 = vsel %vm462, %v1538, 0.0
  %1701 = vadd.xlane.f32.xlu0 %v1700
  %v1702 = vpop.xlane.xlu0 %1701
  %v1703 = vsel %vm462, %v1539, 0.0
  %1704 = vadd.xlane.f32.xlu0 %v1703
  %v1705 = vpop.xlane.xlu0 %1704
  %v1706 = vsel %vm462, %v1540, 0.0
  %1707 = vadd.xlane.f32.xlu0 %v1706
  %v1708 = vpop.xlane.xlu0 %1707
  %v1709 = vsel %vm462, %v1541, 0.0
  %1710 = vadd.xlane.f32.xlu0 %v1709
  %v1711 = vpop.xlane.xlu0 %1710
  %v1712 = vsel %vm462, %v1542, 0.0
  %1713 = vadd.xlane.f32.xlu0 %v1712
  %v1714 = vpop.xlane.xlu0 %1713
  %v1715 = vsel %vm462, %v1543, 0.0
  %1716 = vadd.xlane.f32.xlu0 %v1715
  %v1717 = vpop.xlane.xlu0 %1716
  %v1718 = vsel %vm462, %v1544, 0.0
  %1719 = vadd.xlane.f32.xlu0 %v1718
  %v1720 = vpop.xlane.xlu0 %1719
  %v1721 = vsel %vm462, %v1545, 0.0
  %1722 = vadd.xlane.f32.xlu0 %v1721
  %v1723 = vpop.xlane.xlu0 %1722
  %v1724 = vsel %vm462, %v1546, 0.0
  %1725 = vadd.xlane.f32.xlu0 %v1724
  %v1726 = vpop.xlane.xlu0 %1725
  %v1727 = vsel %vm462, %v1547, 0.0
  %1728 = vadd.xlane.f32.xlu0 %v1727
  %v1729 = vpop.xlane.xlu0 %1728
  %v1730 = vsel %vm462, %v1548, 0.0
  %1731 = vadd.xlane.f32.xlu0 %v1730
  %v1732 = vpop.xlane.xlu0 %1731
  %v1733 = vsel %vm462, %v1549, 0.0
  %1734 = vadd.xlane.f32.xlu0 %v1733
  %v1735 = vpop.xlane.xlu0 %1734
  %v1736 = vsel %vm462, %v1550, 0.0
  %1737 = vadd.xlane.f32.xlu0 %v1736
  %v1738 = vpop.xlane.xlu0 %1737
  %v1739 = vsel %vm462, %v1551, 0.0
  %1740 = vadd.xlane.f32.xlu0 %v1739
  %v1741 = vpop.xlane.xlu0 %1740
  %v1742 = vsel %vm462, %v1552, 0.0
  %1743 = vadd.xlane.f32.xlu0 %v1742
  %v1744 = vpop.xlane.xlu0 %1743
  %v1745 = vsub.f32 %v1167, %v1555
  %v1746 = vsub.f32 %v1168, %v1558
  %v1747 = vsub.f32 %v1169, %v1561
  %v1748 = vsub.f32 %v1170, %v1564
  %v1749 = vsub.f32 %v1171, %v1567
  %v1750 = vsub.f32 %v1172, %v1570
  %v1751 = vsub.f32 %v1173, %v1573
  %v1752 = vsub.f32 %v1174, %v1576
  %v1753 = vsub.f32 %v1175, %v1579
  %v1754 = vsub.f32 %v1176, %v1582
  %v1755 = vsub.f32 %v1177, %v1585
  %v1756 = vsub.f32 %v1178, %v1588
  %v1757 = vsub.f32 %v1179, %v1591
  %v1758 = vsub.f32 %v1180, %v1594
  %v1759 = vsub.f32 %v1181, %v1597
  %v1760 = vsub.f32 %v1182, %v1600
  %v1761 = vsub.f32 %v1183, %v1603
  %v1762 = vsub.f32 %v1184, %v1606
  %v1763 = vsub.f32 %v1185, %v1609
  %v1764 = vsub.f32 %v1186, %v1612
  %v1765 = vsub.f32 %v1187, %v1615
  %v1766 = vsub.f32 %v1188, %v1618
  %v1767 = vsub.f32 %v1189, %v1621
  %v1768 = vsub.f32 %v1190, %v1624
  %v1769 = vsub.f32 %v1191, %v1627
  %v1770 = vsub.f32 %v1192, %v1630
  %v1771 = vsub.f32 %v1193, %v1633
  %v1772 = vsub.f32 %v1194, %v1636
  %v1773 = vsub.f32 %v1195, %v1639
  %v1774 = vsub.f32 %v1196, %v1642
  %v1775 = vsub.f32 %v1197, %v1645
  %v1776 = vsub.f32 %v1198, %v1648
  %v1777 = vsub.f32 %v1199, %v1651
  %v1778 = vsub.f32 %v1200, %v1654
  %v1779 = vsub.f32 %v1201, %v1657
  %v1780 = vsub.f32 %v1202, %v1660
  %v1781 = vsub.f32 %v1203, %v1663
  %v1782 = vsub.f32 %v1204, %v1666
  %v1783 = vsub.f32 %v1205, %v1669
  %v1784 = vsub.f32 %v1206, %v1672
  %v1785 = vsub.f32 %v1207, %v1675
  %v1786 = vsub.f32 %v1208, %v1678
  %v1787 = vsub.f32 %v1209, %v1681
  %v1788 = vsub.f32 %v1210, %v1684
  %v1789 = vsub.f32 %v1211, %v1687
  %v1790 = vsub.f32 %v1212, %v1690
  %v1791 = vsub.f32 %v1213, %v1693
  %v1792 = vsub.f32 %v1214, %v1696
  %v1793 = vsub.f32 %v1215, %v1699
  %v1794 = vsub.f32 %v1216, %v1702
  %v1795 = vsub.f32 %v1217, %v1705
  %v1796 = vsub.f32 %v1218, %v1708
  %v1797 = vsub.f32 %v1219, %v1711
  %v1798 = vsub.f32 %v1220, %v1714
  %v1799 = vsub.f32 %v1221, %v1717
  %v1800 = vsub.f32 %v1222, %v1720
  %v1801 = vsub.f32 %v1223, %v1723
  %v1802 = vsub.f32 %v1224, %v1726
  %v1803 = vsub.f32 %v1225, %v1729
  %v1804 = vsub.f32 %v1226, %v1732
  %v1805 = vsub.f32 %v1227, %v1735
  %v1806 = vsub.f32 %v1228, %v1738
  %v1807 = vsub.f32 %v1229, %v1741
  %v1808 = vsub.f32 %v1230, %v1744
  %v1809 = vsel %vm398, %v1745, 0.0
  %v1810 = vsel %vm399, %v1746, 0.0
  %v1811 = vsel %vm400, %v1747, 0.0
  %v1812 = vsel %vm401, %v1748, 0.0
  %v1813 = vsel %vm402, %v1749, 0.0
  %v1814 = vsel %vm403, %v1750, 0.0
  %v1815 = vsel %vm404, %v1751, 0.0
  %v1816 = vsel %vm405, %v1752, 0.0
  %v1817 = vsel %vm406, %v1753, 0.0
  %v1818 = vsel %vm407, %v1754, 0.0
  %v1819 = vsel %vm408, %v1755, 0.0
  %v1820 = vsel %vm409, %v1756, 0.0
  %v1821 = vsel %vm410, %v1757, 0.0
  %v1822 = vsel %vm411, %v1758, 0.0
  %v1823 = vsel %vm412, %v1759, 0.0
  %v1824 = vsel %vm413, %v1760, 0.0
  %v1825 = vsel %vm414, %v1761, 0.0
  %v1826 = vsel %vm415, %v1762, 0.0
  %v1827 = vsel %vm416, %v1763, 0.0
  %v1828 = vsel %vm417, %v1764, 0.0
  %v1829 = vsel %vm418, %v1765, 0.0
  %v1830 = vsel %vm419, %v1766, 0.0
  %v1831 = vsel %vm420, %v1767, 0.0
  %v1832 = vsel %vm421, %v1768, 0.0
  %v1833 = vsel %vm422, %v1769, 0.0
  %v1834 = vsel %vm423, %v1770, 0.0
  %v1835 = vsel %vm424, %v1771, 0.0
  %v1836 = vsel %vm425, %v1772, 0.0
  %v1837 = vsel %vm426, %v1773, 0.0
  %v1838 = vsel %vm427, %v1774, 0.0
  %v1839 = vsel %vm428, %v1775, 0.0
  %v1840 = vsel %vm429, %v1776, 0.0
  %v1841 = vsel %vm430, %v1777, 0.0
  %v1842 = vsel %vm431, %v1778, 0.0
  %v1843 = vsel %vm432, %v1779, 0.0
  %v1844 = vsel %vm433, %v1780, 0.0
  %v1845 = vsel %vm434, %v1781, 0.0
  %v1846 = vsel %vm435, %v1782, 0.0
  %v1847 = vsel %vm436, %v1783, 0.0
  %v1848 = vsel %vm437, %v1784, 0.0
  %v1849 = vsel %vm438, %v1785, 0.0
  %v1850 = vsel %vm439, %v1786, 0.0
  %v1851 = vsel %vm440, %v1787, 0.0
  %v1852 = vsel %vm441, %v1788, 0.0
  %v1853 = vsel %vm442, %v1789, 0.0
  %v1854 = vsel %vm443, %v1790, 0.0
  %v1855 = vsel %vm444, %v1791, 0.0
  %v1856 = vsel %vm445, %v1792, 0.0
  %v1857 = vsel %vm446, %v1793, 0.0
  %v1858 = vsel %vm447, %v1794, 0.0
  %v1859 = vsel %vm448, %v1795, 0.0
  %v1860 = vsel %vm449, %v1796, 0.0
  %v1861 = vsel %vm450, %v1797, 0.0
  %v1862 = vsel %vm451, %v1798, 0.0
  %v1863 = vsel %vm452, %v1799, 0.0
  %v1864 = vsel %vm453, %v1800, 0.0
  %v1865 = vsel %vm454, %v1801, 0.0
  %v1866 = vsel %vm455, %v1802, 0.0
  %v1867 = vsel %vm456, %v1803, 0.0
  %v1868 = vsel %vm457, %v1804, 0.0
  %v1869 = vsel %vm458, %v1805, 0.0
  %v1870 = vsel %vm459, %v1806, 0.0
  %v1871 = vsel %vm460, %v1807, 0.0
  %v1872 = vsel %vm461, %v1808, 0.0
  %v1873 = vsub.f32 1.0, %v1555
  %v1874 = vsub.f32 1.0, %v1558
  %v1875 = vsub.f32 1.0, %v1561
  %v1876 = vsub.f32 1.0, %v1564
  %v1877 = vsub.f32 1.0, %v1567
  %v1878 = vsub.f32 1.0, %v1570
  %v1879 = vsub.f32 1.0, %v1573
  %v1880 = vsub.f32 1.0, %v1576
  %v1881 = vsub.f32 1.0, %v1579
  %v1882 = vsub.f32 1.0, %v1582
  %v1883 = vsub.f32 1.0, %v1585
  %v1884 = vsub.f32 1.0, %v1588
  %v1885 = vsub.f32 1.0, %v1591
  %v1886 = vsub.f32 1.0, %v1594
  %v1887 = vsub.f32 1.0, %v1597
  %v1888 = vsub.f32 1.0, %v1600
  %v1889 = vsub.f32 1.0, %v1603
  %v1890 = vsub.f32 1.0, %v1606
  %v1891 = vsub.f32 1.0, %v1609
  %v1892 = vsub.f32 1.0, %v1612
  %v1893 = vsub.f32 1.0, %v1615
  %v1894 = vsub.f32 1.0, %v1618
  %v1895 = vsub.f32 1.0, %v1621
  %v1896 = vsub.f32 1.0, %v1624
  %v1897 = vsub.f32 1.0, %v1627
  %v1898 = vsub.f32 1.0, %v1630
  %v1899 = vsub.f32 1.0, %v1633
  %v1900 = vsub.f32 1.0, %v1636
  %v1901 = vsub.f32 1.0, %v1639
  %v1902 = vsub.f32 1.0, %v1642
  %v1903 = vsub.f32 1.0, %v1645
  %v1904 = vsub.f32 1.0, %v1648
  %v1905 = vsub.f32 1.0, %v1651
  %v1906 = vsub.f32 1.0, %v1654
  %v1907 = vsub.f32 1.0, %v1657
  %v1908 = vsub.f32 1.0, %v1660
  %v1909 = vsub.f32 1.0, %v1663
  %v1910 = vsub.f32 1.0, %v1666
  %v1911 = vsub.f32 1.0, %v1669
  %v1912 = vsub.f32 1.0, %v1672
  %v1913 = vsub.f32 1.0, %v1675
  %v1914 = vsub.f32 1.0, %v1678
  %v1915 = vsub.f32 1.0, %v1681
  %v1916 = vsub.f32 1.0, %v1684
  %v1917 = vsub.f32 1.0, %v1687
  %v1918 = vsub.f32 1.0, %v1690
  %v1919 = vsub.f32 1.0, %v1693
  %v1920 = vsub.f32 1.0, %v1696
  %v1921 = vsub.f32 1.0, %v1699
  %v1922 = vsub.f32 1.0, %v1702
  %v1923 = vsub.f32 1.0, %v1705
  %v1924 = vsub.f32 1.0, %v1708
  %v1925 = vsub.f32 1.0, %v1711
  %v1926 = vsub.f32 1.0, %v1714
  %v1927 = vsub.f32 1.0, %v1717
  %v1928 = vsub.f32 1.0, %v1720
  %v1929 = vsub.f32 1.0, %v1723
  %v1930 = vsub.f32 1.0, %v1726
  %v1931 = vsub.f32 1.0, %v1729
  %v1932 = vsub.f32 1.0, %v1732
  %v1933 = vsub.f32 1.0, %v1735
  %v1934 = vsub.f32 1.0, %v1738
  %v1935 = vsub.f32 1.0, %v1741
  %v1936 = vsub.f32 1.0, %v1744
  %v1937 = vmul.f32 %v1873, %v1873
  %v1938 = vmul.f32 %v1874, %v1874
  %v1939 = vmul.f32 %v1875, %v1875
  %v1940 = vmul.f32 %v1876, %v1876
  %v1941 = vmul.f32 %v1877, %v1877
  %v1942 = vmul.f32 %v1878, %v1878
  %v1943 = vmul.f32 %v1879, %v1879
  %v1944 = vmul.f32 %v1880, %v1880
  %v1945 = vmul.f32 %v1881, %v1881
  %v1946 = vmul.f32 %v1882, %v1882
  %v1947 = vmul.f32 %v1883, %v1883
  %v1948 = vmul.f32 %v1884, %v1884
  %v1949 = vmul.f32 %v1885, %v1885
  %v1950 = vmul.f32 %v1886, %v1886
  %v1951 = vmul.f32 %v1887, %v1887
  %v1952 = vmul.f32 %v1888, %v1888
  %v1953 = vmul.f32 %v1889, %v1889
  %v1954 = vmul.f32 %v1890, %v1890
  %v1955 = vmul.f32 %v1891, %v1891
  %v1956 = vmul.f32 %v1892, %v1892
  %v1957 = vmul.f32 %v1893, %v1893
  %v1958 = vmul.f32 %v1894, %v1894
  %v1959 = vmul.f32 %v1895, %v1895
  %v1960 = vmul.f32 %v1896, %v1896
  %v1961 = vmul.f32 %v1897, %v1897
  %v1962 = vmul.f32 %v1898, %v1898
  %v1963 = vmul.f32 %v1899, %v1899
  %v1964 = vmul.f32 %v1900, %v1900
  %v1965 = vmul.f32 %v1901, %v1901
  %v1966 = vmul.f32 %v1902, %v1902
  %v1967 = vmul.f32 %v1903, %v1903
  %v1968 = vmul.f32 %v1904, %v1904
  %v1969 = vmul.f32 %v1905, %v1905
  %v1970 = vmul.f32 %v1906, %v1906
  %v1971 = vmul.f32 %v1907, %v1907
  %v1972 = vmul.f32 %v1908, %v1908
  %v1973 = vmul.f32 %v1909, %v1909
  %v1974 = vmul.f32 %v1910, %v1910
  %v1975 = vmul.f32 %v1911, %v1911
  %v1976 = vmul.f32 %v1912, %v1912
  %v1977 = vmul.f32 %v1913, %v1913
  %v1978 = vmul.f32 %v1914, %v1914
  %v1979 = vmul.f32 %v1915, %v1915
  %v1980 = vmul.f32 %v1916, %v1916
  %v1981 = vmul.f32 %v1917, %v1917
  %v1982 = vmul.f32 %v1918, %v1918
  %v1983 = vmul.f32 %v1919, %v1919
  %v1984 = vmul.f32 %v1920, %v1920
  %v1985 = vmul.f32 %v1921, %v1921
  %v1986 = vmul.f32 %v1922, %v1922
  %v1987 = vmul.f32 %v1923, %v1923
  %v1988 = vmul.f32 %v1924, %v1924
  %v1989 = vmul.f32 %v1925, %v1925
  %v1990 = vmul.f32 %v1926, %v1926
  %v1991 = vmul.f32 %v1927, %v1927
  %v1992 = vmul.f32 %v1928, %v1928
  %v1993 = vmul.f32 %v1929, %v1929
  %v1994 = vmul.f32 %v1930, %v1930
  %v1995 = vmul.f32 %v1931, %v1931
  %v1996 = vmul.f32 %v1932, %v1932
  %v1997 = vmul.f32 %v1933, %v1933
  %v1998 = vmul.f32 %v1934, %v1934
  %v1999 = vmul.f32 %v1935, %v1935
  %v2000 = vmul.f32 %v1936, %v1936
  %v2001 = vsel %vm398, %v1937, 0.0
  %v2002 = vsel %vm399, %v1938, 0.0
  %v2003 = vsel %vm400, %v1939, 0.0
  %v2004 = vsel %vm401, %v1940, 0.0
  %v2005 = vsel %vm402, %v1941, 0.0
  %v2006 = vsel %vm403, %v1942, 0.0
  %v2007 = vsel %vm404, %v1943, 0.0
  %v2008 = vsel %vm405, %v1944, 0.0
  %v2009 = vsel %vm406, %v1945, 0.0
  %v2010 = vsel %vm407, %v1946, 0.0
  %v2011 = vsel %vm408, %v1947, 0.0
  %v2012 = vsel %vm409, %v1948, 0.0
  %v2013 = vsel %vm410, %v1949, 0.0
  %v2014 = vsel %vm411, %v1950, 0.0
  %v2015 = vsel %vm412, %v1951, 0.0
  %v2016 = vsel %vm413, %v1952, 0.0
  %v2017 = vsel %vm414, %v1953, 0.0
  %v2018 = vsel %vm415, %v1954, 0.0
  %v2019 = vsel %vm416, %v1955, 0.0
  %v2020 = vsel %vm417, %v1956, 0.0
  %v2021 = vsel %vm418, %v1957, 0.0
  %v2022 = vsel %vm419, %v1958, 0.0
  %v2023 = vsel %vm420, %v1959, 0.0
  %v2024 = vsel %vm421, %v1960, 0.0
  %v2025 = vsel %vm422, %v1961, 0.0
  %v2026 = vsel %vm423, %v1962, 0.0
  %v2027 = vsel %vm424, %v1963, 0.0
  %v2028 = vsel %vm425, %v1964, 0.0
  %v2029 = vsel %vm426, %v1965, 0.0
  %v2030 = vsel %vm427, %v1966, 0.0
  %v2031 = vsel %vm428, %v1967, 0.0
  %v2032 = vsel %vm429, %v1968, 0.0
  %v2033 = vsel %vm430, %v1969, 0.0
  %v2034 = vsel %vm431, %v1970, 0.0
  %v2035 = vsel %vm432, %v1971, 0.0
  %v2036 = vsel %vm433, %v1972, 0.0
  %v2037 = vsel %vm434, %v1973, 0.0
  %v2038 = vsel %vm435, %v1974, 0.0
  %v2039 = vsel %vm436, %v1975, 0.0
  %v2040 = vsel %vm437, %v1976, 0.0
  %v2041 = vsel %vm438, %v1977, 0.0
  %v2042 = vsel %vm439, %v1978, 0.0
  %v2043 = vsel %vm440, %v1979, 0.0
  %v2044 = vsel %vm441, %v1980, 0.0
  %v2045 = vsel %vm442, %v1981, 0.0
  %v2046 = vsel %vm443, %v1982, 0.0
  %v2047 = vsel %vm444, %v1983, 0.0
  %v2048 = vsel %vm445, %v1984, 0.0
  %v2049 = vsel %vm446, %v1985, 0.0
  %v2050 = vsel %vm447, %v1986, 0.0
  %v2051 = vsel %vm448, %v1987, 0.0
  %v2052 = vsel %vm449, %v1988, 0.0
  %v2053 = vsel %vm450, %v1989, 0.0
  %v2054 = vsel %vm451, %v1990, 0.0
  %v2055 = vsel %vm452, %v1991, 0.0
  %v2056 = vsel %vm453, %v1992, 0.0
  %v2057 = vsel %vm454, %v1993, 0.0
  %v2058 = vsel %vm455, %v1994, 0.0
  %v2059 = vsel %vm456, %v1995, 0.0
  %v2060 = vsel %vm457, %v1996, 0.0
  %v2061 = vsel %vm458, %v1997, 0.0
  %v2062 = vsel %vm459, %v1998, 0.0
  %v2063 = vsel %vm460, %v1999, 0.0
  %v2064 = vsel %vm461, %v2000, 0.0
  %v2065 = vsel %vm398, 1.0, 0.0
  %v2066 = vsel %vm399, 1.0, 0.0
  %v2067 = vsel %vm400, 1.0, 0.0
  %v2068 = vsel %vm401, 1.0, 0.0
  %v2069 = vsel %vm402, 1.0, 0.0
  %v2070 = vsel %vm403, 1.0, 0.0
  %v2071 = vsel %vm404, 1.0, 0.0
  %v2072 = vsel %vm405, 1.0, 0.0
  %v2073 = vsel %vm406, 1.0, 0.0
  %v2074 = vsel %vm407, 1.0, 0.0
  %v2075 = vsel %vm408, 1.0, 0.0
  %v2076 = vsel %vm409, 1.0, 0.0
  %v2077 = vsel %vm410, 1.0, 0.0
  %v2078 = vsel %vm411, 1.0, 0.0
  %v2079 = vsel %vm412, 1.0, 0.0
  %v2080 = vsel %vm413, 1.0, 0.0
  %v2081 = vsel %vm414, 1.0, 0.0
  %v2082 = vsel %vm415, 1.0, 0.0
  %v2083 = vsel %vm416, 1.0, 0.0
  %v2084 = vsel %vm417, 1.0, 0.0
  %v2085 = vsel %vm418, 1.0, 0.0
  %v2086 = vsel %vm419, 1.0, 0.0
  %v2087 = vsel %vm420, 1.0, 0.0
  %v2088 = vsel %vm421, 1.0, 0.0
  %v2089 = vsel %vm422, 1.0, 0.0
  %v2090 = vsel %vm423, 1.0, 0.0
  %v2091 = vsel %vm424, 1.0, 0.0
  %v2092 = vsel %vm425, 1.0, 0.0
  %v2093 = vsel %vm426, 1.0, 0.0
  %v2094 = vsel %vm427, 1.0, 0.0
  %v2095 = vsel %vm428, 1.0, 0.0
  %v2096 = vsel %vm429, 1.0, 0.0
  %v2097 = vsel %vm430, 1.0, 0.0
  %v2098 = vsel %vm431, 1.0, 0.0
  %v2099 = vsel %vm432, 1.0, 0.0
  %v2100 = vsel %vm433, 1.0, 0.0
  %v2101 = vsel %vm434, 1.0, 0.0
  %v2102 = vsel %vm435, 1.0, 0.0
  %v2103 = vsel %vm436, 1.0, 0.0
  %v2104 = vsel %vm437, 1.0, 0.0
  %v2105 = vsel %vm438, 1.0, 0.0
  %v2106 = vsel %vm439, 1.0, 0.0
  %v2107 = vsel %vm440, 1.0, 0.0
  %v2108 = vsel %vm441, 1.0, 0.0
  %v2109 = vsel %vm442, 1.0, 0.0
  %v2110 = vsel %vm443, 1.0, 0.0
  %v2111 = vsel %vm444, 1.0, 0.0
  %v2112 = vsel %vm445, 1.0, 0.0
  %v2113 = vsel %vm446, 1.0, 0.0
  %v2114 = vsel %vm447, 1.0, 0.0
  %v2115 = vsel %vm448, 1.0, 0.0
  %v2116 = vsel %vm449, 1.0, 0.0
  %v2117 = vsel %vm450, 1.0, 0.0
  %v2118 = vsel %vm451, 1.0, 0.0
  %v2119 = vsel %vm452, 1.0, 0.0
  %v2120 = vsel %vm453, 1.0, 0.0
  %v2121 = vsel %vm454, 1.0, 0.0
  %v2122 = vsel %vm455, 1.0, 0.0
  %v2123 = vsel %vm456, 1.0, 0.0
  %v2124 = vsel %vm457, 1.0, 0.0
  %v2125 = vsel %vm458, 1.0, 0.0
  %v2126 = vsel %vm459, 1.0, 0.0
  %v2127 = vsel %vm460, 1.0, 0.0
  %v2128 = vsel %vm461, 1.0, 0.0
  %vm2129 = vcmask 7168
  %v2130 = vsel %vm2129, %v1809, 0.0
  %v2131 = vsel %vm2129, %v1810, 0.0
  %v2132 = vadd.f32 %v2130, %v2131
  %v2133 = vsel %vm2129, %v1811, 0.0
  %v2134 = vadd.f32 %v2132, %v2133
  %v2135 = vsel %vm2129, %v1812, 0.0
  %v2136 = vadd.f32 %v2134, %v2135
  %v2137 = vsel %vm2129, %v1813, 0.0
  %v2138 = vadd.f32 %v2136, %v2137
  %v2139 = vsel %vm2129, %v1814, 0.0
  %v2140 = vadd.f32 %v2138, %v2139
  %v2141 = vsel %vm2129, %v1815, 0.0
  %v2142 = vadd.f32 %v2140, %v2141
  %v2143 = vsel %vm2129, %v1816, 0.0
  %v2144 = vadd.f32 %v2142, %v2143
  %v2145 = vsel %vm2129, %v1817, 0.0
  %v2146 = vadd.f32 %v2144, %v2145
  %v2147 = vsel %vm2129, %v1818, 0.0
  %v2148 = vadd.f32 %v2146, %v2147
  %v2149 = vsel %vm2129, %v1819, 0.0
  %v2150 = vadd.f32 %v2148, %v2149
  %v2151 = vsel %vm2129, %v1820, 0.0
  %v2152 = vadd.f32 %v2150, %v2151
  %v2153 = vsel %vm2129, %v1821, 0.0
  %v2154 = vadd.f32 %v2152, %v2153
  %v2155 = vsel %vm2129, %v1822, 0.0
  %v2156 = vadd.f32 %v2154, %v2155
  %v2157 = vsel %vm2129, %v1823, 0.0
  %v2158 = vadd.f32 %v2156, %v2157
  %v2159 = vsel %vm2129, %v1824, 0.0
  %v2160 = vadd.f32 %v2158, %v2159
  %v2161 = vsel %vm2129, %v1825, 0.0
  %v2162 = vadd.f32 %v2160, %v2161
  %v2163 = vsel %vm2129, %v1826, 0.0
  %v2164 = vadd.f32 %v2162, %v2163
  %v2165 = vsel %vm2129, %v1827, 0.0
  %v2166 = vadd.f32 %v2164, %v2165
  %v2167 = vsel %vm2129, %v1828, 0.0
  %v2168 = vadd.f32 %v2166, %v2167
  %v2169 = vsel %vm2129, %v1829, 0.0
  %v2170 = vadd.f32 %v2168, %v2169
  %v2171 = vsel %vm2129, %v1830, 0.0
  %v2172 = vadd.f32 %v2170, %v2171
  %v2173 = vsel %vm2129, %v1831, 0.0
  %v2174 = vadd.f32 %v2172, %v2173
  %v2175 = vsel %vm2129, %v1832, 0.0
  %v2176 = vadd.f32 %v2174, %v2175
  %v2177 = vsel %vm2129, %v1833, 0.0
  %v2178 = vadd.f32 %v2176, %v2177
  %v2179 = vsel %vm2129, %v1834, 0.0
  %v2180 = vadd.f32 %v2178, %v2179
  %v2181 = vsel %vm2129, %v1835, 0.0
  %v2182 = vadd.f32 %v2180, %v2181
  %v2183 = vsel %vm2129, %v1836, 0.0
  %v2184 = vadd.f32 %v2182, %v2183
  %v2185 = vsel %vm2129, %v1837, 0.0
  %v2186 = vadd.f32 %v2184, %v2185
  %v2187 = vsel %vm2129, %v1838, 0.0
  %v2188 = vadd.f32 %v2186, %v2187
  %v2189 = vsel %vm2129, %v1839, 0.0
  %v2190 = vadd.f32 %v2188, %v2189
  %v2191 = vsel %vm2129, %v1840, 0.0
  %v2192 = vadd.f32 %v2190, %v2191
  %v2193 = vsel %vm2129, %v1841, 0.0
  %v2194 = vadd.f32 %v2192, %v2193
  %v2195 = vsel %vm2129, %v1842, 0.0
  %v2196 = vadd.f32 %v2194, %v2195
  %v2197 = vsel %vm2129, %v1843, 0.0
  %v2198 = vadd.f32 %v2196, %v2197
  %v2199 = vsel %vm2129, %v1844, 0.0
  %v2200 = vadd.f32 %v2198, %v2199
  %v2201 = vsel %vm2129, %v1845, 0.0
  %v2202 = vadd.f32 %v2200, %v2201
  %v2203 = vsel %vm2129, %v1846, 0.0
  %v2204 = vadd.f32 %v2202, %v2203
  %v2205 = vsel %vm2129, %v1847, 0.0
  %v2206 = vadd.f32 %v2204, %v2205
  %v2207 = vsel %vm2129, %v1848, 0.0
  %v2208 = vadd.f32 %v2206, %v2207
  %v2209 = vsel %vm2129, %v1849, 0.0
  %v2210 = vadd.f32 %v2208, %v2209
  %v2211 = vsel %vm2129, %v1850, 0.0
  %v2212 = vadd.f32 %v2210, %v2211
  %v2213 = vsel %vm2129, %v1851, 0.0
  %v2214 = vadd.f32 %v2212, %v2213
  %v2215 = vsel %vm2129, %v1852, 0.0
  %v2216 = vadd.f32 %v2214, %v2215
  %v2217 = vsel %vm2129, %v1853, 0.0
  %v2218 = vadd.f32 %v2216, %v2217
  %v2219 = vsel %vm2129, %v1854, 0.0
  %v2220 = vadd.f32 %v2218, %v2219
  %v2221 = vsel %vm2129, %v1855, 0.0
  %v2222 = vadd.f32 %v2220, %v2221
  %v2223 = vsel %vm2129, %v1856, 0.0
  %v2224 = vadd.f32 %v2222, %v2223
  %v2225 = vsel %vm2129, %v1857, 0.0
  %v2226 = vadd.f32 %v2224, %v2225
  %v2227 = vsel %vm2129, %v1858, 0.0
  %v2228 = vadd.f32 %v2226, %v2227
  %v2229 = vsel %vm2129, %v1859, 0.0
  %v2230 = vadd.f32 %v2228, %v2229
  %v2231 = vsel %vm2129, %v1860, 0.0
  %v2232 = vadd.f32 %v2230, %v2231
  %v2233 = vsel %vm2129, %v1861, 0.0
  %v2234 = vadd.f32 %v2232, %v2233
  %v2235 = vsel %vm2129, %v1862, 0.0
  %v2236 = vadd.f32 %v2234, %v2235
  %v2237 = vsel %vm2129, %v1863, 0.0
  %v2238 = vadd.f32 %v2236, %v2237
  %v2239 = vsel %vm2129, %v1864, 0.0
  %v2240 = vadd.f32 %v2238, %v2239
  %v2241 = vsel %vm2129, %v1865, 0.0
  %v2242 = vadd.f32 %v2240, %v2241
  %v2243 = vsel %vm2129, %v1866, 0.0
  %v2244 = vadd.f32 %v2242, %v2243
  %v2245 = vsel %vm2129, %v1867, 0.0
  %v2246 = vadd.f32 %v2244, %v2245
  %v2247 = vsel %vm2129, %v1868, 0.0
  %v2248 = vadd.f32 %v2246, %v2247
  %v2249 = vsel %vm2129, %v1869, 0.0
  %v2250 = vadd.f32 %v2248, %v2249
  %v2251 = vsel %vm2129, %v1870, 0.0
  %v2252 = vadd.f32 %v2250, %v2251
  %v2253 = vsel %vm2129, %v1871, 0.0
  %v2254 = vadd.f32 %v2252, %v2253
  %v2255 = vsel %vm2129, %v1872, 0.0
  %v2256 = vadd.f32 %v2254, %v2255
  %2257 = vadd.xlane.f32.xlu0 %v2256
  %v2258 = vpop.xlane.xlu0 %2257
  %v2259 = vrot.slane %v2258, 4
  %v2260 = vadd.f32 %v2258, %v2259
  %v2261 = vrot.slane %v2260, 2
  %v2262 = vadd.f32 %v2260, %v2261
  %v2263 = vrot.slane %v2262, 1
  %v2264 = vadd.f32 %v2262, %v2263
  %s2265 = vtos %v2264
  %v2266 = vsel %vm2129, %v2001, 0.0
  %v2267 = vsel %vm2129, %v2002, 0.0
  %v2268 = vadd.f32 %v2266, %v2267
  %v2269 = vsel %vm2129, %v2003, 0.0
  %v2270 = vadd.f32 %v2268, %v2269
  %v2271 = vsel %vm2129, %v2004, 0.0
  %v2272 = vadd.f32 %v2270, %v2271
  %v2273 = vsel %vm2129, %v2005, 0.0
  %v2274 = vadd.f32 %v2272, %v2273
  %v2275 = vsel %vm2129, %v2006, 0.0
  %v2276 = vadd.f32 %v2274, %v2275
  %v2277 = vsel %vm2129, %v2007, 0.0
  %v2278 = vadd.f32 %v2276, %v2277
  %v2279 = vsel %vm2129, %v2008, 0.0
  %v2280 = vadd.f32 %v2278, %v2279
  %v2281 = vsel %vm2129, %v2009, 0.0
  %v2282 = vadd.f32 %v2280, %v2281
  %v2283 = vsel %vm2129, %v2010, 0.0
  %v2284 = vadd.f32 %v2282, %v2283
  %v2285 = vsel %vm2129, %v2011, 0.0
  %v2286 = vadd.f32 %v2284, %v2285
  %v2287 = vsel %vm2129, %v2012, 0.0
  %v2288 = vadd.f32 %v2286, %v2287
  %v2289 = vsel %vm2129, %v2013, 0.0
  %v2290 = vadd.f32 %v2288, %v2289
  %v2291 = vsel %vm2129, %v2014, 0.0
  %v2292 = vadd.f32 %v2290, %v2291
  %v2293 = vsel %vm2129, %v2015, 0.0
  %v2294 = vadd.f32 %v2292, %v2293
  %v2295 = vsel %vm2129, %v2016, 0.0
  %v2296 = vadd.f32 %v2294, %v2295
  %v2297 = vsel %vm2129, %v2017, 0.0
  %v2298 = vadd.f32 %v2296, %v2297
  %v2299 = vsel %vm2129, %v2018, 0.0
  %v2300 = vadd.f32 %v2298, %v2299
  %v2301 = vsel %vm2129, %v2019, 0.0
  %v2302 = vadd.f32 %v2300, %v2301
  %v2303 = vsel %vm2129, %v2020, 0.0
  %v2304 = vadd.f32 %v2302, %v2303
  %v2305 = vsel %vm2129, %v2021, 0.0
  %v2306 = vadd.f32 %v2304, %v2305
  %v2307 = vsel %vm2129, %v2022, 0.0
  %v2308 = vadd.f32 %v2306, %v2307
  %v2309 = vsel %vm2129, %v2023, 0.0
  %v2310 = vadd.f32 %v2308, %v2309
  %v2311 = vsel %vm2129, %v2024, 0.0
  %v2312 = vadd.f32 %v2310, %v2311
  %v2313 = vsel %vm2129, %v2025, 0.0
  %v2314 = vadd.f32 %v2312, %v2313
  %v2315 = vsel %vm2129, %v2026, 0.0
  %v2316 = vadd.f32 %v2314, %v2315
  %v2317 = vsel %vm2129, %v2027, 0.0
  %v2318 = vadd.f32 %v2316, %v2317
  %v2319 = vsel %vm2129, %v2028, 0.0
  %v2320 = vadd.f32 %v2318, %v2319
  %v2321 = vsel %vm2129, %v2029, 0.0
  %v2322 = vadd.f32 %v2320, %v2321
  %v2323 = vsel %vm2129, %v2030, 0.0
  %v2324 = vadd.f32 %v2322, %v2323
  %v2325 = vsel %vm2129, %v2031, 0.0
  %v2326 = vadd.f32 %v2324, %v2325
  %v2327 = vsel %vm2129, %v2032, 0.0
  %v2328 = vadd.f32 %v2326, %v2327
  %v2329 = vsel %vm2129, %v2033, 0.0
  %v2330 = vadd.f32 %v2328, %v2329
  %v2331 = vsel %vm2129, %v2034, 0.0
  %v2332 = vadd.f32 %v2330, %v2331
  %v2333 = vsel %vm2129, %v2035, 0.0
  %v2334 = vadd.f32 %v2332, %v2333
  %v2335 = vsel %vm2129, %v2036, 0.0
  %v2336 = vadd.f32 %v2334, %v2335
  %v2337 = vsel %vm2129, %v2037, 0.0
  %v2338 = vadd.f32 %v2336, %v2337
  %v2339 = vsel %vm2129, %v2038, 0.0
  %v2340 = vadd.f32 %v2338, %v2339
  %v2341 = vsel %vm2129, %v2039, 0.0
  %v2342 = vadd.f32 %v2340, %v2341
  %v2343 = vsel %vm2129, %v2040, 0.0
  %v2344 = vadd.f32 %v2342, %v2343
  %v2345 = vsel %vm2129, %v2041, 0.0
  %v2346 = vadd.f32 %v2344, %v2345
  %v2347 = vsel %vm2129, %v2042, 0.0
  %v2348 = vadd.f32 %v2346, %v2347
  %v2349 = vsel %vm2129, %v2043, 0.0
  %v2350 = vadd.f32 %v2348, %v2349
  %v2351 = vsel %vm2129, %v2044, 0.0
  %v2352 = vadd.f32 %v2350, %v2351
  %v2353 = vsel %vm2129, %v2045, 0.0
  %v2354 = vadd.f32 %v2352, %v2353
  %v2355 = vsel %vm2129, %v2046, 0.0
  %v2356 = vadd.f32 %v2354, %v2355
  %v2357 = vsel %vm2129, %v2047, 0.0
  %v2358 = vadd.f32 %v2356, %v2357
  %v2359 = vsel %vm2129, %v2048, 0.0
  %v2360 = vadd.f32 %v2358, %v2359
  %v2361 = vsel %vm2129, %v2049, 0.0
  %v2362 = vadd.f32 %v2360, %v2361
  %v2363 = vsel %vm2129, %v2050, 0.0
  %v2364 = vadd.f32 %v2362, %v2363
  %v2365 = vsel %vm2129, %v2051, 0.0
  %v2366 = vadd.f32 %v2364, %v2365
  %v2367 = vsel %vm2129, %v2052, 0.0
  %v2368 = vadd.f32 %v2366, %v2367
  %v2369 = vsel %vm2129, %v2053, 0.0
  %v2370 = vadd.f32 %v2368, %v2369
  %v2371 = vsel %vm2129, %v2054, 0.0
  %v2372 = vadd.f32 %v2370, %v2371
  %v2373 = vsel %vm2129, %v2055, 0.0
  %v2374 = vadd.f32 %v2372, %v2373
  %v2375 = vsel %vm2129, %v2056, 0.0
  %v2376 = vadd.f32 %v2374, %v2375
  %v2377 = vsel %vm2129, %v2057, 0.0
  %v2378 = vadd.f32 %v2376, %v2377
  %v2379 = vsel %vm2129, %v2058, 0.0
  %v2380 = vadd.f32 %v2378, %v2379
  %v2381 = vsel %vm2129, %v2059, 0.0
  %v2382 = vadd.f32 %v2380, %v2381
  %v2383 = vsel %vm2129, %v2060, 0.0
  %v2384 = vadd.f32 %v2382, %v2383
  %v2385 = vsel %vm2129, %v2061, 0.0
  %v2386 = vadd.f32 %v2384, %v2385
  %v2387 = vsel %vm2129, %v2062, 0.0
  %v2388 = vadd.f32 %v2386, %v2387
  %v2389 = vsel %vm2129, %v2063, 0.0
  %v2390 = vadd.f32 %v2388, %v2389
  %v2391 = vsel %vm2129, %v2064, 0.0
  %v2392 = vadd.f32 %v2390, %v2391
  %2393 = vadd.xlane.f32.xlu0 %v2392
  %v2394 = vpop.xlane.xlu0 %2393
  %v2395 = vrot.slane %v2394, 4
  %v2396 = vadd.f32 %v2394, %v2395
  %v2397 = vrot.slane %v2396, 2
  %v2398 = vadd.f32 %v2396, %v2397
  %v2399 = vrot.slane %v2398, 1
  %v2400 = vadd.f32 %v2398, %v2399
  %s2401 = vtos %v2400
  %v2402 = vsel %vm2129, %v2065, 0.0
  %v2403 = vsel %vm2129, %v2066, 0.0
  %v2404 = vadd.f32 %v2402, %v2403
  %v2405 = vsel %vm2129, %v2067, 0.0
  %v2406 = vadd.f32 %v2404, %v2405
  %v2407 = vsel %vm2129, %v2068, 0.0
  %v2408 = vadd.f32 %v2406, %v2407
  %v2409 = vsel %vm2129, %v2069, 0.0
  %v2410 = vadd.f32 %v2408, %v2409
  %v2411 = vsel %vm2129, %v2070, 0.0
  %v2412 = vadd.f32 %v2410, %v2411
  %v2413 = vsel %vm2129, %v2071, 0.0
  %v2414 = vadd.f32 %v2412, %v2413
  %v2415 = vsel %vm2129, %v2072, 0.0
  %v2416 = vadd.f32 %v2414, %v2415
  %v2417 = vsel %vm2129, %v2073, 0.0
  %v2418 = vadd.f32 %v2416, %v2417
  %v2419 = vsel %vm2129, %v2074, 0.0
  %v2420 = vadd.f32 %v2418, %v2419
  %v2421 = vsel %vm2129, %v2075, 0.0
  %v2422 = vadd.f32 %v2420, %v2421
  %v2423 = vsel %vm2129, %v2076, 0.0
  %v2424 = vadd.f32 %v2422, %v2423
  %v2425 = vsel %vm2129, %v2077, 0.0
  %v2426 = vadd.f32 %v2424, %v2425
  %v2427 = vsel %vm2129, %v2078, 0.0
  %v2428 = vadd.f32 %v2426, %v2427
  %v2429 = vsel %vm2129, %v2079, 0.0
  %v2430 = vadd.f32 %v2428, %v2429
  %v2431 = vsel %vm2129, %v2080, 0.0
  %v2432 = vadd.f32 %v2430, %v2431
  %v2433 = vsel %vm2129, %v2081, 0.0
  %v2434 = vadd.f32 %v2432, %v2433
  %v2435 = vsel %vm2129, %v2082, 0.0
  %v2436 = vadd.f32 %v2434, %v2435
  %v2437 = vsel %vm2129, %v2083, 0.0
  %v2438 = vadd.f32 %v2436, %v2437
  %v2439 = vsel %vm2129, %v2084, 0.0
  %v2440 = vadd.f32 %v2438, %v2439
  %v2441 = vsel %vm2129, %v2085, 0.0
  %v2442 = vadd.f32 %v2440, %v2441
  %v2443 = vsel %vm2129, %v2086, 0.0
  %v2444 = vadd.f32 %v2442, %v2443
  %v2445 = vsel %vm2129, %v2087, 0.0
  %v2446 = vadd.f32 %v2444, %v2445
  %v2447 = vsel %vm2129, %v2088, 0.0
  %v2448 = vadd.f32 %v2446, %v2447
  %v2449 = vsel %vm2129, %v2089, 0.0
  %v2450 = vadd.f32 %v2448, %v2449
  %v2451 = vsel %vm2129, %v2090, 0.0
  %v2452 = vadd.f32 %v2450, %v2451
  %v2453 = vsel %vm2129, %v2091, 0.0
  %v2454 = vadd.f32 %v2452, %v2453
  %v2455 = vsel %vm2129, %v2092, 0.0
  %v2456 = vadd.f32 %v2454, %v2455
  %v2457 = vsel %vm2129, %v2093, 0.0
  %v2458 = vadd.f32 %v2456, %v2457
  %v2459 = vsel %vm2129, %v2094, 0.0
  %v2460 = vadd.f32 %v2458, %v2459
  %v2461 = vsel %vm2129, %v2095, 0.0
  %v2462 = vadd.f32 %v2460, %v2461
  %v2463 = vsel %vm2129, %v2096, 0.0
  %v2464 = vadd.f32 %v2462, %v2463
  %v2465 = vsel %vm2129, %v2097, 0.0
  %v2466 = vadd.f32 %v2464, %v2465
  %v2467 = vsel %vm2129, %v2098, 0.0
  %v2468 = vadd.f32 %v2466, %v2467
  %v2469 = vsel %vm2129, %v2099, 0.0
  %v2470 = vadd.f32 %v2468, %v2469
  %v2471 = vsel %vm2129, %v2100, 0.0
  %v2472 = vadd.f32 %v2470, %v2471
  %v2473 = vsel %vm2129, %v2101, 0.0
  %v2474 = vadd.f32 %v2472, %v2473
  %v2475 = vsel %vm2129, %v2102, 0.0
  %v2476 = vadd.f32 %v2474, %v2475
  %v2477 = vsel %vm2129, %v2103, 0.0
  %v2478 = vadd.f32 %v2476, %v2477
  %v2479 = vsel %vm2129, %v2104, 0.0
  %v2480 = vadd.f32 %v2478, %v2479
  %v2481 = vsel %vm2129, %v2105, 0.0
  %v2482 = vadd.f32 %v2480, %v2481
  %v2483 = vsel %vm2129, %v2106, 0.0
  %v2484 = vadd.f32 %v2482, %v2483
  %v2485 = vsel %vm2129, %v2107, 0.0
  %v2486 = vadd.f32 %v2484, %v2485
  %v2487 = vsel %vm2129, %v2108, 0.0
  %v2488 = vadd.f32 %v2486, %v2487
  %v2489 = vsel %vm2129, %v2109, 0.0
  %v2490 = vadd.f32 %v2488, %v2489
  %v2491 = vsel %vm2129, %v2110, 0.0
  %v2492 = vadd.f32 %v2490, %v2491
  %v2493 = vsel %vm2129, %v2111, 0.0
  %v2494 = vadd.f32 %v2492, %v2493
  %v2495 = vsel %vm2129, %v2112, 0.0
  %v2496 = vadd.f32 %v2494, %v2495
  %v2497 = vsel %vm2129, %v2113, 0.0
  %v2498 = vadd.f32 %v2496, %v2497
  %v2499 = vsel %vm2129, %v2114, 0.0
  %v2500 = vadd.f32 %v2498, %v2499
  %v2501 = vsel %vm2129, %v2115, 0.0
  %v2502 = vadd.f32 %v2500, %v2501
  %v2503 = vsel %vm2129, %v2116, 0.0
  %v2504 = vadd.f32 %v2502, %v2503
  %v2505 = vsel %vm2129, %v2117, 0.0
  %v2506 = vadd.f32 %v2504, %v2505
  %v2507 = vsel %vm2129, %v2118, 0.0
  %v2508 = vadd.f32 %v2506, %v2507
  %v2509 = vsel %vm2129, %v2119, 0.0
  %v2510 = vadd.f32 %v2508, %v2509
  %v2511 = vsel %vm2129, %v2120, 0.0
  %v2512 = vadd.f32 %v2510, %v2511
  %v2513 = vsel %vm2129, %v2121, 0.0
  %v2514 = vadd.f32 %v2512, %v2513
  %v2515 = vsel %vm2129, %v2122, 0.0
  %v2516 = vadd.f32 %v2514, %v2515
  %v2517 = vsel %vm2129, %v2123, 0.0
  %v2518 = vadd.f32 %v2516, %v2517
  %v2519 = vsel %vm2129, %v2124, 0.0
  %v2520 = vadd.f32 %v2518, %v2519
  %v2521 = vsel %vm2129, %v2125, 0.0
  %v2522 = vadd.f32 %v2520, %v2521
  %v2523 = vsel %vm2129, %v2126, 0.0
  %v2524 = vadd.f32 %v2522, %v2523
  %v2525 = vsel %vm2129, %v2127, 0.0
  %v2526 = vadd.f32 %v2524, %v2525
  %v2527 = vsel %vm2129, %v2128, 0.0
  %v2528 = vadd.f32 %v2526, %v2527
  %2529 = vadd.xlane.f32.xlu0 %v2528
  %v2530 = vpop.xlane.xlu0 %2529
  %v2531 = vrot.slane %v2530, 4
  %v2532 = vadd.f32 %v2530, %v2531
  %v2533 = vrot.slane %v2532, 2
  %v2534 = vadd.f32 %v2532, %v2533
  %v2535 = vrot.slane %v2534, 1
  %v2536 = vadd.f32 %v2534, %v2535
  %s2537 = vtos %v2536
  %vm2538 = vcmp.eq.s32.totalorder %v1232, 0
  %v2539 = vstv %s2265
  %v2540 = vsel %vm2538, %v2539, 0.0
  %vm2541 = vcmp.eq.s32.totalorder %v1232, 1
  %v2542 = vstv %s2401
  %v2543 = vsel %vm2541, %v2542, 0.0
  %v2544 = vadd.f32 %v2540, %v2543
  %vm2545 = vcmp.eq.s32.totalorder %v1232, 2
  %v2546 = vstv %s2537
  %v2547 = vsel %vm2545, %v2546, 0.0
  %v2548 = vadd.f32 %v2544, %v2547
  %vm2549 = vcmp.eq.s32.totalorder %v141, 0
  %v2550 = vsel %vm2549, %v2548, 0.0
  %2551 = vst [vmem:[%s2] sm:$0xff] %v2550
  // Predicated region
  $region10: #{_lambda_.3} parent=0 // pred_check
    _
  $region11: #{_lambda_.3} parent=0 // pred_check_branch
    %2553 = sbr.rel (0) target = $region13
  $region12: #{_lambda_.3} parent=0 // pred_region
    _
  $region13: #{_lambda_.3} parent=0 // pred_fallthru
    _
  // Predicated region
  $region14: #{_lambda_.3} parent=0 // pred_check
    _
  $region15: #{_lambda_.3} parent=0 // pred_check_branch
    %2555 = sbr.rel (0) target = $region17
  $region16: #{_lambda_.3} parent=0 // pred_region
    _
  $region17: #{_lambda_.3} parent=0 // pred_fallthru
    _

</llo_original>
